<compile_context>
chip_gen: v6e
topology: v6e:2x2x1
jax: 0.10.0
libtpu: 0.0.40
codegen_flags: <defaults>
</compile_context>

<pallas_src>
import functools
import math

import jax
import jax.numpy as jnp
from jax.experimental import pallas as pl
from jax.experimental.pallas import tpu as pltpu


LANE = 128  # f32 lane width of a TPU vreg


def _round_up(x, m):
    return (x + m - 1) // m * m


def _siren_kernel(x_ref, w_ref, b_ref, o_ref, *, apply_sin):
    # One (tm, tn) output tile per grid step:
    #   (tm, in_f_p) @ (in_f_p, tn) -> (tm, tn), accumulated in f32 on the MXU.
    y = jnp.dot(x_ref[...], w_ref[...], preferred_element_type=jnp.float32)
    y = y + b_ref[...]
    if apply_sin:
        y = jnp.sin(y)            # w0 already folded into W/b at prep time
    o_ref[...] = y.astype(o_ref.dtype)


def prepare_siren_params(weight, bias, *, w0=30.0, is_last=False):
    """One-time layout prep (hoist out of the per-call path).

    weight: (out_f, in_f) f32 (PyTorch convention), bias: (out_f,) f32.
    Returns (w_packed, b_packed):
      w_packed: (in_f_p, out_f_p) f32, transposed, zero-padded, w0-folded
      b_packed: (1, out_f_p)      f32, zero-padded, w0-folded
    with in_f_p / out_f_p rounded up to multiples of 128.
    """
    out_f, in_f = weight.shape
    scale = 1.0 if is_last else float(w0)

    in_f_p = _round_up(in_f, LANE)
    out_f_p = _round_up(out_f, LANE)

    w_t = (scale * weight.astype(jnp.float32)).T           # (in_f, out_f)
    w_packed = jnp.pad(w_t, ((0, in_f_p - in_f), (0, out_f_p - out_f)))
    b_packed = jnp.pad(scale * bias.astype(jnp.float32), (0, out_f_p - out_f))
    b_packed = b_packed.reshape(1, out_f_p)
    return w_packed, b_packed


def siren_layer_fwd(x, w_packed, b_packed, *, out_f, is_last=False,
                    tm=512, tn=None):
    """x: (N, in_f) f32; w_packed/b_packed from prepare_siren_params.
    Returns (N, out_f) f32."""
    n, in_f = x.shape
    in_f_p, out_f_p = w_packed.shape
    assert in_f <= in_f_p and out_f <= out_f_p

    # Output-dim tile: 256 matches the v6e/v7x MXU N dimension, 128 otherwise.
    if tn is None:
        tn = 256 if out_f_p % 256 == 0 else 128
    assert out_f_p % tn == 0

    # Batch tile: big (bandwidth amortization), clamped to the padded batch.
    tm_eff = min(_round_up(tm, 8), _round_up(n, 8))
    n_p = _round_up(n, tm_eff)

    # Pad x to the padded contraction width and to a whole number of tiles.
    x_p = jnp.pad(x.astype(jnp.float32), ((0, n_p - n), (0, in_f_p - in_f)))

    grid = (n_p // tm_eff, out_f_p // tn)

    # VMEM budget: double-buffered x / w / b / out tiles + margin.
    buf_bytes = 4 * (tm_eff * in_f_p + in_f_p * tn + tn + tm_eff * tn)
    vmem_limit = min(max(2 * buf_bytes + (8 << 20), 32 << 20), 60 << 20)

    kernel = functools.partial(_siren_kernel, apply_sin=not is_last)

    out_p = pl.pallas_call(
        kernel,
        out_shape=jax.ShapeDtypeStruct((n_p, out_f_p), jnp.float32),
        grid_spec=pltpu.PrefetchScalarGridSpec(
            num_scalar_prefetch=0,
            grid=grid,
            in_specs=[
                pl.BlockSpec((tm_eff, in_f_p), lambda i, j: (i, 0)),  # x tile
                pl.BlockSpec((in_f_p, tn), lambda i, j: (0, j)),      # W cols
                pl.BlockSpec((1, tn), lambda i, j: (0, j)),           # bias
            ],
            out_specs=pl.BlockSpec((tm_eff, tn), lambda i, j: (i, j)),
        ),
        compiler_params=pltpu.CompilerParams(
            dimension_semantics=("parallel", "parallel"),
            vmem_limit_bytes=vmem_limit,
        ),
    )(x_p, w_packed, b_packed)

    return out_p[:n, :out_f]


def siren_layer(x, weight, bias, *, w0=30.0, is_last=False, tm=512):
    """Convenience one-shot call (prep + forward). For repeated forward passes,
    call prepare_siren_params once and reuse siren_layer_fwd."""
    out_f = weight.shape[0]
    w_packed, b_packed = prepare_siren_params(weight, bias, w0=w0,
                                              is_last=is_last)
    return siren_layer_fwd(x, w_packed, b_packed, out_f=out_f,
                           is_last=is_last, tm=tm)


def init_siren_params(key, in_f, out_f, *, w0=30.0, is_first=False):
    """Deterministic SIREN init (mirrors the PyTorch module's init_weights)."""
    b = (1.0 / in_f) if is_first else (math.sqrt(6.0 / in_f) / w0)
    kw, kb = jax.random.split(key)
    weight = jax.random.uniform(kw, (out_f, in_f), jnp.float32, minval=-b, maxval=b)
    # nn.Linear default bias init: U(-1/sqrt(in_f), 1/sqrt(in_f))
    bb = 1.0 / math.sqrt(in_f)
    bias = jax.random.uniform(kb, (out_f,), jnp.float32, minval=-bb, maxval=bb)
    return weight, bias


if __name__ == "__main__":
    key = jax.random.PRNGKey(0)
    kx, kp = jax.random.split(key)

    # Small shapes consistent with the module: a batch of 256 flattened
    # coordinates through a 32 -> 32 SIREN layer.
    N, IN_F, OUT_F = 256, 32, 32
    W0 = 30.0

    x = jax.random.normal(kx, (N, IN_F), jnp.float32)
    weight, bias = init_siren_params(kp, IN_F, OUT_F, w0=W0, is_first=False)

    # Hidden layer: sin(w0 * (x W^T + b))
    out = siren_layer(x, weight, bias, w0=W0, is_last=False)
    out = jax.block_until_ready(out)
    ref = jnp.sin(W0 * (x @ weight.T + bias))
    assert out.shape == (N, OUT_F)
    assert jnp.max(jnp.abs(out - ref)) < 5e-4, float(jnp.max(jnp.abs(out - ref)))

    # Last layer: identity head (x W^T + b)
    out_last = siren_layer(x, weight, bias, w0=W0, is_last=True)
    out_last = jax.block_until_ready(out_last)
    ref_last = x @ weight.T + bias
    assert out_last.shape == (N, OUT_F)
    assert jnp.max(jnp.abs(out_last - ref_last)) < 5e-4

    print("KERNEL_OK")
</pallas_src>

<mosaic_0001>
module attributes {stable_mosaic.version = 11 : i64} {
  func.func @_siren_kernel(%arg0: i32, %arg1: i32, %arg2: memref<256x128xf32, #tpu.memory_space<vmem>>, %arg3: memref<128x128xf32, #tpu.memory_space<vmem>>, %arg4: memref<1x128xf32, #tpu.memory_space<vmem>>, %arg5: memref<256x128xf32, #tpu.memory_space<vmem>>) attributes {dimension_semantics = [#tpu.dimension_semantics<parallel>, #tpu.dimension_semantics<parallel>], iteration_bounds = array<i64: 1, 1>, scalar_prefetch = 0 : i64, scratch_operands = 0 : i64, tpu.core_type = #tpu.core_type<tc>, window_params = [{transform_indices = @transform_0, window_bounds = array<i64: 256, 128>}, {transform_indices = @transform_1, window_bounds = array<i64: 128, 128>}, {transform_indices = @transform_2, window_bounds = array<i64: 1, 128>}, {transform_indices = @transform_3, window_bounds = array<i64: 256, 128>}]} {
    %c0 = arith.constant 0 : index
    %c0_0 = arith.constant 0 : index
    %0 = vector.load %arg2[%c0, %c0_0] : memref<256x128xf32, #tpu.memory_space<vmem>>, vector<256x128xf32>
    %c0_1 = arith.constant 0 : index
    %c0_2 = arith.constant 0 : index
    %1 = vector.load %arg3[%c0_1, %c0_2] : memref<128x128xf32, #tpu.memory_space<vmem>>, vector<128x128xf32>
    %cst = arith.constant dense<0.000000e+00> : vector<256x128xf32>
    %2 = tpu.matmul %0, %1, %cst {dimension_numbers = #tpu.dot_dimension_numbers<[1], [0], [0], [1], [0, 0, 1, 1], [], []>} : vector<256x128xf32>, vector<128x128xf32>, vector<256x128xf32> -> vector<256x128xf32>
    %c0_3 = arith.constant 0 : index
    %c0_4 = arith.constant 0 : index
    %3 = vector.load %arg4[%c0_3, %c0_4] : memref<1x128xf32, #tpu.memory_space<vmem>>, vector<1x128xf32>
    %4 = vector.broadcast %3 : vector<1x128xf32> to vector<256x128xf32>
    %5 = arith.addf %2, %4 : vector<256x128xf32>
    %6 = math.sin %5 : vector<256x128xf32>
    %c0_5 = arith.constant 0 : index
    %c0_6 = arith.constant 0 : index
    %7 = vector.load %arg5[%c0_5, %c0_6] : memref<256x128xf32, #tpu.memory_space<vmem>>, vector<256x128xf32>
    tpu.vector_store %arg5[%c0_5, %c0_6], %6 {strides = array<i32>} : memref<256x128xf32, #tpu.memory_space<vmem>>, vector<256x128xf32>,
    return
  }
  func.func @transform_0(%arg0: i32, %arg1: i32) -> (i32, i32) {
    %c0_i32 = arith.constant 0 : i32
    %c0_i32_0 = arith.constant 0 : i32
    return %arg0, %c0_i32 : i32, i32
  }
  func.func @transform_1(%arg0: i32, %arg1: i32) -> (i32, i32) {
    %c0_i32 = arith.constant 0 : i32
    %c0_i32_0 = arith.constant 0 : i32
    return %c0_i32, %arg1 : i32, i32
  }
  func.func @transform_2(%arg0: i32, %arg1: i32) -> (i32, i32) {
    %c0_i32 = arith.constant 0 : i32
    %c0_i32_0 = arith.constant 0 : i32
    return %c0_i32, %arg1 : i32, i32
  }
  func.func @transform_3(%arg0: i32, %arg1: i32) -> (i32, i32) {
    %c0_i32 = arith.constant 0 : i32
    return %arg0, %arg1 : i32, i32
  }
}

</mosaic_0001>

<llo_original>
// kernel: tpu_custom_call.1
$region0: #{tpu_custom_call.1}
  #allocation0 [shape = 'u32[]', space=smem, size = 0x4, offset = 0x4, fixed_abs, tag = 'smem constant byte address 0x4 - core index']
  #allocation1 [shape = 'u32[144,128]{1,0:T(1,128)}', space=vmem, size = 0x12000, scoped, tag = 'internal scratch']
  %s0 = inlined_call_operand.hbm [shape: f32[256,128], index: 0, kind: input, shape index: {}]
  %s1 = inlined_call_operand.hbm [shape: f32[128,128], index: 1, kind: input, shape index: {}]
  %s2 = inlined_call_operand.vmem [shape: f32[1,128], index: 2, kind: input, shape index: {}]
  %s3 = inlined_call_operand.hbm [shape: f32[256,128], index: 3, kind: output, shape index: {}]
  %s4 = sld [smem:[#allocation0]]
  $region30: #{tpu_custom_call.1} parent=0
    _
  %s6 = ssub.s32 1, %s4
  %s7 = scalar_select 0, %s6, %s4
  $region1: #{tpu_custom_call.1} parent=0
    #allocation2 [shape = 'u8[131072]{0}', space=vmem, size = 0x20000, scoped, tag = 'input window, operand 0, single buffered']
    #allocation3 [shape = 's32[1]{0}', space=sflag, size = 0x4, scoped, tag = 'scoped memory for tpu_custom_call.1']
    #allocation4 [shape = 's32[1]{0}', space=sflag, size = 0x4, scoped, tag = 'scoped memory for tpu_custom_call.1']
    #allocation5 [shape = 'u8[65536]{0}', space=vmem, size = 0x10000, scoped, tag = 'input window, operand 1, single buffered']
    #allocation6 [shape = 's32[1]{0}', space=sflag, size = 0x4, scoped, tag = 'scoped memory for tpu_custom_call.1']
    #allocation7 [shape = 'u8[131072]{0}', space=vmem, size = 0x20000, scoped, tag = 'output window, operand 0, single buffered']
    %8 = vsyncpa [#allocation3], 0
    %9 = vsyncpa [#allocation6], 0
    %10 = vsyncpa [#allocation4], 0
    // Predicated region
    $region2: #{tpu_custom_call.1} parent=1 // pred_check
      _
    $region3: #{tpu_custom_call.1} parent=1 // pred_check_branch
      %12 = sbr.rel (0) target = $region5
    $region4: #{tpu_custom_call.1} parent=1 // pred_region
      %s14 = ssub.s32 4096, 4096
      %15 = vsyncadd [#allocation3], %s14
      %s16 = sshll.u32 [#allocation2], 4
      %s17 = int_to_ptr.vmem [resolvable:$true] %s16
      %22 = dma.hbm_to_vmem [thread:$0]  %s0, 4096, %s17, [#allocation3], 128, 128, 8
    $region5: #{tpu_custom_call.1} parent=1 // pred_fallthru
      _
    // Predicated region
    $region6: #{tpu_custom_call.1} parent=1 // pred_check
      _
    $region7: #{tpu_custom_call.1} parent=1 // pred_check_branch
      %24 = sbr.rel (0) target = $region9
    $region8: #{tpu_custom_call.1} parent=1 // pred_region
      %s26 = ssub.s32 2048, 2048
      %27 = vsyncadd [#allocation6], %s26
      %s28 = sshll.u32 [#allocation5], 4
      %s29 = int_to_ptr.vmem [resolvable:$true] %s28
      %34 = dma.hbm_to_vmem [thread:$0]  %s1, 2048, %s29, [#allocation6], 128, 128, 8
    $region9: #{tpu_custom_call.1} parent=1 // pred_fallthru
      _
    // Predicated region
    $region10: #{tpu_custom_call.1} parent=1 // pred_check
      _
    $region11: #{tpu_custom_call.1} parent=1 // pred_check_branch
      %36 = sbr.rel (0) target = $region13
    $region12: #{tpu_custom_call.1} parent=1 // pred_region
      _
    $region13: #{tpu_custom_call.1} parent=1 // pred_fallthru
      _
    // Predicated region
    $region14: #{tpu_custom_call.1} parent=1 // pred_check
      _
    $region15: #{tpu_custom_call.1} parent=1 // pred_check_branch
      %38 = sbr.rel (0) target = $region17
    $region16: #{tpu_custom_call.1} parent=1 // pred_region
      %39 = dma.done [#allocation3], 4096
    $region17: #{tpu_custom_call.1} parent=1 // pred_fallthru
      _
    // Predicated region
    $region18: #{tpu_custom_call.1} parent=1 // pred_check
      _
    $region19: #{tpu_custom_call.1} parent=1 // pred_check_branch
      %41 = sbr.rel (0) target = $region21
    $region20: #{tpu_custom_call.1} parent=1 // pred_region
      %42 = dma.done [#allocation6], 2048
    $region21: #{tpu_custom_call.1} parent=1 // pred_fallthru
      _
    %v43 = vld [vmem:[#allocation2] sm:$0xff]
    %v44 = vld [vmem:[#allocation2 + $0x8] sm:$0xff]
    %v45 = vld [vmem:[#allocation2 + $0x10] sm:$0xff]
    %v46 = vld [vmem:[#allocation2 + $0x18] sm:$0xff]
    %v47 = vld [vmem:[#allocation2 + $0x20] sm:$0xff]
    %v48 = vld [vmem:[#allocation2 + $0x28] sm:$0xff]
    %v49 = vld [vmem:[#allocation2 + $0x30] sm:$0xff]
    %v50 = vld [vmem:[#allocation2 + $0x38] sm:$0xff]
    %v51 = vld [vmem:[#allocation2 + $0x40] sm:$0xff]
    %v52 = vld [vmem:[#allocation2 + $0x48] sm:$0xff]
    %v53 = vld [vmem:[#allocation2 + $0x50] sm:$0xff]
    %v54 = vld [vmem:[#allocation2 + $0x58] sm:$0xff]
    %v55 = vld [vmem:[#allocation2 + $0x60] sm:$0xff]
    %v56 = vld [vmem:[#allocation2 + $0x68] sm:$0xff]
    %v57 = vld [vmem:[#allocation2 + $0x70] sm:$0xff]
    %v58 = vld [vmem:[#allocation2 + $0x78] sm:$0xff]
    %v59 = vld [vmem:[#allocation2 + $0x80] sm:$0xff]
    %v60 = vld [vmem:[#allocation2 + $0x88] sm:$0xff]
    %v61 = vld [vmem:[#allocation2 + $0x90] sm:$0xff]
    %v62 = vld [vmem:[#allocation2 + $0x98] sm:$0xff]
    %v63 = vld [vmem:[#allocation2 + $0xa0] sm:$0xff]
    %v64 = vld [vmem:[#allocation2 + $0xa8] sm:$0xff]
    %v65 = vld [vmem:[#allocation2 + $0xb0] sm:$0xff]
    %v66 = vld [vmem:[#allocation2 + $0xb8] sm:$0xff]
    %v67 = vld [vmem:[#allocation2 + $0xc0] sm:$0xff]
    %v68 = vld [vmem:[#allocation2 + $0xc8] sm:$0xff]
    %v69 = vld [vmem:[#allocation2 + $0xd0] sm:$0xff]
    %v70 = vld [vmem:[#allocation2 + $0xd8] sm:$0xff]
    %v71 = vld [vmem:[#allocation2 + $0xe0] sm:$0xff]
    %v72 = vld [vmem:[#allocation2 + $0xe8] sm:$0xff]
    %v73 = vld [vmem:[#allocation2 + $0xf0] sm:$0xff]
    %v74 = vld [vmem:[#allocation2 + $0xf8] sm:$0xff]
    %v75 = vld [vmem:[#allocation5] sm:$0xff]
    %v76 = vld [vmem:[#allocation5 + $0x8] sm:$0xff]
    %v77 = vld [vmem:[#allocation5 + $0x10] sm:$0xff]
    %v78 = vld [vmem:[#allocation5 + $0x18] sm:$0xff]
    %v79 = vld [vmem:[#allocation5 + $0x20] sm:$0xff]
    %v80 = vld [vmem:[#allocation5 + $0x28] sm:$0xff]
    %v81 = vld [vmem:[#allocation5 + $0x30] sm:$0xff]
    %v82 = vld [vmem:[#allocation5 + $0x38] sm:$0xff]
    %v83 = vld [vmem:[#allocation5 + $0x40] sm:$0xff]
    %v84 = vld [vmem:[#allocation5 + $0x48] sm:$0xff]
    %v85 = vld [vmem:[#allocation5 + $0x50] sm:$0xff]
    %v86 = vld [vmem:[#allocation5 + $0x58] sm:$0xff]
    %v87 = vld [vmem:[#allocation5 + $0x60] sm:$0xff]
    %v88 = vld [vmem:[#allocation5 + $0x68] sm:$0xff]
    %v89 = vld [vmem:[#allocation5 + $0x70] sm:$0xff]
    %v90 = vld [vmem:[#allocation5 + $0x78] sm:$0xff]
    %v91 = vld [vmem:[%s2] sm:$0x1]
    %v93 = vlaneseq
    %v94 = vshrl.u32 %v93, 7
    %v95 = vsub.s32 0, %v94
    %v96 = vrot.slane %v91, %v95
    %98 = vmatprep.subr.mxu0 0.0
    %99 = vmatpush1.msra.mxu0 %v90
    %100 = vmatprep.subr.mxu0 0.0
    %101 = vmatpush1.msra.mxu0 %v89
    %102 = vmatprep.subr.mxu0 0.0
    %103 = vmatpush1.msra.mxu0 %v88
    %104 = vmatprep.subr.mxu0 0.0
    %105 = vmatpush1.msra.mxu0 %v87
    %106 = vmatprep.subr.mxu0 0.0
    %107 = vmatpush1.msra.mxu0 %v86
    %108 = vmatprep.subr.mxu0 0.0
    %109 = vmatpush1.msra.mxu0 %v85
    %110 = vmatprep.subr.mxu0 0.0
    %111 = vmatpush1.msra.mxu0 %v84
    %112 = vmatprep.subr.mxu0 0.0
    %113 = vmatpush1.msra.mxu0 %v83
    %114 = vmatprep.subr.mxu0 0.0
    %115 = vmatpush1.msra.mxu0 %v82
    %116 = vmatprep.subr.mxu0 0.0
    %117 = vmatpush1.msra.mxu0 %v81
    %118 = vmatprep.subr.mxu0 0.0
    %119 = vmatpush1.msra.mxu0 %v80
    %120 = vmatprep.subr.mxu0 0.0
    %121 = vmatpush1.msra.mxu0 %v79
    %122 = vmatprep.subr.mxu0 0.0
    %123 = vmatpush1.msra.mxu0 %v78
    %124 = vmatprep.subr.mxu0 0.0
    %125 = vmatpush1.msra.mxu0 %v77
    %126 = vmatprep.subr.mxu0 0.0
    %127 = vmatpush1.msra.mxu0 %v76
    %128 = vmatprep.subr.mxu0 0.0
    %129 = vmatpush1.msra.mxu0 %v75
    %130 = vmatprep.subr.mxu0 0.0
    %131 = vmatpush2.msra.mxu0 0.0
    %132 = vmatprep.subr.mxu0 0.0
    %133 = vmatpush2.msra.mxu0 0.0
    %134 = vmatprep.subr.mxu0 0.0
    %135 = vmatpush2.msra.mxu0 0.0
    %136 = vmatprep.subr.mxu0 0.0
    %137 = vmatpush2.msra.mxu0 0.0
    %138 = vmatprep.subr.mxu0 0.0
    %139 = vmatpush2.msra.mxu0 0.0
    %140 = vmatprep.subr.mxu0 0.0
    %141 = vmatpush2.msra.mxu0 0.0
    %142 = vmatprep.subr.mxu0 0.0
    %143 = vmatpush2.msra.mxu0 0.0
    %144 = vmatprep.subr.mxu0 0.0
    %145 = vmatpush2.msra.mxu0 0.0
    %146 = vmatprep.subr.mxu0 0.0
    %147 = vmatpush2.msra.mxu0 0.0
    %148 = vmatprep.subr.mxu0 0.0
    %149 = vmatpush2.msra.mxu0 0.0
    %150 = vmatprep.subr.mxu0 0.0
    %151 = vmatpush2.msra.mxu0 0.0
    %152 = vmatprep.subr.mxu0 0.0
    %153 = vmatpush2.msra.mxu0 0.0
    %154 = vmatprep.subr.mxu0 0.0
    %155 = vmatpush2.msra.mxu0 0.0
    %156 = vmatprep.subr.mxu0 0.0
    %157 = vmatpush2.msra.mxu0 0.0
    %158 = vmatprep.subr.mxu0 0.0
    %159 = vmatpush2.msra.mxu0 0.0
    %160 = vmatprep.subr.mxu0 0.0
    %161 = vmatpush2.msra.mxu0 0.0
    %162 = vmatprep.mubr.f32.mxu0 0.0
    %163 = vmatmul.mubr.f32.gmra.mxu0 %v43
    %v164 = vpop.f32.mrf.mxu0
    %v165 = vadd.f32 %v96, %v164
    %v166 = vpop.f32.mrf.mxu0
    %167 = vmatprep.mubr.f32.mxu0 0.0
    %168 = vmatmul.mubr.f32.gmra.mxu0 %v44
    %v169 = vpop.f32.mrf.mxu0
    %v170 = vadd.f32 %v96, %v169
    %v171 = vpop.f32.mrf.mxu0
    %172 = vmatprep.mubr.f32.mxu0 0.0
    %173 = vmatmul.mubr.f32.gmra.mxu0 %v45
    %v174 = vpop.f32.mrf.mxu0
    %v175 = vadd.f32 %v96, %v174
    %v176 = vpop.f32.mrf.mxu0
    %177 = vmatprep.mubr.f32.mxu0 0.0
    %178 = vmatmul.mubr.f32.gmra.mxu0 %v46
    %v179 = vpop.f32.mrf.mxu0
    %v180 = vadd.f32 %v96, %v179
    %v181 = vpop.f32.mrf.mxu0
    %182 = vmatprep.mubr.f32.mxu0 0.0
    %183 = vmatmul.mubr.f32.gmra.mxu0 %v47
    %v184 = vpop.f32.mrf.mxu0
    %v185 = vadd.f32 %v96, %v184
    %v186 = vpop.f32.mrf.mxu0
    %187 = vmatprep.mubr.f32.mxu0 0.0
    %188 = vmatmul.mubr.f32.gmra.mxu0 %v48
    %v189 = vpop.f32.mrf.mxu0
    %v190 = vadd.f32 %v96, %v189
    %v191 = vpop.f32.mrf.mxu0
    %192 = vmatprep.mubr.f32.mxu0 0.0
    %193 = vmatmul.mubr.f32.gmra.mxu0 %v49
    %v194 = vpop.f32.mrf.mxu0
    %v195 = vadd.f32 %v96, %v194
    %v196 = vpop.f32.mrf.mxu0
    %197 = vmatprep.mubr.f32.mxu0 0.0
    %198 = vmatmul.mubr.f32.gmra.mxu0 %v50
    %v199 = vpop.f32.mrf.mxu0
    %v200 = vadd.f32 %v96, %v199
    %v201 = vpop.f32.mrf.mxu0
    %202 = vmatprep.mubr.f32.mxu0 0.0
    %203 = vmatmul.mubr.f32.gmra.mxu0 %v51
    %v204 = vpop.f32.mrf.mxu0
    %v205 = vadd.f32 %v96, %v204
    %v206 = vpop.f32.mrf.mxu0
    %207 = vmatprep.mubr.f32.mxu0 0.0
    %208 = vmatmul.mubr.f32.gmra.mxu0 %v52
    %v209 = vpop.f32.mrf.mxu0
    %v210 = vadd.f32 %v96, %v209
    %v211 = vpop.f32.mrf.mxu0
    %212 = vmatprep.mubr.f32.mxu0 0.0
    %213 = vmatmul.mubr.f32.gmra.mxu0 %v53
    %v214 = vpop.f32.mrf.mxu0
    %v215 = vadd.f32 %v96, %v214
    %v216 = vpop.f32.mrf.mxu0
    %217 = vmatprep.mubr.f32.mxu0 0.0
    %218 = vmatmul.mubr.f32.gmra.mxu0 %v54
    %v219 = vpop.f32.mrf.mxu0
    %v220 = vadd.f32 %v96, %v219
    %v221 = vpop.f32.mrf.mxu0
    %222 = vmatprep.mubr.f32.mxu0 0.0
    %223 = vmatmul.mubr.f32.gmra.mxu0 %v55
    %v224 = vpop.f32.mrf.mxu0
    %v225 = vadd.f32 %v96, %v224
    %v226 = vpop.f32.mrf.mxu0
    %227 = vmatprep.mubr.f32.mxu0 0.0
    %228 = vmatmul.mubr.f32.gmra.mxu0 %v56
    %v229 = vpop.f32.mrf.mxu0
    %v230 = vadd.f32 %v96, %v229
    %v231 = vpop.f32.mrf.mxu0
    %232 = vmatprep.mubr.f32.mxu0 0.0
    %233 = vmatmul.mubr.f32.gmra.mxu0 %v57
    %v234 = vpop.f32.mrf.mxu0
    %v235 = vadd.f32 %v96, %v234
    %v236 = vpop.f32.mrf.mxu0
    %237 = vmatprep.mubr.f32.mxu0 0.0
    %238 = vmatmul.mubr.f32.gmra.mxu0 %v58
    %v239 = vpop.f32.mrf.mxu0
    %v240 = vadd.f32 %v96, %v239
    %v241 = vpop.f32.mrf.mxu0
    %242 = vmatprep.mubr.f32.mxu0 0.0
    %243 = vmatmul.mubr.f32.gmra.mxu0 %v59
    %v244 = vpop.f32.mrf.mxu0
    %v245 = vadd.f32 %v96, %v244
    %v246 = vpop.f32.mrf.mxu0
    %247 = vmatprep.mubr.f32.mxu0 0.0
    %248 = vmatmul.mubr.f32.gmra.mxu0 %v60
    %v249 = vpop.f32.mrf.mxu0
    %v250 = vadd.f32 %v96, %v249
    %v251 = vpop.f32.mrf.mxu0
    %252 = vmatprep.mubr.f32.mxu0 0.0
    %253 = vmatmul.mubr.f32.gmra.mxu0 %v61
    %v254 = vpop.f32.mrf.mxu0
    %v255 = vadd.f32 %v96, %v254
    %v256 = vpop.f32.mrf.mxu0
    %257 = vmatprep.mubr.f32.mxu0 0.0
    %258 = vmatmul.mubr.f32.gmra.mxu0 %v62
    %v259 = vpop.f32.mrf.mxu0
    %v260 = vadd.f32 %v96, %v259
    %v261 = vpop.f32.mrf.mxu0
    %262 = vmatprep.mubr.f32.mxu0 0.0
    %263 = vmatmul.mubr.f32.gmra.mxu0 %v63
    %v264 = vpop.f32.mrf.mxu0
    %v265 = vadd.f32 %v96, %v264
    %v266 = vpop.f32.mrf.mxu0
    %267 = vmatprep.mubr.f32.mxu0 0.0
    %268 = vmatmul.mubr.f32.gmra.mxu0 %v64
    %v269 = vpop.f32.mrf.mxu0
    %v270 = vadd.f32 %v96, %v269
    %v271 = vpop.f32.mrf.mxu0
    %272 = vmatprep.mubr.f32.mxu0 0.0
    %273 = vmatmul.mubr.f32.gmra.mxu0 %v65
    %v274 = vpop.f32.mrf.mxu0
    %v275 = vadd.f32 %v96, %v274
    %v276 = vpop.f32.mrf.mxu0
    %277 = vmatprep.mubr.f32.mxu0 0.0
    %278 = vmatmul.mubr.f32.gmra.mxu0 %v66
    %v279 = vpop.f32.mrf.mxu0
    %v280 = vadd.f32 %v96, %v279
    %v281 = vpop.f32.mrf.mxu0
    %282 = vmatprep.mubr.f32.mxu0 0.0
    %283 = vmatmul.mubr.f32.gmra.mxu0 %v67
    %v284 = vpop.f32.mrf.mxu0
    %v285 = vadd.f32 %v96, %v284
    %v286 = vpop.f32.mrf.mxu0
    %287 = vmatprep.mubr.f32.mxu0 0.0
    %288 = vmatmul.mubr.f32.gmra.mxu0 %v68
    %v289 = vpop.f32.mrf.mxu0
    %v290 = vadd.f32 %v96, %v289
    %v291 = vpop.f32.mrf.mxu0
    %292 = vmatprep.mubr.f32.mxu0 0.0
    %293 = vmatmul.mubr.f32.gmra.mxu0 %v69
    %v294 = vpop.f32.mrf.mxu0
    %v295 = vadd.f32 %v96, %v294
    %v296 = vpop.f32.mrf.mxu0
    %297 = vmatprep.mubr.f32.mxu0 0.0
    %298 = vmatmul.mubr.f32.gmra.mxu0 %v70
    %v299 = vpop.f32.mrf.mxu0
    %v300 = vadd.f32 %v96, %v299
    %v301 = vpop.f32.mrf.mxu0
    %302 = vmatprep.mubr.f32.mxu0 0.0
    %303 = vmatmul.mubr.f32.gmra.mxu0 %v71
    %v304 = vpop.f32.mrf.mxu0
    %v305 = vadd.f32 %v96, %v304
    %v306 = vpop.f32.mrf.mxu0
    %307 = vmatprep.mubr.f32.mxu0 0.0
    %308 = vmatmul.mubr.f32.gmra.mxu0 %v72
    %v309 = vpop.f32.mrf.mxu0
    %v310 = vadd.f32 %v96, %v309
    %v311 = vpop.f32.mrf.mxu0
    %312 = vmatprep.mubr.f32.mxu0 0.0
    %313 = vmatmul.mubr.f32.gmra.mxu0 %v73
    %v314 = vpop.f32.mrf.mxu0
    %v315 = vadd.f32 %v96, %v314
    %v316 = vpop.f32.mrf.mxu0
    %317 = vmatprep.mubr.f32.mxu0 0.0
    %318 = vmatmul.mubr.f32.gmra.mxu0 %v74
    %v319 = vpop.f32.mrf.mxu0
    %v320 = vadd.f32 %v96, %v319
    %v321 = vpop.f32.mrf.mxu0
    %322 = vdwg.mxu0
    %v323 = vand.u32 2147483647, %v165
    %vm324 = vcmp.le.f32.partialorder %v323, 0.7853982
    %vm325 = vcmp.lt.s32.totalorder %v165, 0
    %v326 = vand.u32 %v165, 2139095040
    %v327 = vshrl.u32 %v326, 23
    %v328 = vsub.s32 %v327, 127
    %v329 = vand.u32 2147483647, %v165
    %v330 = vand.u32 %v329, 8388607
    %v331 = vor.u32 %v330, 8388608
    %v332 = vsub.s32 0, %v331
    %v333 = vadd.s32 %v328, 1
    %vm334 = vcmp.gt.s32.totalorder %v333, 0
    %v335 = vsel %vm334, %v333, 0
    %v336 = vshrl.u32 %v335, 5
    %v337 = vand.u32 %v335, 31
    %v338 = vsub.s32 32, %v337
    %v339 = vshrl.u32 683565275, %v338
    %v340 = vshll.u32 683565275, %v337
    %v341 = vshrl.u32 2475754826, %v338
    %v342 = vor.u32 %v340, %v341
    %v343 = vshll.u32 2475754826, %v337
    %v344 = vshrl.u32 2131351028, %v338
    %v345 = vor.u32 %v343, %v344
    %v346 = vshll.u32 2131351028, %v337
    %v347 = vshrl.u32 2102212464, %v338
    %v348 = vor.u32 %v346, %v347
    %v349 = vshll.u32 2102212464, %v337
    %v350 = vshrl.u32 920167782, %v338
    %v351 = vor.u32 %v349, %v350
    %v352 = vshll.u32 920167782, %v337
    %v353 = vshrl.u32 1326507024, %v338
    %v354 = vor.u32 %v352, %v353
    %vm355 = vcmp.lt.s32.totalorder %v336, 1
    %vm356 = vcmp.lt.s32.totalorder %v336, 2
    %vm357 = vcmp.lt.s32.totalorder %v336, 3
    %vm358 = vcmp.lt.s32.totalorder %v336, 4
    %v359 = vsel %vm355, %v339, %v342
    %v360 = vsel %vm358, %v348, 2102212464
    %v361 = vsel %vm357, %v345, %v360
    %v362 = vsel %vm356, %v359, %v361
    %v363 = vsel %vm355, %v342, %v345
    %v364 = vsel %vm358, %v351, 920167782
    %v365 = vsel %vm357, %v348, %v364
    %v366 = vsel %vm356, %v363, %v365
    %v367 = vsel %vm355, %v345, %v348
    %v368 = vsel %vm358, %v354, 1326507024
    %v369 = vsel %vm357, %v351, %v368
    %v370 = vsel %vm356, %v367, %v369
    %v371 = vshll.u32 %v331, 8
    %v372 = vmul.u32.u64.compose %v371, %v370
    %v373 = vextract.low.u32 %v372
    %v374 = vextract.high.u32 %v372
    %v375 = vmul.u32.u64.compose %v371, %v366
    %v376 = vextract.low.u32 %v375
    %v377 = vextract.high.u32 %v375
    %v378 = vmul.u32 %v371, %v362
    %v379 = vadd.s32 %v374, %v376
    %vm380 = vc.u32 %v374, %v376
    %v381 = vadd.s32 %v377, 1
    %v382 = vsel %vm380, %v381, %v377
    %v383 = vadd.s32 %v378, %v382
    %v384 = vadd.s32 %v383, 536870912
    %v385 = vshrl.u32 %v384, 30
    %v386 = vshll.u32 %v385, 30
    %v387 = vsub.s32 %v383, %v386
    %vm388 = vcmp.lt.s32.totalorder %v387, 0
    %v389 = vsub.s32 0, %v387
    %v390 = vsel %vm388, %v389, %v387
    %v391 = vclz %v390
    %v392 = vsub.s32 %v391, 2
    %vm393 = vcmp.gt.s32.totalorder 0, %v392
    %v394 = vsel %vm393, 0, %v392
    %v395 = vsub.s32 32, %v394
    %v396 = vshll.u32 %v387, %v394
    %v397 = vshrl.u32 %v379, %v395
    %v398 = vor.u32 %v396, %v397
    %v399 = vsub.s32 4294967266, %v394
    %v400 = vadd.s32 %v399, 127
    %v401 = vshll.u32 %v400, 23
    %v402 = vor.u32 4788187, %v401
    %v403 = vand.u32 2147483647, %v402
    %v405 = vcvt.s32.f32 %v398
    %v406 = vmul.f32 %v405, %v403
    %v407 = vxor.u32 %v406, 2147483648
    %v408 = vsel %vm325, %v407, %v406
    %v409 = vsub.s32 4, %v385
    %v410 = vsel %vm325, %v409, %v385
    %v411 = vsel %vm324, %v165, %v408
    %v412 = vsel %vm324, 0, %v410
    %v413 = vcosq.f32.pop %v411
    %v414 = vsinq.f32.pop %v411
    %vm415 = vweird.f32 %v165
    %v416 = vadd.s32 %v412, 3
    %v417 = vand.u32 %v416, 3
    %vm418 = vcmp.lt.s32.totalorder %v417, 2
    %vm419 = vcmp.eq.s32.totalorder %v417, 0
    %v420 = vxor.u32 %v414, 2147483648
    %v421 = vsel %vm419, %v413, %v420
    %vm422 = vcmp.eq.s32.totalorder %v417, 2
    %v423 = vxor.u32 %v413, 2147483648
    %v424 = vsel %vm422, %v423, %v414
    %v425 = vsel %vm418, %v421, %v424
    %v426 = vsel %vm415, nan, %v425
    %v427 = vand.u32 2147483647, %v170
    %vm428 = vcmp.le.f32.partialorder %v427, 0.7853982
    %vm429 = vcmp.lt.s32.totalorder %v170, 0
    %v430 = vand.u32 %v170, 2139095040
    %v431 = vshrl.u32 %v430, 23
    %v432 = vsub.s32 %v431, 127
    %v433 = vand.u32 2147483647, %v170
    %v434 = vand.u32 %v433, 8388607
    %v435 = vor.u32 %v434, 8388608
    %v436 = vsub.s32 0, %v435
    %v437 = vadd.s32 %v432, 1
    %vm438 = vcmp.gt.s32.totalorder %v437, 0
    %v439 = vsel %vm438, %v437, 0
    %v440 = vshrl.u32 %v439, 5
    %v441 = vand.u32 %v439, 31
    %v442 = vsub.s32 32, %v441
    %v443 = vshrl.u32 683565275, %v442
    %v444 = vshll.u32 683565275, %v441
    %v445 = vshrl.u32 2475754826, %v442
    %v446 = vor.u32 %v444, %v445
    %v447 = vshll.u32 2475754826, %v441
    %v448 = vshrl.u32 2131351028, %v442
    %v449 = vor.u32 %v447, %v448
    %v450 = vshll.u32 2131351028, %v441
    %v451 = vshrl.u32 2102212464, %v442
    %v452 = vor.u32 %v450, %v451
    %v453 = vshll.u32 2102212464, %v441
    %v454 = vshrl.u32 920167782, %v442
    %v455 = vor.u32 %v453, %v454
    %v456 = vshll.u32 920167782, %v441
    %v457 = vshrl.u32 1326507024, %v442
    %v458 = vor.u32 %v456, %v457
    %vm459 = vcmp.lt.s32.totalorder %v440, 1
    %vm460 = vcmp.lt.s32.totalorder %v440, 2
    %vm461 = vcmp.lt.s32.totalorder %v440, 3
    %vm462 = vcmp.lt.s32.totalorder %v440, 4
    %v463 = vsel %vm459, %v443, %v446
    %v464 = vsel %vm462, %v452, 2102212464
    %v465 = vsel %vm461, %v449, %v464
    %v466 = vsel %vm460, %v463, %v465
    %v467 = vsel %vm459, %v446, %v449
    %v468 = vsel %vm462, %v455, 920167782
    %v469 = vsel %vm461, %v452, %v468
    %v470 = vsel %vm460, %v467, %v469
    %v471 = vsel %vm459, %v449, %v452
    %v472 = vsel %vm462, %v458, 1326507024
    %v473 = vsel %vm461, %v455, %v472
    %v474 = vsel %vm460, %v471, %v473
    %v475 = vshll.u32 %v435, 8
    %v476 = vmul.u32.u64.compose %v475, %v474
    %v477 = vextract.low.u32 %v476
    %v478 = vextract.high.u32 %v476
    %v479 = vmul.u32.u64.compose %v475, %v470
    %v480 = vextract.low.u32 %v479
    %v481 = vextract.high.u32 %v479
    %v482 = vmul.u32 %v475, %v466
    %v483 = vadd.s32 %v478, %v480
    %vm484 = vc.u32 %v478, %v480
    %v485 = vadd.s32 %v481, 1
    %v486 = vsel %vm484, %v485, %v481
    %v487 = vadd.s32 %v482, %v486
    %v488 = vadd.s32 %v487, 536870912
    %v489 = vshrl.u32 %v488, 30
    %v490 = vshll.u32 %v489, 30
    %v491 = vsub.s32 %v487, %v490
    %vm492 = vcmp.lt.s32.totalorder %v491, 0
    %v493 = vsub.s32 0, %v491
    %v494 = vsel %vm492, %v493, %v491
    %v495 = vclz %v494
    %v496 = vsub.s32 %v495, 2
    %vm497 = vcmp.gt.s32.totalorder 0, %v496
    %v498 = vsel %vm497, 0, %v496
    %v499 = vsub.s32 32, %v498
    %v500 = vshll.u32 %v491, %v498
    %v501 = vshrl.u32 %v483, %v499
    %v502 = vor.u32 %v500, %v501
    %v503 = vsub.s32 4294967266, %v498
    %v504 = vadd.s32 %v503, 127
    %v505 = vshll.u32 %v504, 23
    %v506 = vor.u32 4788187, %v505
    %v507 = vand.u32 2147483647, %v506
    %v509 = vcvt.s32.f32 %v502
    %v510 = vmul.f32 %v509, %v507
    %v511 = vxor.u32 %v510, 2147483648
    %v512 = vsel %vm429, %v511, %v510
    %v513 = vsub.s32 4, %v489
    %v514 = vsel %vm429, %v513, %v489
    %v515 = vsel %vm428, %v170, %v512
    %v516 = vsel %vm428, 0, %v514
    %v517 = vcosq.f32.pop %v515
    %v518 = vsinq.f32.pop %v515
    %vm519 = vweird.f32 %v170
    %v520 = vadd.s32 %v516, 3
    %v521 = vand.u32 %v520, 3
    %vm522 = vcmp.lt.s32.totalorder %v521, 2
    %vm523 = vcmp.eq.s32.totalorder %v521, 0
    %v524 = vxor.u32 %v518, 2147483648
    %v525 = vsel %vm523, %v517, %v524
    %vm526 = vcmp.eq.s32.totalorder %v521, 2
    %v527 = vxor.u32 %v517, 2147483648
    %v528 = vsel %vm526, %v527, %v518
    %v529 = vsel %vm522, %v525, %v528
    %v530 = vsel %vm519, nan, %v529
    %v531 = vand.u32 2147483647, %v175
    %vm532 = vcmp.le.f32.partialorder %v531, 0.7853982
    %vm533 = vcmp.lt.s32.totalorder %v175, 0
    %v534 = vand.u32 %v175, 2139095040
    %v535 = vshrl.u32 %v534, 23
    %v536 = vsub.s32 %v535, 127
    %v537 = vand.u32 2147483647, %v175
    %v538 = vand.u32 %v537, 8388607
    %v539 = vor.u32 %v538, 8388608
    %v540 = vsub.s32 0, %v539
    %v541 = vadd.s32 %v536, 1
    %vm542 = vcmp.gt.s32.totalorder %v541, 0
    %v543 = vsel %vm542, %v541, 0
    %v544 = vshrl.u32 %v543, 5
    %v545 = vand.u32 %v543, 31
    %v546 = vsub.s32 32, %v545
    %v547 = vshrl.u32 683565275, %v546
    %v548 = vshll.u32 683565275, %v545
    %v549 = vshrl.u32 2475754826, %v546
    %v550 = vor.u32 %v548, %v549
    %v551 = vshll.u32 2475754826, %v545
    %v552 = vshrl.u32 2131351028, %v546
    %v553 = vor.u32 %v551, %v552
    %v554 = vshll.u32 2131351028, %v545
    %v555 = vshrl.u32 2102212464, %v546
    %v556 = vor.u32 %v554, %v555
    %v557 = vshll.u32 2102212464, %v545
    %v558 = vshrl.u32 920167782, %v546
    %v559 = vor.u32 %v557, %v558
    %v560 = vshll.u32 920167782, %v545
    %v561 = vshrl.u32 1326507024, %v546
    %v562 = vor.u32 %v560, %v561
    %vm563 = vcmp.lt.s32.totalorder %v544, 1
    %vm564 = vcmp.lt.s32.totalorder %v544, 2
    %vm565 = vcmp.lt.s32.totalorder %v544, 3
    %vm566 = vcmp.lt.s32.totalorder %v544, 4
    %v567 = vsel %vm563, %v547, %v550
    %v568 = vsel %vm566, %v556, 2102212464
    %v569 = vsel %vm565, %v553, %v568
    %v570 = vsel %vm564, %v567, %v569
    %v571 = vsel %vm563, %v550, %v553
    %v572 = vsel %vm566, %v559, 920167782
    %v573 = vsel %vm565, %v556, %v572
    %v574 = vsel %vm564, %v571, %v573
    %v575 = vsel %vm563, %v553, %v556
    %v576 = vsel %vm566, %v562, 1326507024
    %v577 = vsel %vm565, %v559, %v576
    %v578 = vsel %vm564, %v575, %v577
    %v579 = vshll.u32 %v539, 8
    %v580 = vmul.u32.u64.compose %v579, %v578
    %v581 = vextract.low.u32 %v580
    %v582 = vextract.high.u32 %v580
    %v583 = vmul.u32.u64.compose %v579, %v574
    %v584 = vextract.low.u32 %v583
    %v585 = vextract.high.u32 %v583
    %v586 = vmul.u32 %v579, %v570
    %v587 = vadd.s32 %v582, %v584
    %vm588 = vc.u32 %v582, %v584
    %v589 = vadd.s32 %v585, 1
    %v590 = vsel %vm588, %v589, %v585
    %v591 = vadd.s32 %v586, %v590
    %v592 = vadd.s32 %v591, 536870912
    %v593 = vshrl.u32 %v592, 30
    %v594 = vshll.u32 %v593, 30
    %v595 = vsub.s32 %v591, %v594
    %vm596 = vcmp.lt.s32.totalorder %v595, 0
    %v597 = vsub.s32 0, %v595
    %v598 = vsel %vm596, %v597, %v595
    %v599 = vclz %v598
    %v600 = vsub.s32 %v599, 2
    %vm601 = vcmp.gt.s32.totalorder 0, %v600
    %v602 = vsel %vm601, 0, %v600
    %v603 = vsub.s32 32, %v602
    %v604 = vshll.u32 %v595, %v602
    %v605 = vshrl.u32 %v587, %v603
    %v606 = vor.u32 %v604, %v605
    %v607 = vsub.s32 4294967266, %v602
    %v608 = vadd.s32 %v607, 127
    %v609 = vshll.u32 %v608, 23
    %v610 = vor.u32 4788187, %v609
    %v611 = vand.u32 2147483647, %v610
    %v613 = vcvt.s32.f32 %v606
    %v614 = vmul.f32 %v613, %v611
    %v615 = vxor.u32 %v614, 2147483648
    %v616 = vsel %vm533, %v615, %v614
    %v617 = vsub.s32 4, %v593
    %v618 = vsel %vm533, %v617, %v593
    %v619 = vsel %vm532, %v175, %v616
    %v620 = vsel %vm532, 0, %v618
    %v621 = vcosq.f32.pop %v619
    %v622 = vsinq.f32.pop %v619
    %vm623 = vweird.f32 %v175
    %v624 = vadd.s32 %v620, 3
    %v625 = vand.u32 %v624, 3
    %vm626 = vcmp.lt.s32.totalorder %v625, 2
    %vm627 = vcmp.eq.s32.totalorder %v625, 0
    %v628 = vxor.u32 %v622, 2147483648
    %v629 = vsel %vm627, %v621, %v628
    %vm630 = vcmp.eq.s32.totalorder %v625, 2
    %v631 = vxor.u32 %v621, 2147483648
    %v632 = vsel %vm630, %v631, %v622
    %v633 = vsel %vm626, %v629, %v632
    %v634 = vsel %vm623, nan, %v633
    %v635 = vand.u32 2147483647, %v180
    %vm636 = vcmp.le.f32.partialorder %v635, 0.7853982
    %vm637 = vcmp.lt.s32.totalorder %v180, 0
    %v638 = vand.u32 %v180, 2139095040
    %v639 = vshrl.u32 %v638, 23
    %v640 = vsub.s32 %v639, 127
    %v641 = vand.u32 2147483647, %v180
    %v642 = vand.u32 %v641, 8388607
    %v643 = vor.u32 %v642, 8388608
    %v644 = vsub.s32 0, %v643
    %v645 = vadd.s32 %v640, 1
    %vm646 = vcmp.gt.s32.totalorder %v645, 0
    %v647 = vsel %vm646, %v645, 0
    %v648 = vshrl.u32 %v647, 5
    %v649 = vand.u32 %v647, 31
    %v650 = vsub.s32 32, %v649
    %v651 = vshrl.u32 683565275, %v650
    %v652 = vshll.u32 683565275, %v649
    %v653 = vshrl.u32 2475754826, %v650
    %v654 = vor.u32 %v652, %v653
    %v655 = vshll.u32 2475754826, %v649
    %v656 = vshrl.u32 2131351028, %v650
    %v657 = vor.u32 %v655, %v656
    %v658 = vshll.u32 2131351028, %v649
    %v659 = vshrl.u32 2102212464, %v650
    %v660 = vor.u32 %v658, %v659
    %v661 = vshll.u32 2102212464, %v649
    %v662 = vshrl.u32 920167782, %v650
    %v663 = vor.u32 %v661, %v662
    %v664 = vshll.u32 920167782, %v649
    %v665 = vshrl.u32 1326507024, %v650
    %v666 = vor.u32 %v664, %v665
    %vm667 = vcmp.lt.s32.totalorder %v648, 1
    %vm668 = vcmp.lt.s32.totalorder %v648, 2
    %vm669 = vcmp.lt.s32.totalorder %v648, 3
    %vm670 = vcmp.lt.s32.totalorder %v648, 4
    %v671 = vsel %vm667, %v651, %v654
    %v672 = vsel %vm670, %v660, 2102212464
    %v673 = vsel %vm669, %v657, %v672
    %v674 = vsel %vm668, %v671, %v673
    %v675 = vsel %vm667, %v654, %v657
    %v676 = vsel %vm670, %v663, 920167782
    %v677 = vsel %vm669, %v660, %v676
    %v678 = vsel %vm668, %v675, %v677
    %v679 = vsel %vm667, %v657, %v660
    %v680 = vsel %vm670, %v666, 1326507024
    %v681 = vsel %vm669, %v663, %v680
    %v682 = vsel %vm668, %v679, %v681
    %v683 = vshll.u32 %v643, 8
    %v684 = vmul.u32.u64.compose %v683, %v682
    %v685 = vextract.low.u32 %v684
    %v686 = vextract.high.u32 %v684
    %v687 = vmul.u32.u64.compose %v683, %v678
    %v688 = vextract.low.u32 %v687
    %v689 = vextract.high.u32 %v687
    %v690 = vmul.u32 %v683, %v674
    %v691 = vadd.s32 %v686, %v688
    %vm692 = vc.u32 %v686, %v688
    %v693 = vadd.s32 %v689, 1
    %v694 = vsel %vm692, %v693, %v689
    %v695 = vadd.s32 %v690, %v694
    %v696 = vadd.s32 %v695, 536870912
    %v697 = vshrl.u32 %v696, 30
    %v698 = vshll.u32 %v697, 30
    %v699 = vsub.s32 %v695, %v698
    %vm700 = vcmp.lt.s32.totalorder %v699, 0
    %v701 = vsub.s32 0, %v699
    %v702 = vsel %vm700, %v701, %v699
    %v703 = vclz %v702
    %v704 = vsub.s32 %v703, 2
    %vm705 = vcmp.gt.s32.totalorder 0, %v704
    %v706 = vsel %vm705, 0, %v704
    %v707 = vsub.s32 32, %v706
    %v708 = vshll.u32 %v699, %v706
    %v709 = vshrl.u32 %v691, %v707
    %v710 = vor.u32 %v708, %v709
    %v711 = vsub.s32 4294967266, %v706
    %v712 = vadd.s32 %v711, 127
    %v713 = vshll.u32 %v712, 23
    %v714 = vor.u32 4788187, %v713
    %v715 = vand.u32 2147483647, %v714
    %v717 = vcvt.s32.f32 %v710
    %v718 = vmul.f32 %v717, %v715
    %v719 = vxor.u32 %v718, 2147483648
    %v720 = vsel %vm637, %v719, %v718
    %v721 = vsub.s32 4, %v697
    %v722 = vsel %vm637, %v721, %v697
    %v723 = vsel %vm636, %v180, %v720
    %v724 = vsel %vm636, 0, %v722
    %v725 = vcosq.f32.pop %v723
    %v726 = vsinq.f32.pop %v723
    %vm727 = vweird.f32 %v180
    %v728 = vadd.s32 %v724, 3
    %v729 = vand.u32 %v728, 3
    %vm730 = vcmp.lt.s32.totalorder %v729, 2
    %vm731 = vcmp.eq.s32.totalorder %v729, 0
    %v732 = vxor.u32 %v726, 2147483648
    %v733 = vsel %vm731, %v725, %v732
    %vm734 = vcmp.eq.s32.totalorder %v729, 2
    %v735 = vxor.u32 %v725, 2147483648
    %v736 = vsel %vm734, %v735, %v726
    %v737 = vsel %vm730, %v733, %v736
    %v738 = vsel %vm727, nan, %v737
    %v739 = vand.u32 2147483647, %v185
    %vm740 = vcmp.le.f32.partialorder %v739, 0.7853982
    %vm741 = vcmp.lt.s32.totalorder %v185, 0
    %v742 = vand.u32 %v185, 2139095040
    %v743 = vshrl.u32 %v742, 23
    %v744 = vsub.s32 %v743, 127
    %v745 = vand.u32 2147483647, %v185
    %v746 = vand.u32 %v745, 8388607
    %v747 = vor.u32 %v746, 8388608
    %v748 = vsub.s32 0, %v747
    %v749 = vadd.s32 %v744, 1
    %vm750 = vcmp.gt.s32.totalorder %v749, 0
    %v751 = vsel %vm750, %v749, 0
    %v752 = vshrl.u32 %v751, 5
    %v753 = vand.u32 %v751, 31
    %v754 = vsub.s32 32, %v753
    %v755 = vshrl.u32 683565275, %v754
    %v756 = vshll.u32 683565275, %v753
    %v757 = vshrl.u32 2475754826, %v754
    %v758 = vor.u32 %v756, %v757
    %v759 = vshll.u32 2475754826, %v753
    %v760 = vshrl.u32 2131351028, %v754
    %v761 = vor.u32 %v759, %v760
    %v762 = vshll.u32 2131351028, %v753
    %v763 = vshrl.u32 2102212464, %v754
    %v764 = vor.u32 %v762, %v763
    %v765 = vshll.u32 2102212464, %v753
    %v766 = vshrl.u32 920167782, %v754
    %v767 = vor.u32 %v765, %v766
    %v768 = vshll.u32 920167782, %v753
    %v769 = vshrl.u32 1326507024, %v754
    %v770 = vor.u32 %v768, %v769
    %vm771 = vcmp.lt.s32.totalorder %v752, 1
    %vm772 = vcmp.lt.s32.totalorder %v752, 2
    %vm773 = vcmp.lt.s32.totalorder %v752, 3
    %vm774 = vcmp.lt.s32.totalorder %v752, 4
    %v775 = vsel %vm771, %v755, %v758
    %v776 = vsel %vm774, %v764, 2102212464
    %v777 = vsel %vm773, %v761, %v776
    %v778 = vsel %vm772, %v775, %v777
    %v779 = vsel %vm771, %v758, %v761
    %v780 = vsel %vm774, %v767, 920167782
    %v781 = vsel %vm773, %v764, %v780
    %v782 = vsel %vm772, %v779, %v781
    %v783 = vsel %vm771, %v761, %v764
    %v784 = vsel %vm774, %v770, 1326507024
    %v785 = vsel %vm773, %v767, %v784
    %v786 = vsel %vm772, %v783, %v785
    %v787 = vshll.u32 %v747, 8
    %v788 = vmul.u32.u64.compose %v787, %v786
    %v789 = vextract.low.u32 %v788
    %v790 = vextract.high.u32 %v788
    %v791 = vmul.u32.u64.compose %v787, %v782
    %v792 = vextract.low.u32 %v791
    %v793 = vextract.high.u32 %v791
    %v794 = vmul.u32 %v787, %v778
    %v795 = vadd.s32 %v790, %v792
    %vm796 = vc.u32 %v790, %v792
    %v797 = vadd.s32 %v793, 1
    %v798 = vsel %vm796, %v797, %v793
    %v799 = vadd.s32 %v794, %v798
    %v800 = vadd.s32 %v799, 536870912
    %v801 = vshrl.u32 %v800, 30
    %v802 = vshll.u32 %v801, 30
    %v803 = vsub.s32 %v799, %v802
    %vm804 = vcmp.lt.s32.totalorder %v803, 0
    %v805 = vsub.s32 0, %v803
    %v806 = vsel %vm804, %v805, %v803
    %v807 = vclz %v806
    %v808 = vsub.s32 %v807, 2
    %vm809 = vcmp.gt.s32.totalorder 0, %v808
    %v810 = vsel %vm809, 0, %v808
    %v811 = vsub.s32 32, %v810
    %v812 = vshll.u32 %v803, %v810
    %v813 = vshrl.u32 %v795, %v811
    %v814 = vor.u32 %v812, %v813
    %v815 = vsub.s32 4294967266, %v810
    %v816 = vadd.s32 %v815, 127
    %v817 = vshll.u32 %v816, 23
    %v818 = vor.u32 4788187, %v817
    %v819 = vand.u32 2147483647, %v818
    %v821 = vcvt.s32.f32 %v814
    %v822 = vmul.f32 %v821, %v819
    %v823 = vxor.u32 %v822, 2147483648
    %v824 = vsel %vm741, %v823, %v822
    %v825 = vsub.s32 4, %v801
    %v826 = vsel %vm741, %v825, %v801
    %v827 = vsel %vm740, %v185, %v824
    %v828 = vsel %vm740, 0, %v826
    %v829 = vcosq.f32.pop %v827
    %v830 = vsinq.f32.pop %v827
    %vm831 = vweird.f32 %v185
    %v832 = vadd.s32 %v828, 3
    %v833 = vand.u32 %v832, 3
    %vm834 = vcmp.lt.s32.totalorder %v833, 2
    %vm835 = vcmp.eq.s32.totalorder %v833, 0
    %v836 = vxor.u32 %v830, 2147483648
    %v837 = vsel %vm835, %v829, %v836
    %vm838 = vcmp.eq.s32.totalorder %v833, 2
    %v839 = vxor.u32 %v829, 2147483648
    %v840 = vsel %vm838, %v839, %v830
    %v841 = vsel %vm834, %v837, %v840
    %v842 = vsel %vm831, nan, %v841
    %v843 = vand.u32 2147483647, %v190
    %vm844 = vcmp.le.f32.partialorder %v843, 0.7853982
    %vm845 = vcmp.lt.s32.totalorder %v190, 0
    %v846 = vand.u32 %v190, 2139095040
    %v847 = vshrl.u32 %v846, 23
    %v848 = vsub.s32 %v847, 127
    %v849 = vand.u32 2147483647, %v190
    %v850 = vand.u32 %v849, 8388607
    %v851 = vor.u32 %v850, 8388608
    %v852 = vsub.s32 0, %v851
    %v853 = vadd.s32 %v848, 1
    %vm854 = vcmp.gt.s32.totalorder %v853, 0
    %v855 = vsel %vm854, %v853, 0
    %v856 = vshrl.u32 %v855, 5
    %v857 = vand.u32 %v855, 31
    %v858 = vsub.s32 32, %v857
    %v859 = vshrl.u32 683565275, %v858
    %v860 = vshll.u32 683565275, %v857
    %v861 = vshrl.u32 2475754826, %v858
    %v862 = vor.u32 %v860, %v861
    %v863 = vshll.u32 2475754826, %v857
    %v864 = vshrl.u32 2131351028, %v858
    %v865 = vor.u32 %v863, %v864
    %v866 = vshll.u32 2131351028, %v857
    %v867 = vshrl.u32 2102212464, %v858
    %v868 = vor.u32 %v866, %v867
    %v869 = vshll.u32 2102212464, %v857
    %v870 = vshrl.u32 920167782, %v858
    %v871 = vor.u32 %v869, %v870
    %v872 = vshll.u32 920167782, %v857
    %v873 = vshrl.u32 1326507024, %v858
    %v874 = vor.u32 %v872, %v873
    %vm875 = vcmp.lt.s32.totalorder %v856, 1
    %vm876 = vcmp.lt.s32.totalorder %v856, 2
    %vm877 = vcmp.lt.s32.totalorder %v856, 3
    %vm878 = vcmp.lt.s32.totalorder %v856, 4
    %v879 = vsel %vm875, %v859, %v862
    %v880 = vsel %vm878, %v868, 2102212464
    %v881 = vsel %vm877, %v865, %v880
    %v882 = vsel %vm876, %v879, %v881
    %v883 = vsel %vm875, %v862, %v865
    %v884 = vsel %vm878, %v871, 920167782
    %v885 = vsel %vm877, %v868, %v884
    %v886 = vsel %vm876, %v883, %v885
    %v887 = vsel %vm875, %v865, %v868
    %v888 = vsel %vm878, %v874, 1326507024
    %v889 = vsel %vm877, %v871, %v888
    %v890 = vsel %vm876, %v887, %v889
    %v891 = vshll.u32 %v851, 8
    %v892 = vmul.u32.u64.compose %v891, %v890
    %v893 = vextract.low.u32 %v892
    %v894 = vextract.high.u32 %v892
    %v895 = vmul.u32.u64.compose %v891, %v886
    %v896 = vextract.low.u32 %v895
    %v897 = vextract.high.u32 %v895
    %v898 = vmul.u32 %v891, %v882
    %v899 = vadd.s32 %v894, %v896
    %vm900 = vc.u32 %v894, %v896
    %v901 = vadd.s32 %v897, 1
    %v902 = vsel %vm900, %v901, %v897
    %v903 = vadd.s32 %v898, %v902
    %v904 = vadd.s32 %v903, 536870912
    %v905 = vshrl.u32 %v904, 30
    %v906 = vshll.u32 %v905, 30
    %v907 = vsub.s32 %v903, %v906
    %vm908 = vcmp.lt.s32.totalorder %v907, 0
    %v909 = vsub.s32 0, %v907
    %v910 = vsel %vm908, %v909, %v907
    %v911 = vclz %v910
    %v912 = vsub.s32 %v911, 2
    %vm913 = vcmp.gt.s32.totalorder 0, %v912
    %v914 = vsel %vm913, 0, %v912
    %v915 = vsub.s32 32, %v914
    %v916 = vshll.u32 %v907, %v914
    %v917 = vshrl.u32 %v899, %v915
    %v918 = vor.u32 %v916, %v917
    %v919 = vsub.s32 4294967266, %v914
    %v920 = vadd.s32 %v919, 127
    %v921 = vshll.u32 %v920, 23
    %v922 = vor.u32 4788187, %v921
    %v923 = vand.u32 2147483647, %v922
    %v925 = vcvt.s32.f32 %v918
    %v926 = vmul.f32 %v925, %v923
    %v927 = vxor.u32 %v926, 2147483648
    %v928 = vsel %vm845, %v927, %v926
    %v929 = vsub.s32 4, %v905
    %v930 = vsel %vm845, %v929, %v905
    %v931 = vsel %vm844, %v190, %v928
    %v932 = vsel %vm844, 0, %v930
    %v933 = vcosq.f32.pop %v931
    %v934 = vsinq.f32.pop %v931
    %vm935 = vweird.f32 %v190
    %v936 = vadd.s32 %v932, 3
    %v937 = vand.u32 %v936, 3
    %vm938 = vcmp.lt.s32.totalorder %v937, 2
    %vm939 = vcmp.eq.s32.totalorder %v937, 0
    %v940 = vxor.u32 %v934, 2147483648
    %v941 = vsel %vm939, %v933, %v940
    %vm942 = vcmp.eq.s32.totalorder %v937, 2
    %v943 = vxor.u32 %v933, 2147483648
    %v944 = vsel %vm942, %v943, %v934
    %v945 = vsel %vm938, %v941, %v944
    %v946 = vsel %vm935, nan, %v945
    %v947 = vand.u32 2147483647, %v195
    %vm948 = vcmp.le.f32.partialorder %v947, 0.7853982
    %vm949 = vcmp.lt.s32.totalorder %v195, 0
    %v950 = vand.u32 %v195, 2139095040
    %v951 = vshrl.u32 %v950, 23
    %v952 = vsub.s32 %v951, 127
    %v953 = vand.u32 2147483647, %v195
    %v954 = vand.u32 %v953, 8388607
    %v955 = vor.u32 %v954, 8388608
    %v956 = vsub.s32 0, %v955
    %v957 = vadd.s32 %v952, 1
    %vm958 = vcmp.gt.s32.totalorder %v957, 0
    %v959 = vsel %vm958, %v957, 0
    %v960 = vshrl.u32 %v959, 5
    %v961 = vand.u32 %v959, 31
    %v962 = vsub.s32 32, %v961
    %v963 = vshrl.u32 683565275, %v962
    %v964 = vshll.u32 683565275, %v961
    %v965 = vshrl.u32 2475754826, %v962
    %v966 = vor.u32 %v964, %v965
    %v967 = vshll.u32 2475754826, %v961
    %v968 = vshrl.u32 2131351028, %v962
    %v969 = vor.u32 %v967, %v968
    %v970 = vshll.u32 2131351028, %v961
    %v971 = vshrl.u32 2102212464, %v962
    %v972 = vor.u32 %v970, %v971
    %v973 = vshll.u32 2102212464, %v961
    %v974 = vshrl.u32 920167782, %v962
    %v975 = vor.u32 %v973, %v974
    %v976 = vshll.u32 920167782, %v961
    %v977 = vshrl.u32 1326507024, %v962
    %v978 = vor.u32 %v976, %v977
    %vm979 = vcmp.lt.s32.totalorder %v960, 1
    %vm980 = vcmp.lt.s32.totalorder %v960, 2
    %vm981 = vcmp.lt.s32.totalorder %v960, 3
    %vm982 = vcmp.lt.s32.totalorder %v960, 4
    %v983 = vsel %vm979, %v963, %v966
    %v984 = vsel %vm982, %v972, 2102212464
    %v985 = vsel %vm981, %v969, %v984
    %v986 = vsel %vm980, %v983, %v985
    %v987 = vsel %vm979, %v966, %v969
    %v988 = vsel %vm982, %v975, 920167782
    %v989 = vsel %vm981, %v972, %v988
    %v990 = vsel %vm980, %v987, %v989
    %v991 = vsel %vm979, %v969, %v972
    %v992 = vsel %vm982, %v978, 1326507024
    %v993 = vsel %vm981, %v975, %v992
    %v994 = vsel %vm980, %v991, %v993
    %v995 = vshll.u32 %v955, 8
    %v996 = vmul.u32.u64.compose %v995, %v994
    %v997 = vextract.low.u32 %v996
    %v998 = vextract.high.u32 %v996
    %v999 = vmul.u32.u64.compose %v995, %v990
    %v1000 = vextract.low.u32 %v999
    %v1001 = vextract.high.u32 %v999
    %v1002 = vmul.u32 %v995, %v986
    %v1003 = vadd.s32 %v998, %v1000
    %vm1004 = vc.u32 %v998, %v1000
    %v1005 = vadd.s32 %v1001, 1
    %v1006 = vsel %vm1004, %v1005, %v1001
    %v1007 = vadd.s32 %v1002, %v1006
    %v1008 = vadd.s32 %v1007, 536870912
    %v1009 = vshrl.u32 %v1008, 30
    %v1010 = vshll.u32 %v1009, 30
    %v1011 = vsub.s32 %v1007, %v1010
    %vm1012 = vcmp.lt.s32.totalorder %v1011, 0
    %v1013 = vsub.s32 0, %v1011
    %v1014 = vsel %vm1012, %v1013, %v1011
    %v1015 = vclz %v1014
    %v1016 = vsub.s32 %v1015, 2
    %vm1017 = vcmp.gt.s32.totalorder 0, %v1016
    %v1018 = vsel %vm1017, 0, %v1016
    %v1019 = vsub.s32 32, %v1018
    %v1020 = vshll.u32 %v1011, %v1018
    %v1021 = vshrl.u32 %v1003, %v1019
    %v1022 = vor.u32 %v1020, %v1021
    %v1023 = vsub.s32 4294967266, %v1018
    %v1024 = vadd.s32 %v1023, 127
    %v1025 = vshll.u32 %v1024, 23
    %v1026 = vor.u32 4788187, %v1025
    %v1027 = vand.u32 2147483647, %v1026
    %v1029 = vcvt.s32.f32 %v1022
    %v1030 = vmul.f32 %v1029, %v1027
    %v1031 = vxor.u32 %v1030, 2147483648
    %v1032 = vsel %vm949, %v1031, %v1030
    %v1033 = vsub.s32 4, %v1009
    %v1034 = vsel %vm949, %v1033, %v1009
    %v1035 = vsel %vm948, %v195, %v1032
    %v1036 = vsel %vm948, 0, %v1034
    %v1037 = vcosq.f32.pop %v1035
    %v1038 = vsinq.f32.pop %v1035
    %vm1039 = vweird.f32 %v195
    %v1040 = vadd.s32 %v1036, 3
    %v1041 = vand.u32 %v1040, 3
    %vm1042 = vcmp.lt.s32.totalorder %v1041, 2
    %vm1043 = vcmp.eq.s32.totalorder %v1041, 0
    %v1044 = vxor.u32 %v1038, 2147483648
    %v1045 = vsel %vm1043, %v1037, %v1044
    %vm1046 = vcmp.eq.s32.totalorder %v1041, 2
    %v1047 = vxor.u32 %v1037, 2147483648
    %v1048 = vsel %vm1046, %v1047, %v1038
    %v1049 = vsel %vm1042, %v1045, %v1048
    %v1050 = vsel %vm1039, nan, %v1049
    %v1051 = vand.u32 2147483647, %v200
    %vm1052 = vcmp.le.f32.partialorder %v1051, 0.7853982
    %vm1053 = vcmp.lt.s32.totalorder %v200, 0
    %v1054 = vand.u32 %v200, 2139095040
    %v1055 = vshrl.u32 %v1054, 23
    %v1056 = vsub.s32 %v1055, 127
    %v1057 = vand.u32 2147483647, %v200
    %v1058 = vand.u32 %v1057, 8388607
    %v1059 = vor.u32 %v1058, 8388608
    %v1060 = vsub.s32 0, %v1059
    %v1061 = vadd.s32 %v1056, 1
    %vm1062 = vcmp.gt.s32.totalorder %v1061, 0
    %v1063 = vsel %vm1062, %v1061, 0
    %v1064 = vshrl.u32 %v1063, 5
    %v1065 = vand.u32 %v1063, 31
    %v1066 = vsub.s32 32, %v1065
    %v1067 = vshrl.u32 683565275, %v1066
    %v1068 = vshll.u32 683565275, %v1065
    %v1069 = vshrl.u32 2475754826, %v1066
    %v1070 = vor.u32 %v1068, %v1069
    %v1071 = vshll.u32 2475754826, %v1065
    %v1072 = vshrl.u32 2131351028, %v1066
    %v1073 = vor.u32 %v1071, %v1072
    %v1074 = vshll.u32 2131351028, %v1065
    %v1075 = vshrl.u32 2102212464, %v1066
    %v1076 = vor.u32 %v1074, %v1075
    %v1077 = vshll.u32 2102212464, %v1065
    %v1078 = vshrl.u32 920167782, %v1066
    %v1079 = vor.u32 %v1077, %v1078
    %v1080 = vshll.u32 920167782, %v1065
    %v1081 = vshrl.u32 1326507024, %v1066
    %v1082 = vor.u32 %v1080, %v1081
    %vm1083 = vcmp.lt.s32.totalorder %v1064, 1
    %vm1084 = vcmp.lt.s32.totalorder %v1064, 2
    %vm1085 = vcmp.lt.s32.totalorder %v1064, 3
    %vm1086 = vcmp.lt.s32.totalorder %v1064, 4
    %v1087 = vsel %vm1083, %v1067, %v1070
    %v1088 = vsel %vm1086, %v1076, 2102212464
    %v1089 = vsel %vm1085, %v1073, %v1088
    %v1090 = vsel %vm1084, %v1087, %v1089
    %v1091 = vsel %vm1083, %v1070, %v1073
    %v1092 = vsel %vm1086, %v1079, 920167782
    %v1093 = vsel %vm1085, %v1076, %v1092
    %v1094 = vsel %vm1084, %v1091, %v1093
    %v1095 = vsel %vm1083, %v1073, %v1076
    %v1096 = vsel %vm1086, %v1082, 1326507024
    %v1097 = vsel %vm1085, %v1079, %v1096
    %v1098 = vsel %vm1084, %v1095, %v1097
    %v1099 = vshll.u32 %v1059, 8
    %v1100 = vmul.u32.u64.compose %v1099, %v1098
    %v1101 = vextract.low.u32 %v1100
    %v1102 = vextract.high.u32 %v1100
    %v1103 = vmul.u32.u64.compose %v1099, %v1094
    %v1104 = vextract.low.u32 %v1103
    %v1105 = vextract.high.u32 %v1103
    %v1106 = vmul.u32 %v1099, %v1090
    %v1107 = vadd.s32 %v1102, %v1104
    %vm1108 = vc.u32 %v1102, %v1104
    %v1109 = vadd.s32 %v1105, 1
    %v1110 = vsel %vm1108, %v1109, %v1105
    %v1111 = vadd.s32 %v1106, %v1110
    %v1112 = vadd.s32 %v1111, 536870912
    %v1113 = vshrl.u32 %v1112, 30
    %v1114 = vshll.u32 %v1113, 30
    %v1115 = vsub.s32 %v1111, %v1114
    %vm1116 = vcmp.lt.s32.totalorder %v1115, 0
    %v1117 = vsub.s32 0, %v1115
    %v1118 = vsel %vm1116, %v1117, %v1115
    %v1119 = vclz %v1118
    %v1120 = vsub.s32 %v1119, 2
    %vm1121 = vcmp.gt.s32.totalorder 0, %v1120
    %v1122 = vsel %vm1121, 0, %v1120
    %v1123 = vsub.s32 32, %v1122
    %v1124 = vshll.u32 %v1115, %v1122
    %v1125 = vshrl.u32 %v1107, %v1123
    %v1126 = vor.u32 %v1124, %v1125
    %v1127 = vsub.s32 4294967266, %v1122
    %v1128 = vadd.s32 %v1127, 127
    %v1129 = vshll.u32 %v1128, 23
    %v1130 = vor.u32 4788187, %v1129
    %v1131 = vand.u32 2147483647, %v1130
    %v1133 = vcvt.s32.f32 %v1126
    %v1134 = vmul.f32 %v1133, %v1131
    %v1135 = vxor.u32 %v1134, 2147483648
    %v1136 = vsel %vm1053, %v1135, %v1134
    %v1137 = vsub.s32 4, %v1113
    %v1138 = vsel %vm1053, %v1137, %v1113
    %v1139 = vsel %vm1052, %v200, %v1136
    %v1140 = vsel %vm1052, 0, %v1138
    %v1141 = vcosq.f32.pop %v1139
    %v1142 = vsinq.f32.pop %v1139
    %vm1143 = vweird.f32 %v200
    %v1144 = vadd.s32 %v1140, 3
    %v1145 = vand.u32 %v1144, 3
    %vm1146 = vcmp.lt.s32.totalorder %v1145, 2
    %vm1147 = vcmp.eq.s32.totalorder %v1145, 0
    %v1148 = vxor.u32 %v1142, 2147483648
    %v1149 = vsel %vm1147, %v1141, %v1148
    %vm1150 = vcmp.eq.s32.totalorder %v1145, 2
    %v1151 = vxor.u32 %v1141, 2147483648
    %v1152 = vsel %vm1150, %v1151, %v1142
    %v1153 = vsel %vm1146, %v1149, %v1152
    %v1154 = vsel %vm1143, nan, %v1153
    %v1155 = vand.u32 2147483647, %v205
    %vm1156 = vcmp.le.f32.partialorder %v1155, 0.7853982
    %vm1157 = vcmp.lt.s32.totalorder %v205, 0
    %v1158 = vand.u32 %v205, 2139095040
    %v1159 = vshrl.u32 %v1158, 23
    %v1160 = vsub.s32 %v1159, 127
    %v1161 = vand.u32 2147483647, %v205
    %v1162 = vand.u32 %v1161, 8388607
    %v1163 = vor.u32 %v1162, 8388608
    %v1164 = vsub.s32 0, %v1163
    %v1165 = vadd.s32 %v1160, 1
    %vm1166 = vcmp.gt.s32.totalorder %v1165, 0
    %v1167 = vsel %vm1166, %v1165, 0
    %v1168 = vshrl.u32 %v1167, 5
    %v1169 = vand.u32 %v1167, 31
    %v1170 = vsub.s32 32, %v1169
    %v1171 = vshrl.u32 683565275, %v1170
    %v1172 = vshll.u32 683565275, %v1169
    %v1173 = vshrl.u32 2475754826, %v1170
    %v1174 = vor.u32 %v1172, %v1173
    %v1175 = vshll.u32 2475754826, %v1169
    %v1176 = vshrl.u32 2131351028, %v1170
    %v1177 = vor.u32 %v1175, %v1176
    %v1178 = vshll.u32 2131351028, %v1169
    %v1179 = vshrl.u32 2102212464, %v1170
    %v1180 = vor.u32 %v1178, %v1179
    %v1181 = vshll.u32 2102212464, %v1169
    %v1182 = vshrl.u32 920167782, %v1170
    %v1183 = vor.u32 %v1181, %v1182
    %v1184 = vshll.u32 920167782, %v1169
    %v1185 = vshrl.u32 1326507024, %v1170
    %v1186 = vor.u32 %v1184, %v1185
    %vm1187 = vcmp.lt.s32.totalorder %v1168, 1
    %vm1188 = vcmp.lt.s32.totalorder %v1168, 2
    %vm1189 = vcmp.lt.s32.totalorder %v1168, 3
    %vm1190 = vcmp.lt.s32.totalorder %v1168, 4
    %v1191 = vsel %vm1187, %v1171, %v1174
    %v1192 = vsel %vm1190, %v1180, 2102212464
    %v1193 = vsel %vm1189, %v1177, %v1192
    %v1194 = vsel %vm1188, %v1191, %v1193
    %v1195 = vsel %vm1187, %v1174, %v1177
    %v1196 = vsel %vm1190, %v1183, 920167782
    %v1197 = vsel %vm1189, %v1180, %v1196
    %v1198 = vsel %vm1188, %v1195, %v1197
    %v1199 = vsel %vm1187, %v1177, %v1180
    %v1200 = vsel %vm1190, %v1186, 1326507024
    %v1201 = vsel %vm1189, %v1183, %v1200
    %v1202 = vsel %vm1188, %v1199, %v1201
    %v1203 = vshll.u32 %v1163, 8
    %v1204 = vmul.u32.u64.compose %v1203, %v1202
    %v1205 = vextract.low.u32 %v1204
    %v1206 = vextract.high.u32 %v1204
    %v1207 = vmul.u32.u64.compose %v1203, %v1198
    %v1208 = vextract.low.u32 %v1207
    %v1209 = vextract.high.u32 %v1207
    %v1210 = vmul.u32 %v1203, %v1194
    %v1211 = vadd.s32 %v1206, %v1208
    %vm1212 = vc.u32 %v1206, %v1208
    %v1213 = vadd.s32 %v1209, 1
    %v1214 = vsel %vm1212, %v1213, %v1209
    %v1215 = vadd.s32 %v1210, %v1214
    %v1216 = vadd.s32 %v1215, 536870912
    %v1217 = vshrl.u32 %v1216, 30
    %v1218 = vshll.u32 %v1217, 30
    %v1219 = vsub.s32 %v1215, %v1218
    %vm1220 = vcmp.lt.s32.totalorder %v1219, 0
    %v1221 = vsub.s32 0, %v1219
    %v1222 = vsel %vm1220, %v1221, %v1219
    %v1223 = vclz %v1222
    %v1224 = vsub.s32 %v1223, 2
    %vm1225 = vcmp.gt.s32.totalorder 0, %v1224
    %v1226 = vsel %vm1225, 0, %v1224
    %v1227 = vsub.s32 32, %v1226
    %v1228 = vshll.u32 %v1219, %v1226
    %v1229 = vshrl.u32 %v1211, %v1227
    %v1230 = vor.u32 %v1228, %v1229
    %v1231 = vsub.s32 4294967266, %v1226
    %v1232 = vadd.s32 %v1231, 127
    %v1233 = vshll.u32 %v1232, 23
    %v1234 = vor.u32 4788187, %v1233
    %v1235 = vand.u32 2147483647, %v1234
    %v1237 = vcvt.s32.f32 %v1230
    %v1238 = vmul.f32 %v1237, %v1235
    %v1239 = vxor.u32 %v1238, 2147483648
    %v1240 = vsel %vm1157, %v1239, %v1238
    %v1241 = vsub.s32 4, %v1217
    %v1242 = vsel %vm1157, %v1241, %v1217
    %v1243 = vsel %vm1156, %v205, %v1240
    %v1244 = vsel %vm1156, 0, %v1242
    %v1245 = vcosq.f32.pop %v1243
    %v1246 = vsinq.f32.pop %v1243
    %vm1247 = vweird.f32 %v205
    %v1248 = vadd.s32 %v1244, 3
    %v1249 = vand.u32 %v1248, 3
    %vm1250 = vcmp.lt.s32.totalorder %v1249, 2
    %vm1251 = vcmp.eq.s32.totalorder %v1249, 0
    %v1252 = vxor.u32 %v1246, 2147483648
    %v1253 = vsel %vm1251, %v1245, %v1252
    %vm1254 = vcmp.eq.s32.totalorder %v1249, 2
    %v1255 = vxor.u32 %v1245, 2147483648
    %v1256 = vsel %vm1254, %v1255, %v1246
    %v1257 = vsel %vm1250, %v1253, %v1256
    %v1258 = vsel %vm1247, nan, %v1257
    %v1259 = vand.u32 2147483647, %v210
    %vm1260 = vcmp.le.f32.partialorder %v1259, 0.7853982
    %vm1261 = vcmp.lt.s32.totalorder %v210, 0
    %v1262 = vand.u32 %v210, 2139095040
    %v1263 = vshrl.u32 %v1262, 23
    %v1264 = vsub.s32 %v1263, 127
    %v1265 = vand.u32 2147483647, %v210
    %v1266 = vand.u32 %v1265, 8388607
    %v1267 = vor.u32 %v1266, 8388608
    %v1268 = vsub.s32 0, %v1267
    %v1269 = vadd.s32 %v1264, 1
    %vm1270 = vcmp.gt.s32.totalorder %v1269, 0
    %v1271 = vsel %vm1270, %v1269, 0
    %v1272 = vshrl.u32 %v1271, 5
    %v1273 = vand.u32 %v1271, 31
    %v1274 = vsub.s32 32, %v1273
    %v1275 = vshrl.u32 683565275, %v1274
    %v1276 = vshll.u32 683565275, %v1273
    %v1277 = vshrl.u32 2475754826, %v1274
    %v1278 = vor.u32 %v1276, %v1277
    %v1279 = vshll.u32 2475754826, %v1273
    %v1280 = vshrl.u32 2131351028, %v1274
    %v1281 = vor.u32 %v1279, %v1280
    %v1282 = vshll.u32 2131351028, %v1273
    %v1283 = vshrl.u32 2102212464, %v1274
    %v1284 = vor.u32 %v1282, %v1283
    %v1285 = vshll.u32 2102212464, %v1273
    %v1286 = vshrl.u32 920167782, %v1274
    %v1287 = vor.u32 %v1285, %v1286
    %v1288 = vshll.u32 920167782, %v1273
    %v1289 = vshrl.u32 1326507024, %v1274
    %v1290 = vor.u32 %v1288, %v1289
    %vm1291 = vcmp.lt.s32.totalorder %v1272, 1
    %vm1292 = vcmp.lt.s32.totalorder %v1272, 2
    %vm1293 = vcmp.lt.s32.totalorder %v1272, 3
    %vm1294 = vcmp.lt.s32.totalorder %v1272, 4
    %v1295 = vsel %vm1291, %v1275, %v1278
    %v1296 = vsel %vm1294, %v1284, 2102212464
    %v1297 = vsel %vm1293, %v1281, %v1296
    %v1298 = vsel %vm1292, %v1295, %v1297
    %v1299 = vsel %vm1291, %v1278, %v1281
    %v1300 = vsel %vm1294, %v1287, 920167782
    %v1301 = vsel %vm1293, %v1284, %v1300
    %v1302 = vsel %vm1292, %v1299, %v1301
    %v1303 = vsel %vm1291, %v1281, %v1284
    %v1304 = vsel %vm1294, %v1290, 1326507024
    %v1305 = vsel %vm1293, %v1287, %v1304
    %v1306 = vsel %vm1292, %v1303, %v1305
    %v1307 = vshll.u32 %v1267, 8
    %v1308 = vmul.u32.u64.compose %v1307, %v1306
    %v1309 = vextract.low.u32 %v1308
    %v1310 = vextract.high.u32 %v1308
    %v1311 = vmul.u32.u64.compose %v1307, %v1302
    %v1312 = vextract.low.u32 %v1311
    %v1313 = vextract.high.u32 %v1311
    %v1314 = vmul.u32 %v1307, %v1298
    %v1315 = vadd.s32 %v1310, %v1312
    %vm1316 = vc.u32 %v1310, %v1312
    %v1317 = vadd.s32 %v1313, 1
    %v1318 = vsel %vm1316, %v1317, %v1313
    %v1319 = vadd.s32 %v1314, %v1318
    %v1320 = vadd.s32 %v1319, 536870912
    %v1321 = vshrl.u32 %v1320, 30
    %v1322 = vshll.u32 %v1321, 30
    %v1323 = vsub.s32 %v1319, %v1322
    %vm1324 = vcmp.lt.s32.totalorder %v1323, 0
    %v1325 = vsub.s32 0, %v1323
    %v1326 = vsel %vm1324, %v1325, %v1323
    %v1327 = vclz %v1326
    %v1328 = vsub.s32 %v1327, 2
    %vm1329 = vcmp.gt.s32.totalorder 0, %v1328
    %v1330 = vsel %vm1329, 0, %v1328
    %v1331 = vsub.s32 32, %v1330
    %v1332 = vshll.u32 %v1323, %v1330
    %v1333 = vshrl.u32 %v1315, %v1331
    %v1334 = vor.u32 %v1332, %v1333
    %v1335 = vsub.s32 4294967266, %v1330
    %v1336 = vadd.s32 %v1335, 127
    %v1337 = vshll.u32 %v1336, 23
    %v1338 = vor.u32 4788187, %v1337
    %v1339 = vand.u32 2147483647, %v1338
    %v1341 = vcvt.s32.f32 %v1334
    %v1342 = vmul.f32 %v1341, %v1339
    %v1343 = vxor.u32 %v1342, 2147483648
    %v1344 = vsel %vm1261, %v1343, %v1342
    %v1345 = vsub.s32 4, %v1321
    %v1346 = vsel %vm1261, %v1345, %v1321
    %v1347 = vsel %vm1260, %v210, %v1344
    %v1348 = vsel %vm1260, 0, %v1346
    %v1349 = vcosq.f32.pop %v1347
    %v1350 = vsinq.f32.pop %v1347
    %vm1351 = vweird.f32 %v210
    %v1352 = vadd.s32 %v1348, 3
    %v1353 = vand.u32 %v1352, 3
    %vm1354 = vcmp.lt.s32.totalorder %v1353, 2
    %vm1355 = vcmp.eq.s32.totalorder %v1353, 0
    %v1356 = vxor.u32 %v1350, 2147483648
    %v1357 = vsel %vm1355, %v1349, %v1356
    %vm1358 = vcmp.eq.s32.totalorder %v1353, 2
    %v1359 = vxor.u32 %v1349, 2147483648
    %v1360 = vsel %vm1358, %v1359, %v1350
    %v1361 = vsel %vm1354, %v1357, %v1360
    %v1362 = vsel %vm1351, nan, %v1361
    %v1363 = vand.u32 2147483647, %v215
    %vm1364 = vcmp.le.f32.partialorder %v1363, 0.7853982
    %vm1365 = vcmp.lt.s32.totalorder %v215, 0
    %v1366 = vand.u32 %v215, 2139095040
    %v1367 = vshrl.u32 %v1366, 23
    %v1368 = vsub.s32 %v1367, 127
    %v1369 = vand.u32 2147483647, %v215
    %v1370 = vand.u32 %v1369, 8388607
    %v1371 = vor.u32 %v1370, 8388608
    %v1372 = vsub.s32 0, %v1371
    %v1373 = vadd.s32 %v1368, 1
    %vm1374 = vcmp.gt.s32.totalorder %v1373, 0
    %v1375 = vsel %vm1374, %v1373, 0
    %v1376 = vshrl.u32 %v1375, 5
    %v1377 = vand.u32 %v1375, 31
    %v1378 = vsub.s32 32, %v1377
    %v1379 = vshrl.u32 683565275, %v1378
    %v1380 = vshll.u32 683565275, %v1377
    %v1381 = vshrl.u32 2475754826, %v1378
    %v1382 = vor.u32 %v1380, %v1381
    %v1383 = vshll.u32 2475754826, %v1377
    %v1384 = vshrl.u32 2131351028, %v1378
    %v1385 = vor.u32 %v1383, %v1384
    %v1386 = vshll.u32 2131351028, %v1377
    %v1387 = vshrl.u32 2102212464, %v1378
    %v1388 = vor.u32 %v1386, %v1387
    %v1389 = vshll.u32 2102212464, %v1377
    %v1390 = vshrl.u32 920167782, %v1378
    %v1391 = vor.u32 %v1389, %v1390
    %v1392 = vshll.u32 920167782, %v1377
    %v1393 = vshrl.u32 1326507024, %v1378
    %v1394 = vor.u32 %v1392, %v1393
    %vm1395 = vcmp.lt.s32.totalorder %v1376, 1
    %vm1396 = vcmp.lt.s32.totalorder %v1376, 2
    %vm1397 = vcmp.lt.s32.totalorder %v1376, 3
    %vm1398 = vcmp.lt.s32.totalorder %v1376, 4
    %v1399 = vsel %vm1395, %v1379, %v1382
    %v1400 = vsel %vm1398, %v1388, 2102212464
    %v1401 = vsel %vm1397, %v1385, %v1400
    %v1402 = vsel %vm1396, %v1399, %v1401
    %v1403 = vsel %vm1395, %v1382, %v1385
    %v1404 = vsel %vm1398, %v1391, 920167782
    %v1405 = vsel %vm1397, %v1388, %v1404
    %v1406 = vsel %vm1396, %v1403, %v1405
    %v1407 = vsel %vm1395, %v1385, %v1388
    %v1408 = vsel %vm1398, %v1394, 1326507024
    %v1409 = vsel %vm1397, %v1391, %v1408
    %v1410 = vsel %vm1396, %v1407, %v1409
    %v1411 = vshll.u32 %v1371, 8
    %v1412 = vmul.u32.u64.compose %v1411, %v1410
    %v1413 = vextract.low.u32 %v1412
    %v1414 = vextract.high.u32 %v1412
    %v1415 = vmul.u32.u64.compose %v1411, %v1406
    %v1416 = vextract.low.u32 %v1415
    %v1417 = vextract.high.u32 %v1415
    %v1418 = vmul.u32 %v1411, %v1402
    %v1419 = vadd.s32 %v1414, %v1416
    %vm1420 = vc.u32 %v1414, %v1416
    %v1421 = vadd.s32 %v1417, 1
    %v1422 = vsel %vm1420, %v1421, %v1417
    %v1423 = vadd.s32 %v1418, %v1422
    %v1424 = vadd.s32 %v1423, 536870912
    %v1425 = vshrl.u32 %v1424, 30
    %v1426 = vshll.u32 %v1425, 30
    %v1427 = vsub.s32 %v1423, %v1426
    %vm1428 = vcmp.lt.s32.totalorder %v1427, 0
    %v1429 = vsub.s32 0, %v1427
    %v1430 = vsel %vm1428, %v1429, %v1427
    %v1431 = vclz %v1430
    %v1432 = vsub.s32 %v1431, 2
    %vm1433 = vcmp.gt.s32.totalorder 0, %v1432
    %v1434 = vsel %vm1433, 0, %v1432
    %v1435 = vsub.s32 32, %v1434
    %v1436 = vshll.u32 %v1427, %v1434
    %v1437 = vshrl.u32 %v1419, %v1435
    %v1438 = vor.u32 %v1436, %v1437
    %v1439 = vsub.s32 4294967266, %v1434
    %v1440 = vadd.s32 %v1439, 127
    %v1441 = vshll.u32 %v1440, 23
    %v1442 = vor.u32 4788187, %v1441
    %v1443 = vand.u32 2147483647, %v1442
    %v1445 = vcvt.s32.f32 %v1438
    %v1446 = vmul.f32 %v1445, %v1443
    %v1447 = vxor.u32 %v1446, 2147483648
    %v1448 = vsel %vm1365, %v1447, %v1446
    %v1449 = vsub.s32 4, %v1425
    %v1450 = vsel %vm1365, %v1449, %v1425
    %v1451 = vsel %vm1364, %v215, %v1448
    %v1452 = vsel %vm1364, 0, %v1450
    %v1453 = vcosq.f32.pop %v1451
    %v1454 = vsinq.f32.pop %v1451
    %vm1455 = vweird.f32 %v215
    %v1456 = vadd.s32 %v1452, 3
    %v1457 = vand.u32 %v1456, 3
    %vm1458 = vcmp.lt.s32.totalorder %v1457, 2
    %vm1459 = vcmp.eq.s32.totalorder %v1457, 0
    %v1460 = vxor.u32 %v1454, 2147483648
    %v1461 = vsel %vm1459, %v1453, %v1460
    %vm1462 = vcmp.eq.s32.totalorder %v1457, 2
    %v1463 = vxor.u32 %v1453, 2147483648
    %v1464 = vsel %vm1462, %v1463, %v1454
    %v1465 = vsel %vm1458, %v1461, %v1464
    %v1466 = vsel %vm1455, nan, %v1465
    %v1467 = vand.u32 2147483647, %v220
    %vm1468 = vcmp.le.f32.partialorder %v1467, 0.7853982
    %vm1469 = vcmp.lt.s32.totalorder %v220, 0
    %v1470 = vand.u32 %v220, 2139095040
    %v1471 = vshrl.u32 %v1470, 23
    %v1472 = vsub.s32 %v1471, 127
    %v1473 = vand.u32 2147483647, %v220
    %v1474 = vand.u32 %v1473, 8388607
    %v1475 = vor.u32 %v1474, 8388608
    %v1476 = vsub.s32 0, %v1475
    %v1477 = vadd.s32 %v1472, 1
    %vm1478 = vcmp.gt.s32.totalorder %v1477, 0
    %v1479 = vsel %vm1478, %v1477, 0
    %v1480 = vshrl.u32 %v1479, 5
    %v1481 = vand.u32 %v1479, 31
    %v1482 = vsub.s32 32, %v1481
    %v1483 = vshrl.u32 683565275, %v1482
    %v1484 = vshll.u32 683565275, %v1481
    %v1485 = vshrl.u32 2475754826, %v1482
    %v1486 = vor.u32 %v1484, %v1485
    %v1487 = vshll.u32 2475754826, %v1481
    %v1488 = vshrl.u32 2131351028, %v1482
    %v1489 = vor.u32 %v1487, %v1488
    %v1490 = vshll.u32 2131351028, %v1481
    %v1491 = vshrl.u32 2102212464, %v1482
    %v1492 = vor.u32 %v1490, %v1491
    %v1493 = vshll.u32 2102212464, %v1481
    %v1494 = vshrl.u32 920167782, %v1482
    %v1495 = vor.u32 %v1493, %v1494
    %v1496 = vshll.u32 920167782, %v1481
    %v1497 = vshrl.u32 1326507024, %v1482
    %v1498 = vor.u32 %v1496, %v1497
    %vm1499 = vcmp.lt.s32.totalorder %v1480, 1
    %vm1500 = vcmp.lt.s32.totalorder %v1480, 2
    %vm1501 = vcmp.lt.s32.totalorder %v1480, 3
    %vm1502 = vcmp.lt.s32.totalorder %v1480, 4
    %v1503 = vsel %vm1499, %v1483, %v1486
    %v1504 = vsel %vm1502, %v1492, 2102212464
    %v1505 = vsel %vm1501, %v1489, %v1504
    %v1506 = vsel %vm1500, %v1503, %v1505
    %v1507 = vsel %vm1499, %v1486, %v1489
    %v1508 = vsel %vm1502, %v1495, 920167782
    %v1509 = vsel %vm1501, %v1492, %v1508
    %v1510 = vsel %vm1500, %v1507, %v1509
    %v1511 = vsel %vm1499, %v1489, %v1492
    %v1512 = vsel %vm1502, %v1498, 1326507024
    %v1513 = vsel %vm1501, %v1495, %v1512
    %v1514 = vsel %vm1500, %v1511, %v1513
    %v1515 = vshll.u32 %v1475, 8
    %v1516 = vmul.u32.u64.compose %v1515, %v1514
    %v1517 = vextract.low.u32 %v1516
    %v1518 = vextract.high.u32 %v1516
    %v1519 = vmul.u32.u64.compose %v1515, %v1510
    %v1520 = vextract.low.u32 %v1519
    %v1521 = vextract.high.u32 %v1519
    %v1522 = vmul.u32 %v1515, %v1506
    %v1523 = vadd.s32 %v1518, %v1520
    %vm1524 = vc.u32 %v1518, %v1520
    %v1525 = vadd.s32 %v1521, 1
    %v1526 = vsel %vm1524, %v1525, %v1521
    %v1527 = vadd.s32 %v1522, %v1526
    %v1528 = vadd.s32 %v1527, 536870912
    %v1529 = vshrl.u32 %v1528, 30
    %v1530 = vshll.u32 %v1529, 30
    %v1531 = vsub.s32 %v1527, %v1530
    %vm1532 = vcmp.lt.s32.totalorder %v1531, 0
    %v1533 = vsub.s32 0, %v1531
    %v1534 = vsel %vm1532, %v1533, %v1531
    %v1535 = vclz %v1534
    %v1536 = vsub.s32 %v1535, 2
    %vm1537 = vcmp.gt.s32.totalorder 0, %v1536
    %v1538 = vsel %vm1537, 0, %v1536
    %v1539 = vsub.s32 32, %v1538
    %v1540 = vshll.u32 %v1531, %v1538
    %v1541 = vshrl.u32 %v1523, %v1539
    %v1542 = vor.u32 %v1540, %v1541
    %v1543 = vsub.s32 4294967266, %v1538
    %v1544 = vadd.s32 %v1543, 127
    %v1545 = vshll.u32 %v1544, 23
    %v1546 = vor.u32 4788187, %v1545
    %v1547 = vand.u32 2147483647, %v1546
    %v1549 = vcvt.s32.f32 %v1542
    %v1550 = vmul.f32 %v1549, %v1547
    %v1551 = vxor.u32 %v1550, 2147483648
    %v1552 = vsel %vm1469, %v1551, %v1550
    %v1553 = vsub.s32 4, %v1529
    %v1554 = vsel %vm1469, %v1553, %v1529
    %v1555 = vsel %vm1468, %v220, %v1552
    %v1556 = vsel %vm1468, 0, %v1554
    %v1557 = vcosq.f32.pop %v1555
    %v1558 = vsinq.f32.pop %v1555
    %vm1559 = vweird.f32 %v220
    %v1560 = vadd.s32 %v1556, 3
    %v1561 = vand.u32 %v1560, 3
    %vm1562 = vcmp.lt.s32.totalorder %v1561, 2
    %vm1563 = vcmp.eq.s32.totalorder %v1561, 0
    %v1564 = vxor.u32 %v1558, 2147483648
    %v1565 = vsel %vm1563, %v1557, %v1564
    %vm1566 = vcmp.eq.s32.totalorder %v1561, 2
    %v1567 = vxor.u32 %v1557, 2147483648
    %v1568 = vsel %vm1566, %v1567, %v1558
    %v1569 = vsel %vm1562, %v1565, %v1568
    %v1570 = vsel %vm1559, nan, %v1569
    %v1571 = vand.u32 2147483647, %v225
    %vm1572 = vcmp.le.f32.partialorder %v1571, 0.7853982
    %vm1573 = vcmp.lt.s32.totalorder %v225, 0
    %v1574 = vand.u32 %v225, 2139095040
    %v1575 = vshrl.u32 %v1574, 23
    %v1576 = vsub.s32 %v1575, 127
    %v1577 = vand.u32 2147483647, %v225
    %v1578 = vand.u32 %v1577, 8388607
    %v1579 = vor.u32 %v1578, 8388608
    %v1580 = vsub.s32 0, %v1579
    %v1581 = vadd.s32 %v1576, 1
    %vm1582 = vcmp.gt.s32.totalorder %v1581, 0
    %v1583 = vsel %vm1582, %v1581, 0
    %v1584 = vshrl.u32 %v1583, 5
    %v1585 = vand.u32 %v1583, 31
    %v1586 = vsub.s32 32, %v1585
    %v1587 = vshrl.u32 683565275, %v1586
    %v1588 = vshll.u32 683565275, %v1585
    %v1589 = vshrl.u32 2475754826, %v1586
    %v1590 = vor.u32 %v1588, %v1589
    %v1591 = vshll.u32 2475754826, %v1585
    %v1592 = vshrl.u32 2131351028, %v1586
    %v1593 = vor.u32 %v1591, %v1592
    %v1594 = vshll.u32 2131351028, %v1585
    %v1595 = vshrl.u32 2102212464, %v1586
    %v1596 = vor.u32 %v1594, %v1595
    %v1597 = vshll.u32 2102212464, %v1585
    %v1598 = vshrl.u32 920167782, %v1586
    %v1599 = vor.u32 %v1597, %v1598
    %v1600 = vshll.u32 920167782, %v1585
    %v1601 = vshrl.u32 1326507024, %v1586
    %v1602 = vor.u32 %v1600, %v1601
    %vm1603 = vcmp.lt.s32.totalorder %v1584, 1
    %vm1604 = vcmp.lt.s32.totalorder %v1584, 2
    %vm1605 = vcmp.lt.s32.totalorder %v1584, 3
    %vm1606 = vcmp.lt.s32.totalorder %v1584, 4
    %v1607 = vsel %vm1603, %v1587, %v1590
    %v1608 = vsel %vm1606, %v1596, 2102212464
    %v1609 = vsel %vm1605, %v1593, %v1608
    %v1610 = vsel %vm1604, %v1607, %v1609
    %v1611 = vsel %vm1603, %v1590, %v1593
    %v1612 = vsel %vm1606, %v1599, 920167782
    %v1613 = vsel %vm1605, %v1596, %v1612
    %v1614 = vsel %vm1604, %v1611, %v1613
    %v1615 = vsel %vm1603, %v1593, %v1596
    %v1616 = vsel %vm1606, %v1602, 1326507024
    %v1617 = vsel %vm1605, %v1599, %v1616
    %v1618 = vsel %vm1604, %v1615, %v1617
    %v1619 = vshll.u32 %v1579, 8
    %v1620 = vmul.u32.u64.compose %v1619, %v1618
    %v1621 = vextract.low.u32 %v1620
    %v1622 = vextract.high.u32 %v1620
    %v1623 = vmul.u32.u64.compose %v1619, %v1614
    %v1624 = vextract.low.u32 %v1623
    %v1625 = vextract.high.u32 %v1623
    %v1626 = vmul.u32 %v1619, %v1610
    %v1627 = vadd.s32 %v1622, %v1624
    %vm1628 = vc.u32 %v1622, %v1624
    %v1629 = vadd.s32 %v1625, 1
    %v1630 = vsel %vm1628, %v1629, %v1625
    %v1631 = vadd.s32 %v1626, %v1630
    %v1632 = vadd.s32 %v1631, 536870912
    %v1633 = vshrl.u32 %v1632, 30
    %v1634 = vshll.u32 %v1633, 30
    %v1635 = vsub.s32 %v1631, %v1634
    %vm1636 = vcmp.lt.s32.totalorder %v1635, 0
    %v1637 = vsub.s32 0, %v1635
    %v1638 = vsel %vm1636, %v1637, %v1635
    %v1639 = vclz %v1638
    %v1640 = vsub.s32 %v1639, 2
    %vm1641 = vcmp.gt.s32.totalorder 0, %v1640
    %v1642 = vsel %vm1641, 0, %v1640
    %v1643 = vsub.s32 32, %v1642
    %v1644 = vshll.u32 %v1635, %v1642
    %v1645 = vshrl.u32 %v1627, %v1643
    %v1646 = vor.u32 %v1644, %v1645
    %v1647 = vsub.s32 4294967266, %v1642
    %v1648 = vadd.s32 %v1647, 127
    %v1649 = vshll.u32 %v1648, 23
    %v1650 = vor.u32 4788187, %v1649
    %v1651 = vand.u32 2147483647, %v1650
    %v1653 = vcvt.s32.f32 %v1646
    %v1654 = vmul.f32 %v1653, %v1651
    %v1655 = vxor.u32 %v1654, 2147483648
    %v1656 = vsel %vm1573, %v1655, %v1654
    %v1657 = vsub.s32 4, %v1633
    %v1658 = vsel %vm1573, %v1657, %v1633
    %v1659 = vsel %vm1572, %v225, %v1656
    %v1660 = vsel %vm1572, 0, %v1658
    %v1661 = vcosq.f32.pop %v1659
    %v1662 = vsinq.f32.pop %v1659
    %vm1663 = vweird.f32 %v225
    %v1664 = vadd.s32 %v1660, 3
    %v1665 = vand.u32 %v1664, 3
    %vm1666 = vcmp.lt.s32.totalorder %v1665, 2
    %vm1667 = vcmp.eq.s32.totalorder %v1665, 0
    %v1668 = vxor.u32 %v1662, 2147483648
    %v1669 = vsel %vm1667, %v1661, %v1668
    %vm1670 = vcmp.eq.s32.totalorder %v1665, 2
    %v1671 = vxor.u32 %v1661, 2147483648
    %v1672 = vsel %vm1670, %v1671, %v1662
    %v1673 = vsel %vm1666, %v1669, %v1672
    %v1674 = vsel %vm1663, nan, %v1673
    %v1675 = vand.u32 2147483647, %v230
    %vm1676 = vcmp.le.f32.partialorder %v1675, 0.7853982
    %vm1677 = vcmp.lt.s32.totalorder %v230, 0
    %v1678 = vand.u32 %v230, 2139095040
    %v1679 = vshrl.u32 %v1678, 23
    %v1680 = vsub.s32 %v1679, 127
    %v1681 = vand.u32 2147483647, %v230
    %v1682 = vand.u32 %v1681, 8388607
    %v1683 = vor.u32 %v1682, 8388608
    %v1684 = vsub.s32 0, %v1683
    %v1685 = vadd.s32 %v1680, 1
    %vm1686 = vcmp.gt.s32.totalorder %v1685, 0
    %v1687 = vsel %vm1686, %v1685, 0
    %v1688 = vshrl.u32 %v1687, 5
    %v1689 = vand.u32 %v1687, 31
    %v1690 = vsub.s32 32, %v1689
    %v1691 = vshrl.u32 683565275, %v1690
    %v1692 = vshll.u32 683565275, %v1689
    %v1693 = vshrl.u32 2475754826, %v1690
    %v1694 = vor.u32 %v1692, %v1693
    %v1695 = vshll.u32 2475754826, %v1689
    %v1696 = vshrl.u32 2131351028, %v1690
    %v1697 = vor.u32 %v1695, %v1696
    %v1698 = vshll.u32 2131351028, %v1689
    %v1699 = vshrl.u32 2102212464, %v1690
    %v1700 = vor.u32 %v1698, %v1699
    %v1701 = vshll.u32 2102212464, %v1689
    %v1702 = vshrl.u32 920167782, %v1690
    %v1703 = vor.u32 %v1701, %v1702
    %v1704 = vshll.u32 920167782, %v1689
    %v1705 = vshrl.u32 1326507024, %v1690
    %v1706 = vor.u32 %v1704, %v1705
    %vm1707 = vcmp.lt.s32.totalorder %v1688, 1
    %vm1708 = vcmp.lt.s32.totalorder %v1688, 2
    %vm1709 = vcmp.lt.s32.totalorder %v1688, 3
    %vm1710 = vcmp.lt.s32.totalorder %v1688, 4
    %v1711 = vsel %vm1707, %v1691, %v1694
    %v1712 = vsel %vm1710, %v1700, 2102212464
    %v1713 = vsel %vm1709, %v1697, %v1712
    %v1714 = vsel %vm1708, %v1711, %v1713
    %v1715 = vsel %vm1707, %v1694, %v1697
    %v1716 = vsel %vm1710, %v1703, 920167782
    %v1717 = vsel %vm1709, %v1700, %v1716
    %v1718 = vsel %vm1708, %v1715, %v1717
    %v1719 = vsel %vm1707, %v1697, %v1700
    %v1720 = vsel %vm1710, %v1706, 1326507024
    %v1721 = vsel %vm1709, %v1703, %v1720
    %v1722 = vsel %vm1708, %v1719, %v1721
    %v1723 = vshll.u32 %v1683, 8
    %v1724 = vmul.u32.u64.compose %v1723, %v1722
    %v1725 = vextract.low.u32 %v1724
    %v1726 = vextract.high.u32 %v1724
    %v1727 = vmul.u32.u64.compose %v1723, %v1718
    %v1728 = vextract.low.u32 %v1727
    %v1729 = vextract.high.u32 %v1727
    %v1730 = vmul.u32 %v1723, %v1714
    %v1731 = vadd.s32 %v1726, %v1728
    %vm1732 = vc.u32 %v1726, %v1728
    %v1733 = vadd.s32 %v1729, 1
    %v1734 = vsel %vm1732, %v1733, %v1729
    %v1735 = vadd.s32 %v1730, %v1734
    %v1736 = vadd.s32 %v1735, 536870912
    %v1737 = vshrl.u32 %v1736, 30
    %v1738 = vshll.u32 %v1737, 30
    %v1739 = vsub.s32 %v1735, %v1738
    %vm1740 = vcmp.lt.s32.totalorder %v1739, 0
    %v1741 = vsub.s32 0, %v1739
    %v1742 = vsel %vm1740, %v1741, %v1739
    %v1743 = vclz %v1742
    %v1744 = vsub.s32 %v1743, 2
    %vm1745 = vcmp.gt.s32.totalorder 0, %v1744
    %v1746 = vsel %vm1745, 0, %v1744
    %v1747 = vsub.s32 32, %v1746
    %v1748 = vshll.u32 %v1739, %v1746
    %v1749 = vshrl.u32 %v1731, %v1747
    %v1750 = vor.u32 %v1748, %v1749
    %v1751 = vsub.s32 4294967266, %v1746
    %v1752 = vadd.s32 %v1751, 127
    %v1753 = vshll.u32 %v1752, 23
    %v1754 = vor.u32 4788187, %v1753
    %v1755 = vand.u32 2147483647, %v1754
    %v1757 = vcvt.s32.f32 %v1750
    %v1758 = vmul.f32 %v1757, %v1755
    %v1759 = vxor.u32 %v1758, 2147483648
    %v1760 = vsel %vm1677, %v1759, %v1758
    %v1761 = vsub.s32 4, %v1737
    %v1762 = vsel %vm1677, %v1761, %v1737
    %v1763 = vsel %vm1676, %v230, %v1760
    %v1764 = vsel %vm1676, 0, %v1762
    %v1765 = vcosq.f32.pop %v1763
    %v1766 = vsinq.f32.pop %v1763
    %vm1767 = vweird.f32 %v230
    %v1768 = vadd.s32 %v1764, 3
    %v1769 = vand.u32 %v1768, 3
    %vm1770 = vcmp.lt.s32.totalorder %v1769, 2
    %vm1771 = vcmp.eq.s32.totalorder %v1769, 0
    %v1772 = vxor.u32 %v1766, 2147483648
    %v1773 = vsel %vm1771, %v1765, %v1772
    %vm1774 = vcmp.eq.s32.totalorder %v1769, 2
    %v1775 = vxor.u32 %v1765, 2147483648
    %v1776 = vsel %vm1774, %v1775, %v1766
    %v1777 = vsel %vm1770, %v1773, %v1776
    %v1778 = vsel %vm1767, nan, %v1777
    %v1779 = vand.u32 2147483647, %v235
    %vm1780 = vcmp.le.f32.partialorder %v1779, 0.7853982
    %vm1781 = vcmp.lt.s32.totalorder %v235, 0
    %v1782 = vand.u32 %v235, 2139095040
    %v1783 = vshrl.u32 %v1782, 23
    %v1784 = vsub.s32 %v1783, 127
    %v1785 = vand.u32 2147483647, %v235
    %v1786 = vand.u32 %v1785, 8388607
    %v1787 = vor.u32 %v1786, 8388608
    %v1788 = vsub.s32 0, %v1787
    %v1789 = vadd.s32 %v1784, 1
    %vm1790 = vcmp.gt.s32.totalorder %v1789, 0
    %v1791 = vsel %vm1790, %v1789, 0
    %v1792 = vshrl.u32 %v1791, 5
    %v1793 = vand.u32 %v1791, 31
    %v1794 = vsub.s32 32, %v1793
    %v1795 = vshrl.u32 683565275, %v1794
    %v1796 = vshll.u32 683565275, %v1793
    %v1797 = vshrl.u32 2475754826, %v1794
    %v1798 = vor.u32 %v1796, %v1797
    %v1799 = vshll.u32 2475754826, %v1793
    %v1800 = vshrl.u32 2131351028, %v1794
    %v1801 = vor.u32 %v1799, %v1800
    %v1802 = vshll.u32 2131351028, %v1793
    %v1803 = vshrl.u32 2102212464, %v1794
    %v1804 = vor.u32 %v1802, %v1803
    %v1805 = vshll.u32 2102212464, %v1793
    %v1806 = vshrl.u32 920167782, %v1794
    %v1807 = vor.u32 %v1805, %v1806
    %v1808 = vshll.u32 920167782, %v1793
    %v1809 = vshrl.u32 1326507024, %v1794
    %v1810 = vor.u32 %v1808, %v1809
    %vm1811 = vcmp.lt.s32.totalorder %v1792, 1
    %vm1812 = vcmp.lt.s32.totalorder %v1792, 2
    %vm1813 = vcmp.lt.s32.totalorder %v1792, 3
    %vm1814 = vcmp.lt.s32.totalorder %v1792, 4
    %v1815 = vsel %vm1811, %v1795, %v1798
    %v1816 = vsel %vm1814, %v1804, 2102212464
    %v1817 = vsel %vm1813, %v1801, %v1816
    %v1818 = vsel %vm1812, %v1815, %v1817
    %v1819 = vsel %vm1811, %v1798, %v1801
    %v1820 = vsel %vm1814, %v1807, 920167782
    %v1821 = vsel %vm1813, %v1804, %v1820
    %v1822 = vsel %vm1812, %v1819, %v1821
    %v1823 = vsel %vm1811, %v1801, %v1804
    %v1824 = vsel %vm1814, %v1810, 1326507024
    %v1825 = vsel %vm1813, %v1807, %v1824
    %v1826 = vsel %vm1812, %v1823, %v1825
    %v1827 = vshll.u32 %v1787, 8
    %v1828 = vmul.u32.u64.compose %v1827, %v1826
    %v1829 = vextract.low.u32 %v1828
    %v1830 = vextract.high.u32 %v1828
    %v1831 = vmul.u32.u64.compose %v1827, %v1822
    %v1832 = vextract.low.u32 %v1831
    %v1833 = vextract.high.u32 %v1831
    %v1834 = vmul.u32 %v1827, %v1818
    %v1835 = vadd.s32 %v1830, %v1832
    %vm1836 = vc.u32 %v1830, %v1832
    %v1837 = vadd.s32 %v1833, 1
    %v1838 = vsel %vm1836, %v1837, %v1833
    %v1839 = vadd.s32 %v1834, %v1838
    %v1840 = vadd.s32 %v1839, 536870912
    %v1841 = vshrl.u32 %v1840, 30
    %v1842 = vshll.u32 %v1841, 30
    %v1843 = vsub.s32 %v1839, %v1842
    %vm1844 = vcmp.lt.s32.totalorder %v1843, 0
    %v1845 = vsub.s32 0, %v1843
    %v1846 = vsel %vm1844, %v1845, %v1843
    %v1847 = vclz %v1846
    %v1848 = vsub.s32 %v1847, 2
    %vm1849 = vcmp.gt.s32.totalorder 0, %v1848
    %v1850 = vsel %vm1849, 0, %v1848
    %v1851 = vsub.s32 32, %v1850
    %v1852 = vshll.u32 %v1843, %v1850
    %v1853 = vshrl.u32 %v1835, %v1851
    %v1854 = vor.u32 %v1852, %v1853
    %v1855 = vsub.s32 4294967266, %v1850
    %v1856 = vadd.s32 %v1855, 127
    %v1857 = vshll.u32 %v1856, 23
    %v1858 = vor.u32 4788187, %v1857
    %v1859 = vand.u32 2147483647, %v1858
    %v1861 = vcvt.s32.f32 %v1854
    %v1862 = vmul.f32 %v1861, %v1859
    %v1863 = vxor.u32 %v1862, 2147483648
    %v1864 = vsel %vm1781, %v1863, %v1862
    %v1865 = vsub.s32 4, %v1841
    %v1866 = vsel %vm1781, %v1865, %v1841
    %v1867 = vsel %vm1780, %v235, %v1864
    %v1868 = vsel %vm1780, 0, %v1866
    %v1869 = vcosq.f32.pop %v1867
    %v1870 = vsinq.f32.pop %v1867
    %vm1871 = vweird.f32 %v235
    %v1872 = vadd.s32 %v1868, 3
    %v1873 = vand.u32 %v1872, 3
    %vm1874 = vcmp.lt.s32.totalorder %v1873, 2
    %vm1875 = vcmp.eq.s32.totalorder %v1873, 0
    %v1876 = vxor.u32 %v1870, 2147483648
    %v1877 = vsel %vm1875, %v1869, %v1876
    %vm1878 = vcmp.eq.s32.totalorder %v1873, 2
    %v1879 = vxor.u32 %v1869, 2147483648
    %v1880 = vsel %vm1878, %v1879, %v1870
    %v1881 = vsel %vm1874, %v1877, %v1880
    %v1882 = vsel %vm1871, nan, %v1881
    %v1883 = vand.u32 2147483647, %v240
    %vm1884 = vcmp.le.f32.partialorder %v1883, 0.7853982
    %vm1885 = vcmp.lt.s32.totalorder %v240, 0
    %v1886 = vand.u32 %v240, 2139095040
    %v1887 = vshrl.u32 %v1886, 23
    %v1888 = vsub.s32 %v1887, 127
    %v1889 = vand.u32 2147483647, %v240
    %v1890 = vand.u32 %v1889, 8388607
    %v1891 = vor.u32 %v1890, 8388608
    %v1892 = vsub.s32 0, %v1891
    %v1893 = vadd.s32 %v1888, 1
    %vm1894 = vcmp.gt.s32.totalorder %v1893, 0
    %v1895 = vsel %vm1894, %v1893, 0
    %v1896 = vshrl.u32 %v1895, 5
    %v1897 = vand.u32 %v1895, 31
    %v1898 = vsub.s32 32, %v1897
    %v1899 = vshrl.u32 683565275, %v1898
    %v1900 = vshll.u32 683565275, %v1897
    %v1901 = vshrl.u32 2475754826, %v1898
    %v1902 = vor.u32 %v1900, %v1901
    %v1903 = vshll.u32 2475754826, %v1897
    %v1904 = vshrl.u32 2131351028, %v1898
    %v1905 = vor.u32 %v1903, %v1904
    %v1906 = vshll.u32 2131351028, %v1897
    %v1907 = vshrl.u32 2102212464, %v1898
    %v1908 = vor.u32 %v1906, %v1907
    %v1909 = vshll.u32 2102212464, %v1897
    %v1910 = vshrl.u32 920167782, %v1898
    %v1911 = vor.u32 %v1909, %v1910
    %v1912 = vshll.u32 920167782, %v1897
    %v1913 = vshrl.u32 1326507024, %v1898
    %v1914 = vor.u32 %v1912, %v1913
    %vm1915 = vcmp.lt.s32.totalorder %v1896, 1
    %vm1916 = vcmp.lt.s32.totalorder %v1896, 2
    %vm1917 = vcmp.lt.s32.totalorder %v1896, 3
    %vm1918 = vcmp.lt.s32.totalorder %v1896, 4
    %v1919 = vsel %vm1915, %v1899, %v1902
    %v1920 = vsel %vm1918, %v1908, 2102212464
    %v1921 = vsel %vm1917, %v1905, %v1920
    %v1922 = vsel %vm1916, %v1919, %v1921
    %v1923 = vsel %vm1915, %v1902, %v1905
    %v1924 = vsel %vm1918, %v1911, 920167782
    %v1925 = vsel %vm1917, %v1908, %v1924
    %v1926 = vsel %vm1916, %v1923, %v1925
    %v1927 = vsel %vm1915, %v1905, %v1908
    %v1928 = vsel %vm1918, %v1914, 1326507024
    %v1929 = vsel %vm1917, %v1911, %v1928
    %v1930 = vsel %vm1916, %v1927, %v1929
    %v1931 = vshll.u32 %v1891, 8
    %v1932 = vmul.u32.u64.compose %v1931, %v1930
    %v1933 = vextract.low.u32 %v1932
    %v1934 = vextract.high.u32 %v1932
    %v1935 = vmul.u32.u64.compose %v1931, %v1926
    %v1936 = vextract.low.u32 %v1935
    %v1937 = vextract.high.u32 %v1935
    %v1938 = vmul.u32 %v1931, %v1922
    %v1939 = vadd.s32 %v1934, %v1936
    %vm1940 = vc.u32 %v1934, %v1936
    %v1941 = vadd.s32 %v1937, 1
    %v1942 = vsel %vm1940, %v1941, %v1937
    %v1943 = vadd.s32 %v1938, %v1942
    %v1944 = vadd.s32 %v1943, 536870912
    %v1945 = vshrl.u32 %v1944, 30
    %v1946 = vshll.u32 %v1945, 30
    %v1947 = vsub.s32 %v1943, %v1946
    %vm1948 = vcmp.lt.s32.totalorder %v1947, 0
    %v1949 = vsub.s32 0, %v1947
    %v1950 = vsel %vm1948, %v1949, %v1947
    %v1951 = vclz %v1950
    %v1952 = vsub.s32 %v1951, 2
    %vm1953 = vcmp.gt.s32.totalorder 0, %v1952
    %v1954 = vsel %vm1953, 0, %v1952
    %v1955 = vsub.s32 32, %v1954
    %v1956 = vshll.u32 %v1947, %v1954
    %v1957 = vshrl.u32 %v1939, %v1955
    %v1958 = vor.u32 %v1956, %v1957
    %v1959 = vsub.s32 4294967266, %v1954
    %v1960 = vadd.s32 %v1959, 127
    %v1961 = vshll.u32 %v1960, 23
    %v1962 = vor.u32 4788187, %v1961
    %v1963 = vand.u32 2147483647, %v1962
    %v1965 = vcvt.s32.f32 %v1958
    %v1966 = vmul.f32 %v1965, %v1963
    %v1967 = vxor.u32 %v1966, 2147483648
    %v1968 = vsel %vm1885, %v1967, %v1966
    %v1969 = vsub.s32 4, %v1945
    %v1970 = vsel %vm1885, %v1969, %v1945
    %v1971 = vsel %vm1884, %v240, %v1968
    %v1972 = vsel %vm1884, 0, %v1970
    %v1973 = vcosq.f32.pop %v1971
    %v1974 = vsinq.f32.pop %v1971
    %vm1975 = vweird.f32 %v240
    %v1976 = vadd.s32 %v1972, 3
    %v1977 = vand.u32 %v1976, 3
    %vm1978 = vcmp.lt.s32.totalorder %v1977, 2
    %vm1979 = vcmp.eq.s32.totalorder %v1977, 0
    %v1980 = vxor.u32 %v1974, 2147483648
    %v1981 = vsel %vm1979, %v1973, %v1980
    %vm1982 = vcmp.eq.s32.totalorder %v1977, 2
    %v1983 = vxor.u32 %v1973, 2147483648
    %v1984 = vsel %vm1982, %v1983, %v1974
    %v1985 = vsel %vm1978, %v1981, %v1984
    %v1986 = vsel %vm1975, nan, %v1985
    %v1987 = vand.u32 2147483647, %v245
    %vm1988 = vcmp.le.f32.partialorder %v1987, 0.7853982
    %vm1989 = vcmp.lt.s32.totalorder %v245, 0
    %v1990 = vand.u32 %v245, 2139095040
    %v1991 = vshrl.u32 %v1990, 23
    %v1992 = vsub.s32 %v1991, 127
    %v1993 = vand.u32 2147483647, %v245
    %v1994 = vand.u32 %v1993, 8388607
    %v1995 = vor.u32 %v1994, 8388608
    %v1996 = vsub.s32 0, %v1995
    %v1997 = vadd.s32 %v1992, 1
    %vm1998 = vcmp.gt.s32.totalorder %v1997, 0
    %v1999 = vsel %vm1998, %v1997, 0
    %v2000 = vshrl.u32 %v1999, 5
    %v2001 = vand.u32 %v1999, 31
    %v2002 = vsub.s32 32, %v2001
    %v2003 = vshrl.u32 683565275, %v2002
    %v2004 = vshll.u32 683565275, %v2001
    %v2005 = vshrl.u32 2475754826, %v2002
    %v2006 = vor.u32 %v2004, %v2005
    %v2007 = vshll.u32 2475754826, %v2001
    %v2008 = vshrl.u32 2131351028, %v2002
    %v2009 = vor.u32 %v2007, %v2008
    %v2010 = vshll.u32 2131351028, %v2001
    %v2011 = vshrl.u32 2102212464, %v2002
    %v2012 = vor.u32 %v2010, %v2011
    %v2013 = vshll.u32 2102212464, %v2001
    %v2014 = vshrl.u32 920167782, %v2002
    %v2015 = vor.u32 %v2013, %v2014
    %v2016 = vshll.u32 920167782, %v2001
    %v2017 = vshrl.u32 1326507024, %v2002
    %v2018 = vor.u32 %v2016, %v2017
    %vm2019 = vcmp.lt.s32.totalorder %v2000, 1
    %vm2020 = vcmp.lt.s32.totalorder %v2000, 2
    %vm2021 = vcmp.lt.s32.totalorder %v2000, 3
    %vm2022 = vcmp.lt.s32.totalorder %v2000, 4
    %v2023 = vsel %vm2019, %v2003, %v2006
    %v2024 = vsel %vm2022, %v2012, 2102212464
    %v2025 = vsel %vm2021, %v2009, %v2024
    %v2026 = vsel %vm2020, %v2023, %v2025
    %v2027 = vsel %vm2019, %v2006, %v2009
    %v2028 = vsel %vm2022, %v2015, 920167782
    %v2029 = vsel %vm2021, %v2012, %v2028
    %v2030 = vsel %vm2020, %v2027, %v2029
    %v2031 = vsel %vm2019, %v2009, %v2012
    %v2032 = vsel %vm2022, %v2018, 1326507024
    %v2033 = vsel %vm2021, %v2015, %v2032
    %v2034 = vsel %vm2020, %v2031, %v2033
    %v2035 = vshll.u32 %v1995, 8
    %v2036 = vmul.u32.u64.compose %v2035, %v2034
    %v2037 = vextract.low.u32 %v2036
    %v2038 = vextract.high.u32 %v2036
    %v2039 = vmul.u32.u64.compose %v2035, %v2030
    %v2040 = vextract.low.u32 %v2039
    %v2041 = vextract.high.u32 %v2039
    %v2042 = vmul.u32 %v2035, %v2026
    %v2043 = vadd.s32 %v2038, %v2040
    %vm2044 = vc.u32 %v2038, %v2040
    %v2045 = vadd.s32 %v2041, 1
    %v2046 = vsel %vm2044, %v2045, %v2041
    %v2047 = vadd.s32 %v2042, %v2046
    %v2048 = vadd.s32 %v2047, 536870912
    %v2049 = vshrl.u32 %v2048, 30
    %v2050 = vshll.u32 %v2049, 30
    %v2051 = vsub.s32 %v2047, %v2050
    %vm2052 = vcmp.lt.s32.totalorder %v2051, 0
    %v2053 = vsub.s32 0, %v2051
    %v2054 = vsel %vm2052, %v2053, %v2051
    %v2055 = vclz %v2054
    %v2056 = vsub.s32 %v2055, 2
    %vm2057 = vcmp.gt.s32.totalorder 0, %v2056
    %v2058 = vsel %vm2057, 0, %v2056
    %v2059 = vsub.s32 32, %v2058
    %v2060 = vshll.u32 %v2051, %v2058
    %v2061 = vshrl.u32 %v2043, %v2059
    %v2062 = vor.u32 %v2060, %v2061
    %v2063 = vsub.s32 4294967266, %v2058
    %v2064 = vadd.s32 %v2063, 127
    %v2065 = vshll.u32 %v2064, 23
    %v2066 = vor.u32 4788187, %v2065
    %v2067 = vand.u32 2147483647, %v2066
    %v2069 = vcvt.s32.f32 %v2062
    %v2070 = vmul.f32 %v2069, %v2067
    %v2071 = vxor.u32 %v2070, 2147483648
    %v2072 = vsel %vm1989, %v2071, %v2070
    %v2073 = vsub.s32 4, %v2049
    %v2074 = vsel %vm1989, %v2073, %v2049
    %v2075 = vsel %vm1988, %v245, %v2072
    %v2076 = vsel %vm1988, 0, %v2074
    %v2077 = vcosq.f32.pop %v2075
    %v2078 = vsinq.f32.pop %v2075
    %vm2079 = vweird.f32 %v245
    %v2080 = vadd.s32 %v2076, 3
    %v2081 = vand.u32 %v2080, 3
    %vm2082 = vcmp.lt.s32.totalorder %v2081, 2
    %vm2083 = vcmp.eq.s32.totalorder %v2081, 0
    %v2084 = vxor.u32 %v2078, 2147483648
    %v2085 = vsel %vm2083, %v2077, %v2084
    %vm2086 = vcmp.eq.s32.totalorder %v2081, 2
    %v2087 = vxor.u32 %v2077, 2147483648
    %v2088 = vsel %vm2086, %v2087, %v2078
    %v2089 = vsel %vm2082, %v2085, %v2088
    %v2090 = vsel %vm2079, nan, %v2089
    %v2091 = vand.u32 2147483647, %v250
    %vm2092 = vcmp.le.f32.partialorder %v2091, 0.7853982
    %vm2093 = vcmp.lt.s32.totalorder %v250, 0
    %v2094 = vand.u32 %v250, 2139095040
    %v2095 = vshrl.u32 %v2094, 23
    %v2096 = vsub.s32 %v2095, 127
    %v2097 = vand.u32 2147483647, %v250
    %v2098 = vand.u32 %v2097, 8388607
    %v2099 = vor.u32 %v2098, 8388608
    %v2100 = vsub.s32 0, %v2099
    %v2101 = vadd.s32 %v2096, 1
    %vm2102 = vcmp.gt.s32.totalorder %v2101, 0
    %v2103 = vsel %vm2102, %v2101, 0
    %v2104 = vshrl.u32 %v2103, 5
    %v2105 = vand.u32 %v2103, 31
    %v2106 = vsub.s32 32, %v2105
    %v2107 = vshrl.u32 683565275, %v2106
    %v2108 = vshll.u32 683565275, %v2105
    %v2109 = vshrl.u32 2475754826, %v2106
    %v2110 = vor.u32 %v2108, %v2109
    %v2111 = vshll.u32 2475754826, %v2105
    %v2112 = vshrl.u32 2131351028, %v2106
    %v2113 = vor.u32 %v2111, %v2112
    %v2114 = vshll.u32 2131351028, %v2105
    %v2115 = vshrl.u32 2102212464, %v2106
    %v2116 = vor.u32 %v2114, %v2115
    %v2117 = vshll.u32 2102212464, %v2105
    %v2118 = vshrl.u32 920167782, %v2106
    %v2119 = vor.u32 %v2117, %v2118
    %v2120 = vshll.u32 920167782, %v2105
    %v2121 = vshrl.u32 1326507024, %v2106
    %v2122 = vor.u32 %v2120, %v2121
    %vm2123 = vcmp.lt.s32.totalorder %v2104, 1
    %vm2124 = vcmp.lt.s32.totalorder %v2104, 2
    %vm2125 = vcmp.lt.s32.totalorder %v2104, 3
    %vm2126 = vcmp.lt.s32.totalorder %v2104, 4
    %v2127 = vsel %vm2123, %v2107, %v2110
    %v2128 = vsel %vm2126, %v2116, 2102212464
    %v2129 = vsel %vm2125, %v2113, %v2128
    %v2130 = vsel %vm2124, %v2127, %v2129
    %v2131 = vsel %vm2123, %v2110, %v2113
    %v2132 = vsel %vm2126, %v2119, 920167782
    %v2133 = vsel %vm2125, %v2116, %v2132
    %v2134 = vsel %vm2124, %v2131, %v2133
    %v2135 = vsel %vm2123, %v2113, %v2116
    %v2136 = vsel %vm2126, %v2122, 1326507024
    %v2137 = vsel %vm2125, %v2119, %v2136
    %v2138 = vsel %vm2124, %v2135, %v2137
    %v2139 = vshll.u32 %v2099, 8
    %v2140 = vmul.u32.u64.compose %v2139, %v2138
    %v2141 = vextract.low.u32 %v2140
    %v2142 = vextract.high.u32 %v2140
    %v2143 = vmul.u32.u64.compose %v2139, %v2134
    %v2144 = vextract.low.u32 %v2143
    %v2145 = vextract.high.u32 %v2143
    %v2146 = vmul.u32 %v2139, %v2130
    %v2147 = vadd.s32 %v2142, %v2144
    %vm2148 = vc.u32 %v2142, %v2144
    %v2149 = vadd.s32 %v2145, 1
    %v2150 = vsel %vm2148, %v2149, %v2145
    %v2151 = vadd.s32 %v2146, %v2150
    %v2152 = vadd.s32 %v2151, 536870912
    %v2153 = vshrl.u32 %v2152, 30
    %v2154 = vshll.u32 %v2153, 30
    %v2155 = vsub.s32 %v2151, %v2154
    %vm2156 = vcmp.lt.s32.totalorder %v2155, 0
    %v2157 = vsub.s32 0, %v2155
    %v2158 = vsel %vm2156, %v2157, %v2155
    %v2159 = vclz %v2158
    %v2160 = vsub.s32 %v2159, 2
    %vm2161 = vcmp.gt.s32.totalorder 0, %v2160
    %v2162 = vsel %vm2161, 0, %v2160
    %v2163 = vsub.s32 32, %v2162
    %v2164 = vshll.u32 %v2155, %v2162
    %v2165 = vshrl.u32 %v2147, %v2163
    %v2166 = vor.u32 %v2164, %v2165
    %v2167 = vsub.s32 4294967266, %v2162
    %v2168 = vadd.s32 %v2167, 127
    %v2169 = vshll.u32 %v2168, 23
    %v2170 = vor.u32 4788187, %v2169
    %v2171 = vand.u32 2147483647, %v2170
    %v2173 = vcvt.s32.f32 %v2166
    %v2174 = vmul.f32 %v2173, %v2171
    %v2175 = vxor.u32 %v2174, 2147483648
    %v2176 = vsel %vm2093, %v2175, %v2174
    %v2177 = vsub.s32 4, %v2153
    %v2178 = vsel %vm2093, %v2177, %v2153
    %v2179 = vsel %vm2092, %v250, %v2176
    %v2180 = vsel %vm2092, 0, %v2178
    %v2181 = vcosq.f32.pop %v2179
    %v2182 = vsinq.f32.pop %v2179
    %vm2183 = vweird.f32 %v250
    %v2184 = vadd.s32 %v2180, 3
    %v2185 = vand.u32 %v2184, 3
    %vm2186 = vcmp.lt.s32.totalorder %v2185, 2
    %vm2187 = vcmp.eq.s32.totalorder %v2185, 0
    %v2188 = vxor.u32 %v2182, 2147483648
    %v2189 = vsel %vm2187, %v2181, %v2188
    %vm2190 = vcmp.eq.s32.totalorder %v2185, 2
    %v2191 = vxor.u32 %v2181, 2147483648
    %v2192 = vsel %vm2190, %v2191, %v2182
    %v2193 = vsel %vm2186, %v2189, %v2192
    %v2194 = vsel %vm2183, nan, %v2193
    %v2195 = vand.u32 2147483647, %v255
    %vm2196 = vcmp.le.f32.partialorder %v2195, 0.7853982
    %vm2197 = vcmp.lt.s32.totalorder %v255, 0
    %v2198 = vand.u32 %v255, 2139095040
    %v2199 = vshrl.u32 %v2198, 23
    %v2200 = vsub.s32 %v2199, 127
    %v2201 = vand.u32 2147483647, %v255
    %v2202 = vand.u32 %v2201, 8388607
    %v2203 = vor.u32 %v2202, 8388608
    %v2204 = vsub.s32 0, %v2203
    %v2205 = vadd.s32 %v2200, 1
    %vm2206 = vcmp.gt.s32.totalorder %v2205, 0
    %v2207 = vsel %vm2206, %v2205, 0
    %v2208 = vshrl.u32 %v2207, 5
    %v2209 = vand.u32 %v2207, 31
    %v2210 = vsub.s32 32, %v2209
    %v2211 = vshrl.u32 683565275, %v2210
    %v2212 = vshll.u32 683565275, %v2209
    %v2213 = vshrl.u32 2475754826, %v2210
    %v2214 = vor.u32 %v2212, %v2213
    %v2215 = vshll.u32 2475754826, %v2209
    %v2216 = vshrl.u32 2131351028, %v2210
    %v2217 = vor.u32 %v2215, %v2216
    %v2218 = vshll.u32 2131351028, %v2209
    %v2219 = vshrl.u32 2102212464, %v2210
    %v2220 = vor.u32 %v2218, %v2219
    %v2221 = vshll.u32 2102212464, %v2209
    %v2222 = vshrl.u32 920167782, %v2210
    %v2223 = vor.u32 %v2221, %v2222
    %v2224 = vshll.u32 920167782, %v2209
    %v2225 = vshrl.u32 1326507024, %v2210
    %v2226 = vor.u32 %v2224, %v2225
    %vm2227 = vcmp.lt.s32.totalorder %v2208, 1
    %vm2228 = vcmp.lt.s32.totalorder %v2208, 2
    %vm2229 = vcmp.lt.s32.totalorder %v2208, 3
    %vm2230 = vcmp.lt.s32.totalorder %v2208, 4
    %v2231 = vsel %vm2227, %v2211, %v2214
    %v2232 = vsel %vm2230, %v2220, 2102212464
    %v2233 = vsel %vm2229, %v2217, %v2232
    %v2234 = vsel %vm2228, %v2231, %v2233
    %v2235 = vsel %vm2227, %v2214, %v2217
    %v2236 = vsel %vm2230, %v2223, 920167782
    %v2237 = vsel %vm2229, %v2220, %v2236
    %v2238 = vsel %vm2228, %v2235, %v2237
    %v2239 = vsel %vm2227, %v2217, %v2220
    %v2240 = vsel %vm2230, %v2226, 1326507024
    %v2241 = vsel %vm2229, %v2223, %v2240
    %v2242 = vsel %vm2228, %v2239, %v2241
    %v2243 = vshll.u32 %v2203, 8
    %v2244 = vmul.u32.u64.compose %v2243, %v2242
    %v2245 = vextract.low.u32 %v2244
    %v2246 = vextract.high.u32 %v2244
    %v2247 = vmul.u32.u64.compose %v2243, %v2238
    %v2248 = vextract.low.u32 %v2247
    %v2249 = vextract.high.u32 %v2247
    %v2250 = vmul.u32 %v2243, %v2234
    %v2251 = vadd.s32 %v2246, %v2248
    %vm2252 = vc.u32 %v2246, %v2248
    %v2253 = vadd.s32 %v2249, 1
    %v2254 = vsel %vm2252, %v2253, %v2249
    %v2255 = vadd.s32 %v2250, %v2254
    %v2256 = vadd.s32 %v2255, 536870912
    %v2257 = vshrl.u32 %v2256, 30
    %v2258 = vshll.u32 %v2257, 30
    %v2259 = vsub.s32 %v2255, %v2258
    %vm2260 = vcmp.lt.s32.totalorder %v2259, 0
    %v2261 = vsub.s32 0, %v2259
    %v2262 = vsel %vm2260, %v2261, %v2259
    %v2263 = vclz %v2262
    %v2264 = vsub.s32 %v2263, 2
    %vm2265 = vcmp.gt.s32.totalorder 0, %v2264
    %v2266 = vsel %vm2265, 0, %v2264
    %v2267 = vsub.s32 32, %v2266
    %v2268 = vshll.u32 %v2259, %v2266
    %v2269 = vshrl.u32 %v2251, %v2267
    %v2270 = vor.u32 %v2268, %v2269
    %v2271 = vsub.s32 4294967266, %v2266
    %v2272 = vadd.s32 %v2271, 127
    %v2273 = vshll.u32 %v2272, 23
    %v2274 = vor.u32 4788187, %v2273
    %v2275 = vand.u32 2147483647, %v2274
    %v2277 = vcvt.s32.f32 %v2270
    %v2278 = vmul.f32 %v2277, %v2275
    %v2279 = vxor.u32 %v2278, 2147483648
    %v2280 = vsel %vm2197, %v2279, %v2278
    %v2281 = vsub.s32 4, %v2257
    %v2282 = vsel %vm2197, %v2281, %v2257
    %v2283 = vsel %vm2196, %v255, %v2280
    %v2284 = vsel %vm2196, 0, %v2282
    %v2285 = vcosq.f32.pop %v2283
    %v2286 = vsinq.f32.pop %v2283
    %vm2287 = vweird.f32 %v255
    %v2288 = vadd.s32 %v2284, 3
    %v2289 = vand.u32 %v2288, 3
    %vm2290 = vcmp.lt.s32.totalorder %v2289, 2
    %vm2291 = vcmp.eq.s32.totalorder %v2289, 0
    %v2292 = vxor.u32 %v2286, 2147483648
    %v2293 = vsel %vm2291, %v2285, %v2292
    %vm2294 = vcmp.eq.s32.totalorder %v2289, 2
    %v2295 = vxor.u32 %v2285, 2147483648
    %v2296 = vsel %vm2294, %v2295, %v2286
    %v2297 = vsel %vm2290, %v2293, %v2296
    %v2298 = vsel %vm2287, nan, %v2297
    %v2299 = vand.u32 2147483647, %v260
    %vm2300 = vcmp.le.f32.partialorder %v2299, 0.7853982
    %vm2301 = vcmp.lt.s32.totalorder %v260, 0
    %v2302 = vand.u32 %v260, 2139095040
    %v2303 = vshrl.u32 %v2302, 23
    %v2304 = vsub.s32 %v2303, 127
    %v2305 = vand.u32 2147483647, %v260
    %v2306 = vand.u32 %v2305, 8388607
    %v2307 = vor.u32 %v2306, 8388608
    %v2308 = vsub.s32 0, %v2307
    %v2309 = vadd.s32 %v2304, 1
    %vm2310 = vcmp.gt.s32.totalorder %v2309, 0
    %v2311 = vsel %vm2310, %v2309, 0
    %v2312 = vshrl.u32 %v2311, 5
    %v2313 = vand.u32 %v2311, 31
    %v2314 = vsub.s32 32, %v2313
    %v2315 = vshrl.u32 683565275, %v2314
    %v2316 = vshll.u32 683565275, %v2313
    %v2317 = vshrl.u32 2475754826, %v2314
    %v2318 = vor.u32 %v2316, %v2317
    %v2319 = vshll.u32 2475754826, %v2313
    %v2320 = vshrl.u32 2131351028, %v2314
    %v2321 = vor.u32 %v2319, %v2320
    %v2322 = vshll.u32 2131351028, %v2313
    %v2323 = vshrl.u32 2102212464, %v2314
    %v2324 = vor.u32 %v2322, %v2323
    %v2325 = vshll.u32 2102212464, %v2313
    %v2326 = vshrl.u32 920167782, %v2314
    %v2327 = vor.u32 %v2325, %v2326
    %v2328 = vshll.u32 920167782, %v2313
    %v2329 = vshrl.u32 1326507024, %v2314
    %v2330 = vor.u32 %v2328, %v2329
    %vm2331 = vcmp.lt.s32.totalorder %v2312, 1
    %vm2332 = vcmp.lt.s32.totalorder %v2312, 2
    %vm2333 = vcmp.lt.s32.totalorder %v2312, 3
    %vm2334 = vcmp.lt.s32.totalorder %v2312, 4
    %v2335 = vsel %vm2331, %v2315, %v2318
    %v2336 = vsel %vm2334, %v2324, 2102212464
    %v2337 = vsel %vm2333, %v2321, %v2336
    %v2338 = vsel %vm2332, %v2335, %v2337
    %v2339 = vsel %vm2331, %v2318, %v2321
    %v2340 = vsel %vm2334, %v2327, 920167782
    %v2341 = vsel %vm2333, %v2324, %v2340
    %v2342 = vsel %vm2332, %v2339, %v2341
    %v2343 = vsel %vm2331, %v2321, %v2324
    %v2344 = vsel %vm2334, %v2330, 1326507024
    %v2345 = vsel %vm2333, %v2327, %v2344
    %v2346 = vsel %vm2332, %v2343, %v2345
    %v2347 = vshll.u32 %v2307, 8
    %v2348 = vmul.u32.u64.compose %v2347, %v2346
    %v2349 = vextract.low.u32 %v2348
    %v2350 = vextract.high.u32 %v2348
    %v2351 = vmul.u32.u64.compose %v2347, %v2342
    %v2352 = vextract.low.u32 %v2351
    %v2353 = vextract.high.u32 %v2351
    %v2354 = vmul.u32 %v2347, %v2338
    %v2355 = vadd.s32 %v2350, %v2352
    %vm2356 = vc.u32 %v2350, %v2352
    %v2357 = vadd.s32 %v2353, 1
    %v2358 = vsel %vm2356, %v2357, %v2353
    %v2359 = vadd.s32 %v2354, %v2358
    %v2360 = vadd.s32 %v2359, 536870912
    %v2361 = vshrl.u32 %v2360, 30
    %v2362 = vshll.u32 %v2361, 30
    %v2363 = vsub.s32 %v2359, %v2362
    %vm2364 = vcmp.lt.s32.totalorder %v2363, 0
    %v2365 = vsub.s32 0, %v2363
    %v2366 = vsel %vm2364, %v2365, %v2363
    %v2367 = vclz %v2366
    %v2368 = vsub.s32 %v2367, 2
    %vm2369 = vcmp.gt.s32.totalorder 0, %v2368
    %v2370 = vsel %vm2369, 0, %v2368
    %v2371 = vsub.s32 32, %v2370
    %v2372 = vshll.u32 %v2363, %v2370
    %v2373 = vshrl.u32 %v2355, %v2371
    %v2374 = vor.u32 %v2372, %v2373
    %v2375 = vsub.s32 4294967266, %v2370
    %v2376 = vadd.s32 %v2375, 127
    %v2377 = vshll.u32 %v2376, 23
    %v2378 = vor.u32 4788187, %v2377
    %v2379 = vand.u32 2147483647, %v2378
    %v2381 = vcvt.s32.f32 %v2374
    %v2382 = vmul.f32 %v2381, %v2379
    %v2383 = vxor.u32 %v2382, 2147483648
    %v2384 = vsel %vm2301, %v2383, %v2382
    %v2385 = vsub.s32 4, %v2361
    %v2386 = vsel %vm2301, %v2385, %v2361
    %v2387 = vsel %vm2300, %v260, %v2384
    %v2388 = vsel %vm2300, 0, %v2386
    %v2389 = vcosq.f32.pop %v2387
    %v2390 = vsinq.f32.pop %v2387
    %vm2391 = vweird.f32 %v260
    %v2392 = vadd.s32 %v2388, 3
    %v2393 = vand.u32 %v2392, 3
    %vm2394 = vcmp.lt.s32.totalorder %v2393, 2
    %vm2395 = vcmp.eq.s32.totalorder %v2393, 0
    %v2396 = vxor.u32 %v2390, 2147483648
    %v2397 = vsel %vm2395, %v2389, %v2396
    %vm2398 = vcmp.eq.s32.totalorder %v2393, 2
    %v2399 = vxor.u32 %v2389, 2147483648
    %v2400 = vsel %vm2398, %v2399, %v2390
    %v2401 = vsel %vm2394, %v2397, %v2400
    %v2402 = vsel %vm2391, nan, %v2401
    %v2403 = vand.u32 2147483647, %v265
    %vm2404 = vcmp.le.f32.partialorder %v2403, 0.7853982
    %vm2405 = vcmp.lt.s32.totalorder %v265, 0
    %v2406 = vand.u32 %v265, 2139095040
    %v2407 = vshrl.u32 %v2406, 23
    %v2408 = vsub.s32 %v2407, 127
    %v2409 = vand.u32 2147483647, %v265
    %v2410 = vand.u32 %v2409, 8388607
    %v2411 = vor.u32 %v2410, 8388608
    %v2412 = vsub.s32 0, %v2411
    %v2413 = vadd.s32 %v2408, 1
    %vm2414 = vcmp.gt.s32.totalorder %v2413, 0
    %v2415 = vsel %vm2414, %v2413, 0
    %v2416 = vshrl.u32 %v2415, 5
    %v2417 = vand.u32 %v2415, 31
    %v2418 = vsub.s32 32, %v2417
    %v2419 = vshrl.u32 683565275, %v2418
    %v2420 = vshll.u32 683565275, %v2417
    %v2421 = vshrl.u32 2475754826, %v2418
    %v2422 = vor.u32 %v2420, %v2421
    %v2423 = vshll.u32 2475754826, %v2417
    %v2424 = vshrl.u32 2131351028, %v2418
    %v2425 = vor.u32 %v2423, %v2424
    %v2426 = vshll.u32 2131351028, %v2417
    %v2427 = vshrl.u32 2102212464, %v2418
    %v2428 = vor.u32 %v2426, %v2427
    %v2429 = vshll.u32 2102212464, %v2417
    %v2430 = vshrl.u32 920167782, %v2418
    %v2431 = vor.u32 %v2429, %v2430
    %v2432 = vshll.u32 920167782, %v2417
    %v2433 = vshrl.u32 1326507024, %v2418
    %v2434 = vor.u32 %v2432, %v2433
    %vm2435 = vcmp.lt.s32.totalorder %v2416, 1
    %vm2436 = vcmp.lt.s32.totalorder %v2416, 2
    %vm2437 = vcmp.lt.s32.totalorder %v2416, 3
    %vm2438 = vcmp.lt.s32.totalorder %v2416, 4
    %v2439 = vsel %vm2435, %v2419, %v2422
    %v2440 = vsel %vm2438, %v2428, 2102212464
    %v2441 = vsel %vm2437, %v2425, %v2440
    %v2442 = vsel %vm2436, %v2439, %v2441
    %v2443 = vsel %vm2435, %v2422, %v2425
    %v2444 = vsel %vm2438, %v2431, 920167782
    %v2445 = vsel %vm2437, %v2428, %v2444
    %v2446 = vsel %vm2436, %v2443, %v2445
    %v2447 = vsel %vm2435, %v2425, %v2428
    %v2448 = vsel %vm2438, %v2434, 1326507024
    %v2449 = vsel %vm2437, %v2431, %v2448
    %v2450 = vsel %vm2436, %v2447, %v2449
    %v2451 = vshll.u32 %v2411, 8
    %v2452 = vmul.u32.u64.compose %v2451, %v2450
    %v2453 = vextract.low.u32 %v2452
    %v2454 = vextract.high.u32 %v2452
    %v2455 = vmul.u32.u64.compose %v2451, %v2446
    %v2456 = vextract.low.u32 %v2455
    %v2457 = vextract.high.u32 %v2455
    %v2458 = vmul.u32 %v2451, %v2442
    %v2459 = vadd.s32 %v2454, %v2456
    %vm2460 = vc.u32 %v2454, %v2456
    %v2461 = vadd.s32 %v2457, 1
    %v2462 = vsel %vm2460, %v2461, %v2457
    %v2463 = vadd.s32 %v2458, %v2462
    %v2464 = vadd.s32 %v2463, 536870912
    %v2465 = vshrl.u32 %v2464, 30
    %v2466 = vshll.u32 %v2465, 30
    %v2467 = vsub.s32 %v2463, %v2466
    %vm2468 = vcmp.lt.s32.totalorder %v2467, 0
    %v2469 = vsub.s32 0, %v2467
    %v2470 = vsel %vm2468, %v2469, %v2467
    %v2471 = vclz %v2470
    %v2472 = vsub.s32 %v2471, 2
    %vm2473 = vcmp.gt.s32.totalorder 0, %v2472
    %v2474 = vsel %vm2473, 0, %v2472
    %v2475 = vsub.s32 32, %v2474
    %v2476 = vshll.u32 %v2467, %v2474
    %v2477 = vshrl.u32 %v2459, %v2475
    %v2478 = vor.u32 %v2476, %v2477
    %v2479 = vsub.s32 4294967266, %v2474
    %v2480 = vadd.s32 %v2479, 127
    %v2481 = vshll.u32 %v2480, 23
    %v2482 = vor.u32 4788187, %v2481
    %v2483 = vand.u32 2147483647, %v2482
    %v2485 = vcvt.s32.f32 %v2478
    %v2486 = vmul.f32 %v2485, %v2483
    %v2487 = vxor.u32 %v2486, 2147483648
    %v2488 = vsel %vm2405, %v2487, %v2486
    %v2489 = vsub.s32 4, %v2465
    %v2490 = vsel %vm2405, %v2489, %v2465
    %v2491 = vsel %vm2404, %v265, %v2488
    %v2492 = vsel %vm2404, 0, %v2490
    %v2493 = vcosq.f32.pop %v2491
    %v2494 = vsinq.f32.pop %v2491
    %vm2495 = vweird.f32 %v265
    %v2496 = vadd.s32 %v2492, 3
    %v2497 = vand.u32 %v2496, 3
    %vm2498 = vcmp.lt.s32.totalorder %v2497, 2
    %vm2499 = vcmp.eq.s32.totalorder %v2497, 0
    %v2500 = vxor.u32 %v2494, 2147483648
    %v2501 = vsel %vm2499, %v2493, %v2500
    %vm2502 = vcmp.eq.s32.totalorder %v2497, 2
    %v2503 = vxor.u32 %v2493, 2147483648
    %v2504 = vsel %vm2502, %v2503, %v2494
    %v2505 = vsel %vm2498, %v2501, %v2504
    %v2506 = vsel %vm2495, nan, %v2505
    %v2507 = vand.u32 2147483647, %v270
    %vm2508 = vcmp.le.f32.partialorder %v2507, 0.7853982
    %vm2509 = vcmp.lt.s32.totalorder %v270, 0
    %v2510 = vand.u32 %v270, 2139095040
    %v2511 = vshrl.u32 %v2510, 23
    %v2512 = vsub.s32 %v2511, 127
    %v2513 = vand.u32 2147483647, %v270
    %v2514 = vand.u32 %v2513, 8388607
    %v2515 = vor.u32 %v2514, 8388608
    %v2516 = vsub.s32 0, %v2515
    %v2517 = vadd.s32 %v2512, 1
    %vm2518 = vcmp.gt.s32.totalorder %v2517, 0
    %v2519 = vsel %vm2518, %v2517, 0
    %v2520 = vshrl.u32 %v2519, 5
    %v2521 = vand.u32 %v2519, 31
    %v2522 = vsub.s32 32, %v2521
    %v2523 = vshrl.u32 683565275, %v2522
    %v2524 = vshll.u32 683565275, %v2521
    %v2525 = vshrl.u32 2475754826, %v2522
    %v2526 = vor.u32 %v2524, %v2525
    %v2527 = vshll.u32 2475754826, %v2521
    %v2528 = vshrl.u32 2131351028, %v2522
    %v2529 = vor.u32 %v2527, %v2528
    %v2530 = vshll.u32 2131351028, %v2521
    %v2531 = vshrl.u32 2102212464, %v2522
    %v2532 = vor.u32 %v2530, %v2531
    %v2533 = vshll.u32 2102212464, %v2521
    %v2534 = vshrl.u32 920167782, %v2522
    %v2535 = vor.u32 %v2533, %v2534
    %v2536 = vshll.u32 920167782, %v2521
    %v2537 = vshrl.u32 1326507024, %v2522
    %v2538 = vor.u32 %v2536, %v2537
    %vm2539 = vcmp.lt.s32.totalorder %v2520, 1
    %vm2540 = vcmp.lt.s32.totalorder %v2520, 2
    %vm2541 = vcmp.lt.s32.totalorder %v2520, 3
    %vm2542 = vcmp.lt.s32.totalorder %v2520, 4
    %v2543 = vsel %vm2539, %v2523, %v2526
    %v2544 = vsel %vm2542, %v2532, 2102212464
    %v2545 = vsel %vm2541, %v2529, %v2544
    %v2546 = vsel %vm2540, %v2543, %v2545
    %v2547 = vsel %vm2539, %v2526, %v2529
    %v2548 = vsel %vm2542, %v2535, 920167782
    %v2549 = vsel %vm2541, %v2532, %v2548
    %v2550 = vsel %vm2540, %v2547, %v2549
    %v2551 = vsel %vm2539, %v2529, %v2532
    %v2552 = vsel %vm2542, %v2538, 1326507024
    %v2553 = vsel %vm2541, %v2535, %v2552
    %v2554 = vsel %vm2540, %v2551, %v2553
    %v2555 = vshll.u32 %v2515, 8
    %v2556 = vmul.u32.u64.compose %v2555, %v2554
    %v2557 = vextract.low.u32 %v2556
    %v2558 = vextract.high.u32 %v2556
    %v2559 = vmul.u32.u64.compose %v2555, %v2550
    %v2560 = vextract.low.u32 %v2559
    %v2561 = vextract.high.u32 %v2559
    %v2562 = vmul.u32 %v2555, %v2546
    %v2563 = vadd.s32 %v2558, %v2560
    %vm2564 = vc.u32 %v2558, %v2560
    %v2565 = vadd.s32 %v2561, 1
    %v2566 = vsel %vm2564, %v2565, %v2561
    %v2567 = vadd.s32 %v2562, %v2566
    %v2568 = vadd.s32 %v2567, 536870912
    %v2569 = vshrl.u32 %v2568, 30
    %v2570 = vshll.u32 %v2569, 30
    %v2571 = vsub.s32 %v2567, %v2570
    %vm2572 = vcmp.lt.s32.totalorder %v2571, 0
    %v2573 = vsub.s32 0, %v2571
    %v2574 = vsel %vm2572, %v2573, %v2571
    %v2575 = vclz %v2574
    %v2576 = vsub.s32 %v2575, 2
    %vm2577 = vcmp.gt.s32.totalorder 0, %v2576
    %v2578 = vsel %vm2577, 0, %v2576
    %v2579 = vsub.s32 32, %v2578
    %v2580 = vshll.u32 %v2571, %v2578
    %v2581 = vshrl.u32 %v2563, %v2579
    %v2582 = vor.u32 %v2580, %v2581
    %v2583 = vsub.s32 4294967266, %v2578
    %v2584 = vadd.s32 %v2583, 127
    %v2585 = vshll.u32 %v2584, 23
    %v2586 = vor.u32 4788187, %v2585
    %v2587 = vand.u32 2147483647, %v2586
    %v2589 = vcvt.s32.f32 %v2582
    %v2590 = vmul.f32 %v2589, %v2587
    %v2591 = vxor.u32 %v2590, 2147483648
    %v2592 = vsel %vm2509, %v2591, %v2590
    %v2593 = vsub.s32 4, %v2569
    %v2594 = vsel %vm2509, %v2593, %v2569
    %v2595 = vsel %vm2508, %v270, %v2592
    %v2596 = vsel %vm2508, 0, %v2594
    %v2597 = vcosq.f32.pop %v2595
    %v2598 = vsinq.f32.pop %v2595
    %vm2599 = vweird.f32 %v270
    %v2600 = vadd.s32 %v2596, 3
    %v2601 = vand.u32 %v2600, 3
    %vm2602 = vcmp.lt.s32.totalorder %v2601, 2
    %vm2603 = vcmp.eq.s32.totalorder %v2601, 0
    %v2604 = vxor.u32 %v2598, 2147483648
    %v2605 = vsel %vm2603, %v2597, %v2604
    %vm2606 = vcmp.eq.s32.totalorder %v2601, 2
    %v2607 = vxor.u32 %v2597, 2147483648
    %v2608 = vsel %vm2606, %v2607, %v2598
    %v2609 = vsel %vm2602, %v2605, %v2608
    %v2610 = vsel %vm2599, nan, %v2609
    %v2611 = vand.u32 2147483647, %v275
    %vm2612 = vcmp.le.f32.partialorder %v2611, 0.7853982
    %vm2613 = vcmp.lt.s32.totalorder %v275, 0
    %v2614 = vand.u32 %v275, 2139095040
    %v2615 = vshrl.u32 %v2614, 23
    %v2616 = vsub.s32 %v2615, 127
    %v2617 = vand.u32 2147483647, %v275
    %v2618 = vand.u32 %v2617, 8388607
    %v2619 = vor.u32 %v2618, 8388608
    %v2620 = vsub.s32 0, %v2619
    %v2621 = vadd.s32 %v2616, 1
    %vm2622 = vcmp.gt.s32.totalorder %v2621, 0
    %v2623 = vsel %vm2622, %v2621, 0
    %v2624 = vshrl.u32 %v2623, 5
    %v2625 = vand.u32 %v2623, 31
    %v2626 = vsub.s32 32, %v2625
    %v2627 = vshrl.u32 683565275, %v2626
    %v2628 = vshll.u32 683565275, %v2625
    %v2629 = vshrl.u32 2475754826, %v2626
    %v2630 = vor.u32 %v2628, %v2629
    %v2631 = vshll.u32 2475754826, %v2625
    %v2632 = vshrl.u32 2131351028, %v2626
    %v2633 = vor.u32 %v2631, %v2632
    %v2634 = vshll.u32 2131351028, %v2625
    %v2635 = vshrl.u32 2102212464, %v2626
    %v2636 = vor.u32 %v2634, %v2635
    %v2637 = vshll.u32 2102212464, %v2625
    %v2638 = vshrl.u32 920167782, %v2626
    %v2639 = vor.u32 %v2637, %v2638
    %v2640 = vshll.u32 920167782, %v2625
    %v2641 = vshrl.u32 1326507024, %v2626
    %v2642 = vor.u32 %v2640, %v2641
    %vm2643 = vcmp.lt.s32.totalorder %v2624, 1
    %vm2644 = vcmp.lt.s32.totalorder %v2624, 2
    %vm2645 = vcmp.lt.s32.totalorder %v2624, 3
    %vm2646 = vcmp.lt.s32.totalorder %v2624, 4
    %v2647 = vsel %vm2643, %v2627, %v2630
    %v2648 = vsel %vm2646, %v2636, 2102212464
    %v2649 = vsel %vm2645, %v2633, %v2648
    %v2650 = vsel %vm2644, %v2647, %v2649
    %v2651 = vsel %vm2643, %v2630, %v2633
    %v2652 = vsel %vm2646, %v2639, 920167782
    %v2653 = vsel %vm2645, %v2636, %v2652
    %v2654 = vsel %vm2644, %v2651, %v2653
    %v2655 = vsel %vm2643, %v2633, %v2636
    %v2656 = vsel %vm2646, %v2642, 1326507024
    %v2657 = vsel %vm2645, %v2639, %v2656
    %v2658 = vsel %vm2644, %v2655, %v2657
    %v2659 = vshll.u32 %v2619, 8
    %v2660 = vmul.u32.u64.compose %v2659, %v2658
    %v2661 = vextract.low.u32 %v2660
    %v2662 = vextract.high.u32 %v2660
    %v2663 = vmul.u32.u64.compose %v2659, %v2654
    %v2664 = vextract.low.u32 %v2663
    %v2665 = vextract.high.u32 %v2663
    %v2666 = vmul.u32 %v2659, %v2650
    %v2667 = vadd.s32 %v2662, %v2664
    %vm2668 = vc.u32 %v2662, %v2664
    %v2669 = vadd.s32 %v2665, 1
    %v2670 = vsel %vm2668, %v2669, %v2665
    %v2671 = vadd.s32 %v2666, %v2670
    %v2672 = vadd.s32 %v2671, 536870912
    %v2673 = vshrl.u32 %v2672, 30
    %v2674 = vshll.u32 %v2673, 30
    %v2675 = vsub.s32 %v2671, %v2674
    %vm2676 = vcmp.lt.s32.totalorder %v2675, 0
    %v2677 = vsub.s32 0, %v2675
    %v2678 = vsel %vm2676, %v2677, %v2675
    %v2679 = vclz %v2678
    %v2680 = vsub.s32 %v2679, 2
    %vm2681 = vcmp.gt.s32.totalorder 0, %v2680
    %v2682 = vsel %vm2681, 0, %v2680
    %v2683 = vsub.s32 32, %v2682
    %v2684 = vshll.u32 %v2675, %v2682
    %v2685 = vshrl.u32 %v2667, %v2683
    %v2686 = vor.u32 %v2684, %v2685
    %v2687 = vsub.s32 4294967266, %v2682
    %v2688 = vadd.s32 %v2687, 127
    %v2689 = vshll.u32 %v2688, 23
    %v2690 = vor.u32 4788187, %v2689
    %v2691 = vand.u32 2147483647, %v2690
    %v2693 = vcvt.s32.f32 %v2686
    %v2694 = vmul.f32 %v2693, %v2691
    %v2695 = vxor.u32 %v2694, 2147483648
    %v2696 = vsel %vm2613, %v2695, %v2694
    %v2697 = vsub.s32 4, %v2673
    %v2698 = vsel %vm2613, %v2697, %v2673
    %v2699 = vsel %vm2612, %v275, %v2696
    %v2700 = vsel %vm2612, 0, %v2698
    %v2701 = vcosq.f32.pop %v2699
    %v2702 = vsinq.f32.pop %v2699
    %vm2703 = vweird.f32 %v275
    %v2704 = vadd.s32 %v2700, 3
    %v2705 = vand.u32 %v2704, 3
    %vm2706 = vcmp.lt.s32.totalorder %v2705, 2
    %vm2707 = vcmp.eq.s32.totalorder %v2705, 0
    %v2708 = vxor.u32 %v2702, 2147483648
    %v2709 = vsel %vm2707, %v2701, %v2708
    %vm2710 = vcmp.eq.s32.totalorder %v2705, 2
    %v2711 = vxor.u32 %v2701, 2147483648
    %v2712 = vsel %vm2710, %v2711, %v2702
    %v2713 = vsel %vm2706, %v2709, %v2712
    %v2714 = vsel %vm2703, nan, %v2713
    %v2715 = vand.u32 2147483647, %v280
    %vm2716 = vcmp.le.f32.partialorder %v2715, 0.7853982
    %vm2717 = vcmp.lt.s32.totalorder %v280, 0
    %v2718 = vand.u32 %v280, 2139095040
    %v2719 = vshrl.u32 %v2718, 23
    %v2720 = vsub.s32 %v2719, 127
    %v2721 = vand.u32 2147483647, %v280
    %v2722 = vand.u32 %v2721, 8388607
    %v2723 = vor.u32 %v2722, 8388608
    %v2724 = vsub.s32 0, %v2723
    %v2725 = vadd.s32 %v2720, 1
    %vm2726 = vcmp.gt.s32.totalorder %v2725, 0
    %v2727 = vsel %vm2726, %v2725, 0
    %v2728 = vshrl.u32 %v2727, 5
    %v2729 = vand.u32 %v2727, 31
    %v2730 = vsub.s32 32, %v2729
    %v2731 = vshrl.u32 683565275, %v2730
    %v2732 = vshll.u32 683565275, %v2729
    %v2733 = vshrl.u32 2475754826, %v2730
    %v2734 = vor.u32 %v2732, %v2733
    %v2735 = vshll.u32 2475754826, %v2729
    %v2736 = vshrl.u32 2131351028, %v2730
    %v2737 = vor.u32 %v2735, %v2736
    %v2738 = vshll.u32 2131351028, %v2729
    %v2739 = vshrl.u32 2102212464, %v2730
    %v2740 = vor.u32 %v2738, %v2739
    %v2741 = vshll.u32 2102212464, %v2729
    %v2742 = vshrl.u32 920167782, %v2730
    %v2743 = vor.u32 %v2741, %v2742
    %v2744 = vshll.u32 920167782, %v2729
    %v2745 = vshrl.u32 1326507024, %v2730
    %v2746 = vor.u32 %v2744, %v2745
    %vm2747 = vcmp.lt.s32.totalorder %v2728, 1
    %vm2748 = vcmp.lt.s32.totalorder %v2728, 2
    %vm2749 = vcmp.lt.s32.totalorder %v2728, 3
    %vm2750 = vcmp.lt.s32.totalorder %v2728, 4
    %v2751 = vsel %vm2747, %v2731, %v2734
    %v2752 = vsel %vm2750, %v2740, 2102212464
    %v2753 = vsel %vm2749, %v2737, %v2752
    %v2754 = vsel %vm2748, %v2751, %v2753
    %v2755 = vsel %vm2747, %v2734, %v2737
    %v2756 = vsel %vm2750, %v2743, 920167782
    %v2757 = vsel %vm2749, %v2740, %v2756
    %v2758 = vsel %vm2748, %v2755, %v2757
    %v2759 = vsel %vm2747, %v2737, %v2740
    %v2760 = vsel %vm2750, %v2746, 1326507024
    %v2761 = vsel %vm2749, %v2743, %v2760
    %v2762 = vsel %vm2748, %v2759, %v2761
    %v2763 = vshll.u32 %v2723, 8
    %v2764 = vmul.u32.u64.compose %v2763, %v2762
    %v2765 = vextract.low.u32 %v2764
    %v2766 = vextract.high.u32 %v2764
    %v2767 = vmul.u32.u64.compose %v2763, %v2758
    %v2768 = vextract.low.u32 %v2767
    %v2769 = vextract.high.u32 %v2767
    %v2770 = vmul.u32 %v2763, %v2754
    %v2771 = vadd.s32 %v2766, %v2768
    %vm2772 = vc.u32 %v2766, %v2768
    %v2773 = vadd.s32 %v2769, 1
    %v2774 = vsel %vm2772, %v2773, %v2769
    %v2775 = vadd.s32 %v2770, %v2774
    %v2776 = vadd.s32 %v2775, 536870912
    %v2777 = vshrl.u32 %v2776, 30
    %v2778 = vshll.u32 %v2777, 30
    %v2779 = vsub.s32 %v2775, %v2778
    %vm2780 = vcmp.lt.s32.totalorder %v2779, 0
    %v2781 = vsub.s32 0, %v2779
    %v2782 = vsel %vm2780, %v2781, %v2779
    %v2783 = vclz %v2782
    %v2784 = vsub.s32 %v2783, 2
    %vm2785 = vcmp.gt.s32.totalorder 0, %v2784
    %v2786 = vsel %vm2785, 0, %v2784
    %v2787 = vsub.s32 32, %v2786
    %v2788 = vshll.u32 %v2779, %v2786
    %v2789 = vshrl.u32 %v2771, %v2787
    %v2790 = vor.u32 %v2788, %v2789
    %v2791 = vsub.s32 4294967266, %v2786
    %v2792 = vadd.s32 %v2791, 127
    %v2793 = vshll.u32 %v2792, 23
    %v2794 = vor.u32 4788187, %v2793
    %v2795 = vand.u32 2147483647, %v2794
    %v2797 = vcvt.s32.f32 %v2790
    %v2798 = vmul.f32 %v2797, %v2795
    %v2799 = vxor.u32 %v2798, 2147483648
    %v2800 = vsel %vm2717, %v2799, %v2798
    %v2801 = vsub.s32 4, %v2777
    %v2802 = vsel %vm2717, %v2801, %v2777
    %v2803 = vsel %vm2716, %v280, %v2800
    %v2804 = vsel %vm2716, 0, %v2802
    %v2805 = vcosq.f32.pop %v2803
    %v2806 = vsinq.f32.pop %v2803
    %vm2807 = vweird.f32 %v280
    %v2808 = vadd.s32 %v2804, 3
    %v2809 = vand.u32 %v2808, 3
    %vm2810 = vcmp.lt.s32.totalorder %v2809, 2
    %vm2811 = vcmp.eq.s32.totalorder %v2809, 0
    %v2812 = vxor.u32 %v2806, 2147483648
    %v2813 = vsel %vm2811, %v2805, %v2812
    %vm2814 = vcmp.eq.s32.totalorder %v2809, 2
    %v2815 = vxor.u32 %v2805, 2147483648
    %v2816 = vsel %vm2814, %v2815, %v2806
    %v2817 = vsel %vm2810, %v2813, %v2816
    %v2818 = vsel %vm2807, nan, %v2817
    %v2819 = vand.u32 2147483647, %v285
    %vm2820 = vcmp.le.f32.partialorder %v2819, 0.7853982
    %vm2821 = vcmp.lt.s32.totalorder %v285, 0
    %v2822 = vand.u32 %v285, 2139095040
    %v2823 = vshrl.u32 %v2822, 23
    %v2824 = vsub.s32 %v2823, 127
    %v2825 = vand.u32 2147483647, %v285
    %v2826 = vand.u32 %v2825, 8388607
    %v2827 = vor.u32 %v2826, 8388608
    %v2828 = vsub.s32 0, %v2827
    %v2829 = vadd.s32 %v2824, 1
    %vm2830 = vcmp.gt.s32.totalorder %v2829, 0
    %v2831 = vsel %vm2830, %v2829, 0
    %v2832 = vshrl.u32 %v2831, 5
    %v2833 = vand.u32 %v2831, 31
    %v2834 = vsub.s32 32, %v2833
    %v2835 = vshrl.u32 683565275, %v2834
    %v2836 = vshll.u32 683565275, %v2833
    %v2837 = vshrl.u32 2475754826, %v2834
    %v2838 = vor.u32 %v2836, %v2837
    %v2839 = vshll.u32 2475754826, %v2833
    %v2840 = vshrl.u32 2131351028, %v2834
    %v2841 = vor.u32 %v2839, %v2840
    %v2842 = vshll.u32 2131351028, %v2833
    %v2843 = vshrl.u32 2102212464, %v2834
    %v2844 = vor.u32 %v2842, %v2843
    %v2845 = vshll.u32 2102212464, %v2833
    %v2846 = vshrl.u32 920167782, %v2834
    %v2847 = vor.u32 %v2845, %v2846
    %v2848 = vshll.u32 920167782, %v2833
    %v2849 = vshrl.u32 1326507024, %v2834
    %v2850 = vor.u32 %v2848, %v2849
    %vm2851 = vcmp.lt.s32.totalorder %v2832, 1
    %vm2852 = vcmp.lt.s32.totalorder %v2832, 2
    %vm2853 = vcmp.lt.s32.totalorder %v2832, 3
    %vm2854 = vcmp.lt.s32.totalorder %v2832, 4
    %v2855 = vsel %vm2851, %v2835, %v2838
    %v2856 = vsel %vm2854, %v2844, 2102212464
    %v2857 = vsel %vm2853, %v2841, %v2856
    %v2858 = vsel %vm2852, %v2855, %v2857
    %v2859 = vsel %vm2851, %v2838, %v2841
    %v2860 = vsel %vm2854, %v2847, 920167782
    %v2861 = vsel %vm2853, %v2844, %v2860
    %v2862 = vsel %vm2852, %v2859, %v2861
    %v2863 = vsel %vm2851, %v2841, %v2844
    %v2864 = vsel %vm2854, %v2850, 1326507024
    %v2865 = vsel %vm2853, %v2847, %v2864
    %v2866 = vsel %vm2852, %v2863, %v2865
    %v2867 = vshll.u32 %v2827, 8
    %v2868 = vmul.u32.u64.compose %v2867, %v2866
    %v2869 = vextract.low.u32 %v2868
    %v2870 = vextract.high.u32 %v2868
    %v2871 = vmul.u32.u64.compose %v2867, %v2862
    %v2872 = vextract.low.u32 %v2871
    %v2873 = vextract.high.u32 %v2871
    %v2874 = vmul.u32 %v2867, %v2858
    %v2875 = vadd.s32 %v2870, %v2872
    %vm2876 = vc.u32 %v2870, %v2872
    %v2877 = vadd.s32 %v2873, 1
    %v2878 = vsel %vm2876, %v2877, %v2873
    %v2879 = vadd.s32 %v2874, %v2878
    %v2880 = vadd.s32 %v2879, 536870912
    %v2881 = vshrl.u32 %v2880, 30
    %v2882 = vshll.u32 %v2881, 30
    %v2883 = vsub.s32 %v2879, %v2882
    %vm2884 = vcmp.lt.s32.totalorder %v2883, 0
    %v2885 = vsub.s32 0, %v2883
    %v2886 = vsel %vm2884, %v2885, %v2883
    %v2887 = vclz %v2886
    %v2888 = vsub.s32 %v2887, 2
    %vm2889 = vcmp.gt.s32.totalorder 0, %v2888
    %v2890 = vsel %vm2889, 0, %v2888
    %v2891 = vsub.s32 32, %v2890
    %v2892 = vshll.u32 %v2883, %v2890
    %v2893 = vshrl.u32 %v2875, %v2891
    %v2894 = vor.u32 %v2892, %v2893
    %v2895 = vsub.s32 4294967266, %v2890
    %v2896 = vadd.s32 %v2895, 127
    %v2897 = vshll.u32 %v2896, 23
    %v2898 = vor.u32 4788187, %v2897
    %v2899 = vand.u32 2147483647, %v2898
    %v2901 = vcvt.s32.f32 %v2894
    %v2902 = vmul.f32 %v2901, %v2899
    %v2903 = vxor.u32 %v2902, 2147483648
    %v2904 = vsel %vm2821, %v2903, %v2902
    %v2905 = vsub.s32 4, %v2881
    %v2906 = vsel %vm2821, %v2905, %v2881
    %v2907 = vsel %vm2820, %v285, %v2904
    %v2908 = vsel %vm2820, 0, %v2906
    %v2909 = vcosq.f32.pop %v2907
    %v2910 = vsinq.f32.pop %v2907
    %vm2911 = vweird.f32 %v285
    %v2912 = vadd.s32 %v2908, 3
    %v2913 = vand.u32 %v2912, 3
    %vm2914 = vcmp.lt.s32.totalorder %v2913, 2
    %vm2915 = vcmp.eq.s32.totalorder %v2913, 0
    %v2916 = vxor.u32 %v2910, 2147483648
    %v2917 = vsel %vm2915, %v2909, %v2916
    %vm2918 = vcmp.eq.s32.totalorder %v2913, 2
    %v2919 = vxor.u32 %v2909, 2147483648
    %v2920 = vsel %vm2918, %v2919, %v2910
    %v2921 = vsel %vm2914, %v2917, %v2920
    %v2922 = vsel %vm2911, nan, %v2921
    %v2923 = vand.u32 2147483647, %v290
    %vm2924 = vcmp.le.f32.partialorder %v2923, 0.7853982
    %vm2925 = vcmp.lt.s32.totalorder %v290, 0
    %v2926 = vand.u32 %v290, 2139095040
    %v2927 = vshrl.u32 %v2926, 23
    %v2928 = vsub.s32 %v2927, 127
    %v2929 = vand.u32 2147483647, %v290
    %v2930 = vand.u32 %v2929, 8388607
    %v2931 = vor.u32 %v2930, 8388608
    %v2932 = vsub.s32 0, %v2931
    %v2933 = vadd.s32 %v2928, 1
    %vm2934 = vcmp.gt.s32.totalorder %v2933, 0
    %v2935 = vsel %vm2934, %v2933, 0
    %v2936 = vshrl.u32 %v2935, 5
    %v2937 = vand.u32 %v2935, 31
    %v2938 = vsub.s32 32, %v2937
    %v2939 = vshrl.u32 683565275, %v2938
    %v2940 = vshll.u32 683565275, %v2937
    %v2941 = vshrl.u32 2475754826, %v2938
    %v2942 = vor.u32 %v2940, %v2941
    %v2943 = vshll.u32 2475754826, %v2937
    %v2944 = vshrl.u32 2131351028, %v2938
    %v2945 = vor.u32 %v2943, %v2944
    %v2946 = vshll.u32 2131351028, %v2937
    %v2947 = vshrl.u32 2102212464, %v2938
    %v2948 = vor.u32 %v2946, %v2947
    %v2949 = vshll.u32 2102212464, %v2937
    %v2950 = vshrl.u32 920167782, %v2938
    %v2951 = vor.u32 %v2949, %v2950
    %v2952 = vshll.u32 920167782, %v2937
    %v2953 = vshrl.u32 1326507024, %v2938
    %v2954 = vor.u32 %v2952, %v2953
    %vm2955 = vcmp.lt.s32.totalorder %v2936, 1
    %vm2956 = vcmp.lt.s32.totalorder %v2936, 2
    %vm2957 = vcmp.lt.s32.totalorder %v2936, 3
    %vm2958 = vcmp.lt.s32.totalorder %v2936, 4
    %v2959 = vsel %vm2955, %v2939, %v2942
    %v2960 = vsel %vm2958, %v2948, 2102212464
    %v2961 = vsel %vm2957, %v2945, %v2960
    %v2962 = vsel %vm2956, %v2959, %v2961
    %v2963 = vsel %vm2955, %v2942, %v2945
    %v2964 = vsel %vm2958, %v2951, 920167782
    %v2965 = vsel %vm2957, %v2948, %v2964
    %v2966 = vsel %vm2956, %v2963, %v2965
    %v2967 = vsel %vm2955, %v2945, %v2948
    %v2968 = vsel %vm2958, %v2954, 1326507024
    %v2969 = vsel %vm2957, %v2951, %v2968
    %v2970 = vsel %vm2956, %v2967, %v2969
    %v2971 = vshll.u32 %v2931, 8
    %v2972 = vmul.u32.u64.compose %v2971, %v2970
    %v2973 = vextract.low.u32 %v2972
    %v2974 = vextract.high.u32 %v2972
    %v2975 = vmul.u32.u64.compose %v2971, %v2966
    %v2976 = vextract.low.u32 %v2975
    %v2977 = vextract.high.u32 %v2975
    %v2978 = vmul.u32 %v2971, %v2962
    %v2979 = vadd.s32 %v2974, %v2976
    %vm2980 = vc.u32 %v2974, %v2976
    %v2981 = vadd.s32 %v2977, 1
    %v2982 = vsel %vm2980, %v2981, %v2977
    %v2983 = vadd.s32 %v2978, %v2982
    %v2984 = vadd.s32 %v2983, 536870912
    %v2985 = vshrl.u32 %v2984, 30
    %v2986 = vshll.u32 %v2985, 30
    %v2987 = vsub.s32 %v2983, %v2986
    %vm2988 = vcmp.lt.s32.totalorder %v2987, 0
    %v2989 = vsub.s32 0, %v2987
    %v2990 = vsel %vm2988, %v2989, %v2987
    %v2991 = vclz %v2990
    %v2992 = vsub.s32 %v2991, 2
    %vm2993 = vcmp.gt.s32.totalorder 0, %v2992
    %v2994 = vsel %vm2993, 0, %v2992
    %v2995 = vsub.s32 32, %v2994
    %v2996 = vshll.u32 %v2987, %v2994
    %v2997 = vshrl.u32 %v2979, %v2995
    %v2998 = vor.u32 %v2996, %v2997
    %v2999 = vsub.s32 4294967266, %v2994
    %v3000 = vadd.s32 %v2999, 127
    %v3001 = vshll.u32 %v3000, 23
    %v3002 = vor.u32 4788187, %v3001
    %v3003 = vand.u32 2147483647, %v3002
    %v3005 = vcvt.s32.f32 %v2998
    %v3006 = vmul.f32 %v3005, %v3003
    %v3007 = vxor.u32 %v3006, 2147483648
    %v3008 = vsel %vm2925, %v3007, %v3006
    %v3009 = vsub.s32 4, %v2985
    %v3010 = vsel %vm2925, %v3009, %v2985
    %v3011 = vsel %vm2924, %v290, %v3008
    %v3012 = vsel %vm2924, 0, %v3010
    %v3013 = vcosq.f32.pop %v3011
    %v3014 = vsinq.f32.pop %v3011
    %vm3015 = vweird.f32 %v290
    %v3016 = vadd.s32 %v3012, 3
    %v3017 = vand.u32 %v3016, 3
    %vm3018 = vcmp.lt.s32.totalorder %v3017, 2
    %vm3019 = vcmp.eq.s32.totalorder %v3017, 0
    %v3020 = vxor.u32 %v3014, 2147483648
    %v3021 = vsel %vm3019, %v3013, %v3020
    %vm3022 = vcmp.eq.s32.totalorder %v3017, 2
    %v3023 = vxor.u32 %v3013, 2147483648
    %v3024 = vsel %vm3022, %v3023, %v3014
    %v3025 = vsel %vm3018, %v3021, %v3024
    %v3026 = vsel %vm3015, nan, %v3025
    %v3027 = vand.u32 2147483647, %v295
    %vm3028 = vcmp.le.f32.partialorder %v3027, 0.7853982
    %vm3029 = vcmp.lt.s32.totalorder %v295, 0
    %v3030 = vand.u32 %v295, 2139095040
    %v3031 = vshrl.u32 %v3030, 23
    %v3032 = vsub.s32 %v3031, 127
    %v3033 = vand.u32 2147483647, %v295
    %v3034 = vand.u32 %v3033, 8388607
    %v3035 = vor.u32 %v3034, 8388608
    %v3036 = vsub.s32 0, %v3035
    %v3037 = vadd.s32 %v3032, 1
    %vm3038 = vcmp.gt.s32.totalorder %v3037, 0
    %v3039 = vsel %vm3038, %v3037, 0
    %v3040 = vshrl.u32 %v3039, 5
    %v3041 = vand.u32 %v3039, 31
    %v3042 = vsub.s32 32, %v3041
    %v3043 = vshrl.u32 683565275, %v3042
    %v3044 = vshll.u32 683565275, %v3041
    %v3045 = vshrl.u32 2475754826, %v3042
    %v3046 = vor.u32 %v3044, %v3045
    %v3047 = vshll.u32 2475754826, %v3041
    %v3048 = vshrl.u32 2131351028, %v3042
    %v3049 = vor.u32 %v3047, %v3048
    %v3050 = vshll.u32 2131351028, %v3041
    %v3051 = vshrl.u32 2102212464, %v3042
    %v3052 = vor.u32 %v3050, %v3051
    %v3053 = vshll.u32 2102212464, %v3041
    %v3054 = vshrl.u32 920167782, %v3042
    %v3055 = vor.u32 %v3053, %v3054
    %v3056 = vshll.u32 920167782, %v3041
    %v3057 = vshrl.u32 1326507024, %v3042
    %v3058 = vor.u32 %v3056, %v3057
    %vm3059 = vcmp.lt.s32.totalorder %v3040, 1
    %vm3060 = vcmp.lt.s32.totalorder %v3040, 2
    %vm3061 = vcmp.lt.s32.totalorder %v3040, 3
    %vm3062 = vcmp.lt.s32.totalorder %v3040, 4
    %v3063 = vsel %vm3059, %v3043, %v3046
    %v3064 = vsel %vm3062, %v3052, 2102212464
    %v3065 = vsel %vm3061, %v3049, %v3064
    %v3066 = vsel %vm3060, %v3063, %v3065
    %v3067 = vsel %vm3059, %v3046, %v3049
    %v3068 = vsel %vm3062, %v3055, 920167782
    %v3069 = vsel %vm3061, %v3052, %v3068
    %v3070 = vsel %vm3060, %v3067, %v3069
    %v3071 = vsel %vm3059, %v3049, %v3052
    %v3072 = vsel %vm3062, %v3058, 1326507024
    %v3073 = vsel %vm3061, %v3055, %v3072
    %v3074 = vsel %vm3060, %v3071, %v3073
    %v3075 = vshll.u32 %v3035, 8
    %v3076 = vmul.u32.u64.compose %v3075, %v3074
    %v3077 = vextract.low.u32 %v3076
    %v3078 = vextract.high.u32 %v3076
    %v3079 = vmul.u32.u64.compose %v3075, %v3070
    %v3080 = vextract.low.u32 %v3079
    %v3081 = vextract.high.u32 %v3079
    %v3082 = vmul.u32 %v3075, %v3066
    %v3083 = vadd.s32 %v3078, %v3080
    %vm3084 = vc.u32 %v3078, %v3080
    %v3085 = vadd.s32 %v3081, 1
    %v3086 = vsel %vm3084, %v3085, %v3081
    %v3087 = vadd.s32 %v3082, %v3086
    %v3088 = vadd.s32 %v3087, 536870912
    %v3089 = vshrl.u32 %v3088, 30
    %v3090 = vshll.u32 %v3089, 30
    %v3091 = vsub.s32 %v3087, %v3090
    %vm3092 = vcmp.lt.s32.totalorder %v3091, 0
    %v3093 = vsub.s32 0, %v3091
    %v3094 = vsel %vm3092, %v3093, %v3091
    %v3095 = vclz %v3094
    %v3096 = vsub.s32 %v3095, 2
    %vm3097 = vcmp.gt.s32.totalorder 0, %v3096
    %v3098 = vsel %vm3097, 0, %v3096
    %v3099 = vsub.s32 32, %v3098
    %v3100 = vshll.u32 %v3091, %v3098
    %v3101 = vshrl.u32 %v3083, %v3099
    %v3102 = vor.u32 %v3100, %v3101
    %v3103 = vsub.s32 4294967266, %v3098
    %v3104 = vadd.s32 %v3103, 127
    %v3105 = vshll.u32 %v3104, 23
    %v3106 = vor.u32 4788187, %v3105
    %v3107 = vand.u32 2147483647, %v3106
    %v3109 = vcvt.s32.f32 %v3102
    %v3110 = vmul.f32 %v3109, %v3107
    %v3111 = vxor.u32 %v3110, 2147483648
    %v3112 = vsel %vm3029, %v3111, %v3110
    %v3113 = vsub.s32 4, %v3089
    %v3114 = vsel %vm3029, %v3113, %v3089
    %v3115 = vsel %vm3028, %v295, %v3112
    %v3116 = vsel %vm3028, 0, %v3114
    %v3117 = vcosq.f32.pop %v3115
    %v3118 = vsinq.f32.pop %v3115
    %vm3119 = vweird.f32 %v295
    %v3120 = vadd.s32 %v3116, 3
    %v3121 = vand.u32 %v3120, 3
    %vm3122 = vcmp.lt.s32.totalorder %v3121, 2
    %vm3123 = vcmp.eq.s32.totalorder %v3121, 0
    %v3124 = vxor.u32 %v3118, 2147483648
    %v3125 = vsel %vm3123, %v3117, %v3124
    %vm3126 = vcmp.eq.s32.totalorder %v3121, 2
    %v3127 = vxor.u32 %v3117, 2147483648
    %v3128 = vsel %vm3126, %v3127, %v3118
    %v3129 = vsel %vm3122, %v3125, %v3128
    %v3130 = vsel %vm3119, nan, %v3129
    %v3131 = vand.u32 2147483647, %v300
    %vm3132 = vcmp.le.f32.partialorder %v3131, 0.7853982
    %vm3133 = vcmp.lt.s32.totalorder %v300, 0
    %v3134 = vand.u32 %v300, 2139095040
    %v3135 = vshrl.u32 %v3134, 23
    %v3136 = vsub.s32 %v3135, 127
    %v3137 = vand.u32 2147483647, %v300
    %v3138 = vand.u32 %v3137, 8388607
    %v3139 = vor.u32 %v3138, 8388608
    %v3140 = vsub.s32 0, %v3139
    %v3141 = vadd.s32 %v3136, 1
    %vm3142 = vcmp.gt.s32.totalorder %v3141, 0
    %v3143 = vsel %vm3142, %v3141, 0
    %v3144 = vshrl.u32 %v3143, 5
    %v3145 = vand.u32 %v3143, 31
    %v3146 = vsub.s32 32, %v3145
    %v3147 = vshrl.u32 683565275, %v3146
    %v3148 = vshll.u32 683565275, %v3145
    %v3149 = vshrl.u32 2475754826, %v3146
    %v3150 = vor.u32 %v3148, %v3149
    %v3151 = vshll.u32 2475754826, %v3145
    %v3152 = vshrl.u32 2131351028, %v3146
    %v3153 = vor.u32 %v3151, %v3152
    %v3154 = vshll.u32 2131351028, %v3145
    %v3155 = vshrl.u32 2102212464, %v3146
    %v3156 = vor.u32 %v3154, %v3155
    %v3157 = vshll.u32 2102212464, %v3145
    %v3158 = vshrl.u32 920167782, %v3146
    %v3159 = vor.u32 %v3157, %v3158
    %v3160 = vshll.u32 920167782, %v3145
    %v3161 = vshrl.u32 1326507024, %v3146
    %v3162 = vor.u32 %v3160, %v3161
    %vm3163 = vcmp.lt.s32.totalorder %v3144, 1
    %vm3164 = vcmp.lt.s32.totalorder %v3144, 2
    %vm3165 = vcmp.lt.s32.totalorder %v3144, 3
    %vm3166 = vcmp.lt.s32.totalorder %v3144, 4
    %v3167 = vsel %vm3163, %v3147, %v3150
    %v3168 = vsel %vm3166, %v3156, 2102212464
    %v3169 = vsel %vm3165, %v3153, %v3168
    %v3170 = vsel %vm3164, %v3167, %v3169
    %v3171 = vsel %vm3163, %v3150, %v3153
    %v3172 = vsel %vm3166, %v3159, 920167782
    %v3173 = vsel %vm3165, %v3156, %v3172
    %v3174 = vsel %vm3164, %v3171, %v3173
    %v3175 = vsel %vm3163, %v3153, %v3156
    %v3176 = vsel %vm3166, %v3162, 1326507024
    %v3177 = vsel %vm3165, %v3159, %v3176
    %v3178 = vsel %vm3164, %v3175, %v3177
    %v3179 = vshll.u32 %v3139, 8
    %v3180 = vmul.u32.u64.compose %v3179, %v3178
    %v3181 = vextract.low.u32 %v3180
    %v3182 = vextract.high.u32 %v3180
    %v3183 = vmul.u32.u64.compose %v3179, %v3174
    %v3184 = vextract.low.u32 %v3183
    %v3185 = vextract.high.u32 %v3183
    %v3186 = vmul.u32 %v3179, %v3170
    %v3187 = vadd.s32 %v3182, %v3184
    %vm3188 = vc.u32 %v3182, %v3184
    %v3189 = vadd.s32 %v3185, 1
    %v3190 = vsel %vm3188, %v3189, %v3185
    %v3191 = vadd.s32 %v3186, %v3190
    %v3192 = vadd.s32 %v3191, 536870912
    %v3193 = vshrl.u32 %v3192, 30
    %v3194 = vshll.u32 %v3193, 30
    %v3195 = vsub.s32 %v3191, %v3194
    %vm3196 = vcmp.lt.s32.totalorder %v3195, 0
    %v3197 = vsub.s32 0, %v3195
    %v3198 = vsel %vm3196, %v3197, %v3195
    %v3199 = vclz %v3198
    %v3200 = vsub.s32 %v3199, 2
    %vm3201 = vcmp.gt.s32.totalorder 0, %v3200
    %v3202 = vsel %vm3201, 0, %v3200
    %v3203 = vsub.s32 32, %v3202
    %v3204 = vshll.u32 %v3195, %v3202
    %v3205 = vshrl.u32 %v3187, %v3203
    %v3206 = vor.u32 %v3204, %v3205
    %v3207 = vsub.s32 4294967266, %v3202
    %v3208 = vadd.s32 %v3207, 127
    %v3209 = vshll.u32 %v3208, 23
    %v3210 = vor.u32 4788187, %v3209
    %v3211 = vand.u32 2147483647, %v3210
    %v3213 = vcvt.s32.f32 %v3206
    %v3214 = vmul.f32 %v3213, %v3211
    %v3215 = vxor.u32 %v3214, 2147483648
    %v3216 = vsel %vm3133, %v3215, %v3214
    %v3217 = vsub.s32 4, %v3193
    %v3218 = vsel %vm3133, %v3217, %v3193
    %v3219 = vsel %vm3132, %v300, %v3216
    %v3220 = vsel %vm3132, 0, %v3218
    %v3221 = vcosq.f32.pop %v3219
    %v3222 = vsinq.f32.pop %v3219
    %vm3223 = vweird.f32 %v300
    %v3224 = vadd.s32 %v3220, 3
    %v3225 = vand.u32 %v3224, 3
    %vm3226 = vcmp.lt.s32.totalorder %v3225, 2
    %vm3227 = vcmp.eq.s32.totalorder %v3225, 0
    %v3228 = vxor.u32 %v3222, 2147483648
    %v3229 = vsel %vm3227, %v3221, %v3228
    %vm3230 = vcmp.eq.s32.totalorder %v3225, 2
    %v3231 = vxor.u32 %v3221, 2147483648
    %v3232 = vsel %vm3230, %v3231, %v3222
    %v3233 = vsel %vm3226, %v3229, %v3232
    %v3234 = vsel %vm3223, nan, %v3233
    %v3235 = vand.u32 2147483647, %v305
    %vm3236 = vcmp.le.f32.partialorder %v3235, 0.7853982
    %vm3237 = vcmp.lt.s32.totalorder %v305, 0
    %v3238 = vand.u32 %v305, 2139095040
    %v3239 = vshrl.u32 %v3238, 23
    %v3240 = vsub.s32 %v3239, 127
    %v3241 = vand.u32 2147483647, %v305
    %v3242 = vand.u32 %v3241, 8388607
    %v3243 = vor.u32 %v3242, 8388608
    %v3244 = vsub.s32 0, %v3243
    %v3245 = vadd.s32 %v3240, 1
    %vm3246 = vcmp.gt.s32.totalorder %v3245, 0
    %v3247 = vsel %vm3246, %v3245, 0
    %v3248 = vshrl.u32 %v3247, 5
    %v3249 = vand.u32 %v3247, 31
    %v3250 = vsub.s32 32, %v3249
    %v3251 = vshrl.u32 683565275, %v3250
    %v3252 = vshll.u32 683565275, %v3249
    %v3253 = vshrl.u32 2475754826, %v3250
    %v3254 = vor.u32 %v3252, %v3253
    %v3255 = vshll.u32 2475754826, %v3249
    %v3256 = vshrl.u32 2131351028, %v3250
    %v3257 = vor.u32 %v3255, %v3256
    %v3258 = vshll.u32 2131351028, %v3249
    %v3259 = vshrl.u32 2102212464, %v3250
    %v3260 = vor.u32 %v3258, %v3259
    %v3261 = vshll.u32 2102212464, %v3249
    %v3262 = vshrl.u32 920167782, %v3250
    %v3263 = vor.u32 %v3261, %v3262
    %v3264 = vshll.u32 920167782, %v3249
    %v3265 = vshrl.u32 1326507024, %v3250
    %v3266 = vor.u32 %v3264, %v3265
    %vm3267 = vcmp.lt.s32.totalorder %v3248, 1
    %vm3268 = vcmp.lt.s32.totalorder %v3248, 2
    %vm3269 = vcmp.lt.s32.totalorder %v3248, 3
    %vm3270 = vcmp.lt.s32.totalorder %v3248, 4
    %v3271 = vsel %vm3267, %v3251, %v3254
    %v3272 = vsel %vm3270, %v3260, 2102212464
    %v3273 = vsel %vm3269, %v3257, %v3272
    %v3274 = vsel %vm3268, %v3271, %v3273
    %v3275 = vsel %vm3267, %v3254, %v3257
    %v3276 = vsel %vm3270, %v3263, 920167782
    %v3277 = vsel %vm3269, %v3260, %v3276
    %v3278 = vsel %vm3268, %v3275, %v3277
    %v3279 = vsel %vm3267, %v3257, %v3260
    %v3280 = vsel %vm3270, %v3266, 1326507024
    %v3281 = vsel %vm3269, %v3263, %v3280
    %v3282 = vsel %vm3268, %v3279, %v3281
    %v3283 = vshll.u32 %v3243, 8
    %v3284 = vmul.u32.u64.compose %v3283, %v3282
    %v3285 = vextract.low.u32 %v3284
    %v3286 = vextract.high.u32 %v3284
    %v3287 = vmul.u32.u64.compose %v3283, %v3278
    %v3288 = vextract.low.u32 %v3287
    %v3289 = vextract.high.u32 %v3287
    %v3290 = vmul.u32 %v3283, %v3274
    %v3291 = vadd.s32 %v3286, %v3288
    %vm3292 = vc.u32 %v3286, %v3288
    %v3293 = vadd.s32 %v3289, 1
    %v3294 = vsel %vm3292, %v3293, %v3289
    %v3295 = vadd.s32 %v3290, %v3294
    %v3296 = vadd.s32 %v3295, 536870912
    %v3297 = vshrl.u32 %v3296, 30
    %v3298 = vshll.u32 %v3297, 30
    %v3299 = vsub.s32 %v3295, %v3298
    %vm3300 = vcmp.lt.s32.totalorder %v3299, 0
    %v3301 = vsub.s32 0, %v3299
    %v3302 = vsel %vm3300, %v3301, %v3299
    %v3303 = vclz %v3302
    %v3304 = vsub.s32 %v3303, 2
    %vm3305 = vcmp.gt.s32.totalorder 0, %v3304
    %v3306 = vsel %vm3305, 0, %v3304
    %v3307 = vsub.s32 32, %v3306
    %v3308 = vshll.u32 %v3299, %v3306
    %v3309 = vshrl.u32 %v3291, %v3307
    %v3310 = vor.u32 %v3308, %v3309
    %v3311 = vsub.s32 4294967266, %v3306
    %v3312 = vadd.s32 %v3311, 127
    %v3313 = vshll.u32 %v3312, 23
    %v3314 = vor.u32 4788187, %v3313
    %v3315 = vand.u32 2147483647, %v3314
    %v3317 = vcvt.s32.f32 %v3310
    %v3318 = vmul.f32 %v3317, %v3315
    %v3319 = vxor.u32 %v3318, 2147483648
    %v3320 = vsel %vm3237, %v3319, %v3318
    %v3321 = vsub.s32 4, %v3297
    %v3322 = vsel %vm3237, %v3321, %v3297
    %v3323 = vsel %vm3236, %v305, %v3320
    %v3324 = vsel %vm3236, 0, %v3322
    %v3325 = vcosq.f32.pop %v3323
    %v3326 = vsinq.f32.pop %v3323
    %vm3327 = vweird.f32 %v305
    %v3328 = vadd.s32 %v3324, 3
    %v3329 = vand.u32 %v3328, 3
    %vm3330 = vcmp.lt.s32.totalorder %v3329, 2
    %vm3331 = vcmp.eq.s32.totalorder %v3329, 0
    %v3332 = vxor.u32 %v3326, 2147483648
    %v3333 = vsel %vm3331, %v3325, %v3332
    %vm3334 = vcmp.eq.s32.totalorder %v3329, 2
    %v3335 = vxor.u32 %v3325, 2147483648
    %v3336 = vsel %vm3334, %v3335, %v3326
    %v3337 = vsel %vm3330, %v3333, %v3336
    %v3338 = vsel %vm3327, nan, %v3337
    %v3339 = vand.u32 2147483647, %v310
    %vm3340 = vcmp.le.f32.partialorder %v3339, 0.7853982
    %vm3341 = vcmp.lt.s32.totalorder %v310, 0
    %v3342 = vand.u32 %v310, 2139095040
    %v3343 = vshrl.u32 %v3342, 23
    %v3344 = vsub.s32 %v3343, 127
    %v3345 = vand.u32 2147483647, %v310
    %v3346 = vand.u32 %v3345, 8388607
    %v3347 = vor.u32 %v3346, 8388608
    %v3348 = vsub.s32 0, %v3347
    %v3349 = vadd.s32 %v3344, 1
    %vm3350 = vcmp.gt.s32.totalorder %v3349, 0
    %v3351 = vsel %vm3350, %v3349, 0
    %v3352 = vshrl.u32 %v3351, 5
    %v3353 = vand.u32 %v3351, 31
    %v3354 = vsub.s32 32, %v3353
    %v3355 = vshrl.u32 683565275, %v3354
    %v3356 = vshll.u32 683565275, %v3353
    %v3357 = vshrl.u32 2475754826, %v3354
    %v3358 = vor.u32 %v3356, %v3357
    %v3359 = vshll.u32 2475754826, %v3353
    %v3360 = vshrl.u32 2131351028, %v3354
    %v3361 = vor.u32 %v3359, %v3360
    %v3362 = vshll.u32 2131351028, %v3353
    %v3363 = vshrl.u32 2102212464, %v3354
    %v3364 = vor.u32 %v3362, %v3363
    %v3365 = vshll.u32 2102212464, %v3353
    %v3366 = vshrl.u32 920167782, %v3354
    %v3367 = vor.u32 %v3365, %v3366
    %v3368 = vshll.u32 920167782, %v3353
    %v3369 = vshrl.u32 1326507024, %v3354
    %v3370 = vor.u32 %v3368, %v3369
    %vm3371 = vcmp.lt.s32.totalorder %v3352, 1
    %vm3372 = vcmp.lt.s32.totalorder %v3352, 2
    %vm3373 = vcmp.lt.s32.totalorder %v3352, 3
    %vm3374 = vcmp.lt.s32.totalorder %v3352, 4
    %v3375 = vsel %vm3371, %v3355, %v3358
    %v3376 = vsel %vm3374, %v3364, 2102212464
    %v3377 = vsel %vm3373, %v3361, %v3376
    %v3378 = vsel %vm3372, %v3375, %v3377
    %v3379 = vsel %vm3371, %v3358, %v3361
    %v3380 = vsel %vm3374, %v3367, 920167782
    %v3381 = vsel %vm3373, %v3364, %v3380
    %v3382 = vsel %vm3372, %v3379, %v3381
    %v3383 = vsel %vm3371, %v3361, %v3364
    %v3384 = vsel %vm3374, %v3370, 1326507024
    %v3385 = vsel %vm3373, %v3367, %v3384
    %v3386 = vsel %vm3372, %v3383, %v3385
    %v3387 = vshll.u32 %v3347, 8
    %v3388 = vmul.u32.u64.compose %v3387, %v3386
    %v3389 = vextract.low.u32 %v3388
    %v3390 = vextract.high.u32 %v3388
    %v3391 = vmul.u32.u64.compose %v3387, %v3382
    %v3392 = vextract.low.u32 %v3391
    %v3393 = vextract.high.u32 %v3391
    %v3394 = vmul.u32 %v3387, %v3378
    %v3395 = vadd.s32 %v3390, %v3392
    %vm3396 = vc.u32 %v3390, %v3392
    %v3397 = vadd.s32 %v3393, 1
    %v3398 = vsel %vm3396, %v3397, %v3393
    %v3399 = vadd.s32 %v3394, %v3398
    %v3400 = vadd.s32 %v3399, 536870912
    %v3401 = vshrl.u32 %v3400, 30
    %v3402 = vshll.u32 %v3401, 30
    %v3403 = vsub.s32 %v3399, %v3402
    %vm3404 = vcmp.lt.s32.totalorder %v3403, 0
    %v3405 = vsub.s32 0, %v3403
    %v3406 = vsel %vm3404, %v3405, %v3403
    %v3407 = vclz %v3406
    %v3408 = vsub.s32 %v3407, 2
    %vm3409 = vcmp.gt.s32.totalorder 0, %v3408
    %v3410 = vsel %vm3409, 0, %v3408
    %v3411 = vsub.s32 32, %v3410
    %v3412 = vshll.u32 %v3403, %v3410
    %v3413 = vshrl.u32 %v3395, %v3411
    %v3414 = vor.u32 %v3412, %v3413
    %v3415 = vsub.s32 4294967266, %v3410
    %v3416 = vadd.s32 %v3415, 127
    %v3417 = vshll.u32 %v3416, 23
    %v3418 = vor.u32 4788187, %v3417
    %v3419 = vand.u32 2147483647, %v3418
    %v3421 = vcvt.s32.f32 %v3414
    %v3422 = vmul.f32 %v3421, %v3419
    %v3423 = vxor.u32 %v3422, 2147483648
    %v3424 = vsel %vm3341, %v3423, %v3422
    %v3425 = vsub.s32 4, %v3401
    %v3426 = vsel %vm3341, %v3425, %v3401
    %v3427 = vsel %vm3340, %v310, %v3424
    %v3428 = vsel %vm3340, 0, %v3426
    %v3429 = vcosq.f32.pop %v3427
    %v3430 = vsinq.f32.pop %v3427
    %vm3431 = vweird.f32 %v310
    %v3432 = vadd.s32 %v3428, 3
    %v3433 = vand.u32 %v3432, 3
    %vm3434 = vcmp.lt.s32.totalorder %v3433, 2
    %vm3435 = vcmp.eq.s32.totalorder %v3433, 0
    %v3436 = vxor.u32 %v3430, 2147483648
    %v3437 = vsel %vm3435, %v3429, %v3436
    %vm3438 = vcmp.eq.s32.totalorder %v3433, 2
    %v3439 = vxor.u32 %v3429, 2147483648
    %v3440 = vsel %vm3438, %v3439, %v3430
    %v3441 = vsel %vm3434, %v3437, %v3440
    %v3442 = vsel %vm3431, nan, %v3441
    %v3443 = vand.u32 2147483647, %v315
    %vm3444 = vcmp.le.f32.partialorder %v3443, 0.7853982
    %vm3445 = vcmp.lt.s32.totalorder %v315, 0
    %v3446 = vand.u32 %v315, 2139095040
    %v3447 = vshrl.u32 %v3446, 23
    %v3448 = vsub.s32 %v3447, 127
    %v3449 = vand.u32 2147483647, %v315
    %v3450 = vand.u32 %v3449, 8388607
    %v3451 = vor.u32 %v3450, 8388608
    %v3452 = vsub.s32 0, %v3451
    %v3453 = vadd.s32 %v3448, 1
    %vm3454 = vcmp.gt.s32.totalorder %v3453, 0
    %v3455 = vsel %vm3454, %v3453, 0
    %v3456 = vshrl.u32 %v3455, 5
    %v3457 = vand.u32 %v3455, 31
    %v3458 = vsub.s32 32, %v3457
    %v3459 = vshrl.u32 683565275, %v3458
    %v3460 = vshll.u32 683565275, %v3457
    %v3461 = vshrl.u32 2475754826, %v3458
    %v3462 = vor.u32 %v3460, %v3461
    %v3463 = vshll.u32 2475754826, %v3457
    %v3464 = vshrl.u32 2131351028, %v3458
    %v3465 = vor.u32 %v3463, %v3464
    %v3466 = vshll.u32 2131351028, %v3457
    %v3467 = vshrl.u32 2102212464, %v3458
    %v3468 = vor.u32 %v3466, %v3467
    %v3469 = vshll.u32 2102212464, %v3457
    %v3470 = vshrl.u32 920167782, %v3458
    %v3471 = vor.u32 %v3469, %v3470
    %v3472 = vshll.u32 920167782, %v3457
    %v3473 = vshrl.u32 1326507024, %v3458
    %v3474 = vor.u32 %v3472, %v3473
    %vm3475 = vcmp.lt.s32.totalorder %v3456, 1
    %vm3476 = vcmp.lt.s32.totalorder %v3456, 2
    %vm3477 = vcmp.lt.s32.totalorder %v3456, 3
    %vm3478 = vcmp.lt.s32.totalorder %v3456, 4
    %v3479 = vsel %vm3475, %v3459, %v3462
    %v3480 = vsel %vm3478, %v3468, 2102212464
    %v3481 = vsel %vm3477, %v3465, %v3480
    %v3482 = vsel %vm3476, %v3479, %v3481
    %v3483 = vsel %vm3475, %v3462, %v3465
    %v3484 = vsel %vm3478, %v3471, 920167782
    %v3485 = vsel %vm3477, %v3468, %v3484
    %v3486 = vsel %vm3476, %v3483, %v3485
    %v3487 = vsel %vm3475, %v3465, %v3468
    %v3488 = vsel %vm3478, %v3474, 1326507024
    %v3489 = vsel %vm3477, %v3471, %v3488
    %v3490 = vsel %vm3476, %v3487, %v3489
    %v3491 = vshll.u32 %v3451, 8
    %v3492 = vmul.u32.u64.compose %v3491, %v3490
    %v3493 = vextract.low.u32 %v3492
    %v3494 = vextract.high.u32 %v3492
    %v3495 = vmul.u32.u64.compose %v3491, %v3486
    %v3496 = vextract.low.u32 %v3495
    %v3497 = vextract.high.u32 %v3495
    %v3498 = vmul.u32 %v3491, %v3482
    %v3499 = vadd.s32 %v3494, %v3496
    %vm3500 = vc.u32 %v3494, %v3496
    %v3501 = vadd.s32 %v3497, 1
    %v3502 = vsel %vm3500, %v3501, %v3497
    %v3503 = vadd.s32 %v3498, %v3502
    %v3504 = vadd.s32 %v3503, 536870912
    %v3505 = vshrl.u32 %v3504, 30
    %v3506 = vshll.u32 %v3505, 30
    %v3507 = vsub.s32 %v3503, %v3506
    %vm3508 = vcmp.lt.s32.totalorder %v3507, 0
    %v3509 = vsub.s32 0, %v3507
    %v3510 = vsel %vm3508, %v3509, %v3507
    %v3511 = vclz %v3510
    %v3512 = vsub.s32 %v3511, 2
    %vm3513 = vcmp.gt.s32.totalorder 0, %v3512
    %v3514 = vsel %vm3513, 0, %v3512
    %v3515 = vsub.s32 32, %v3514
    %v3516 = vshll.u32 %v3507, %v3514
    %v3517 = vshrl.u32 %v3499, %v3515
    %v3518 = vor.u32 %v3516, %v3517
    %v3519 = vsub.s32 4294967266, %v3514
    %v3520 = vadd.s32 %v3519, 127
    %v3521 = vshll.u32 %v3520, 23
    %v3522 = vor.u32 4788187, %v3521
    %v3523 = vand.u32 2147483647, %v3522
    %v3525 = vcvt.s32.f32 %v3518
    %v3526 = vmul.f32 %v3525, %v3523
    %v3527 = vxor.u32 %v3526, 2147483648
    %v3528 = vsel %vm3445, %v3527, %v3526
    %v3529 = vsub.s32 4, %v3505
    %v3530 = vsel %vm3445, %v3529, %v3505
    %v3531 = vsel %vm3444, %v315, %v3528
    %v3532 = vsel %vm3444, 0, %v3530
    %v3533 = vcosq.f32.pop %v3531
    %v3534 = vsinq.f32.pop %v3531
    %vm3535 = vweird.f32 %v315
    %v3536 = vadd.s32 %v3532, 3
    %v3537 = vand.u32 %v3536, 3
    %vm3538 = vcmp.lt.s32.totalorder %v3537, 2
    %vm3539 = vcmp.eq.s32.totalorder %v3537, 0
    %v3540 = vxor.u32 %v3534, 2147483648
    %v3541 = vsel %vm3539, %v3533, %v3540
    %vm3542 = vcmp.eq.s32.totalorder %v3537, 2
    %v3543 = vxor.u32 %v3533, 2147483648
    %v3544 = vsel %vm3542, %v3543, %v3534
    %v3545 = vsel %vm3538, %v3541, %v3544
    %v3546 = vsel %vm3535, nan, %v3545
    %v3547 = vand.u32 2147483647, %v320
    %vm3548 = vcmp.le.f32.partialorder %v3547, 0.7853982
    %vm3549 = vcmp.lt.s32.totalorder %v320, 0
    %v3550 = vand.u32 %v320, 2139095040
    %v3551 = vshrl.u32 %v3550, 23
    %v3552 = vsub.s32 %v3551, 127
    %v3553 = vand.u32 2147483647, %v320
    %v3554 = vand.u32 %v3553, 8388607
    %v3555 = vor.u32 %v3554, 8388608
    %v3556 = vsub.s32 0, %v3555
    %v3557 = vadd.s32 %v3552, 1
    %vm3558 = vcmp.gt.s32.totalorder %v3557, 0
    %v3559 = vsel %vm3558, %v3557, 0
    %v3560 = vshrl.u32 %v3559, 5
    %v3561 = vand.u32 %v3559, 31
    %v3562 = vsub.s32 32, %v3561
    %v3563 = vshrl.u32 683565275, %v3562
    %v3564 = vshll.u32 683565275, %v3561
    %v3565 = vshrl.u32 2475754826, %v3562
    %v3566 = vor.u32 %v3564, %v3565
    %v3567 = vshll.u32 2475754826, %v3561
    %v3568 = vshrl.u32 2131351028, %v3562
    %v3569 = vor.u32 %v3567, %v3568
    %v3570 = vshll.u32 2131351028, %v3561
    %v3571 = vshrl.u32 2102212464, %v3562
    %v3572 = vor.u32 %v3570, %v3571
    %v3573 = vshll.u32 2102212464, %v3561
    %v3574 = vshrl.u32 920167782, %v3562
    %v3575 = vor.u32 %v3573, %v3574
    %v3576 = vshll.u32 920167782, %v3561
    %v3577 = vshrl.u32 1326507024, %v3562
    %v3578 = vor.u32 %v3576, %v3577
    %vm3579 = vcmp.lt.s32.totalorder %v3560, 1
    %vm3580 = vcmp.lt.s32.totalorder %v3560, 2
    %vm3581 = vcmp.lt.s32.totalorder %v3560, 3
    %vm3582 = vcmp.lt.s32.totalorder %v3560, 4
    %v3583 = vsel %vm3579, %v3563, %v3566
    %v3584 = vsel %vm3582, %v3572, 2102212464
    %v3585 = vsel %vm3581, %v3569, %v3584
    %v3586 = vsel %vm3580, %v3583, %v3585
    %v3587 = vsel %vm3579, %v3566, %v3569
    %v3588 = vsel %vm3582, %v3575, 920167782
    %v3589 = vsel %vm3581, %v3572, %v3588
    %v3590 = vsel %vm3580, %v3587, %v3589
    %v3591 = vsel %vm3579, %v3569, %v3572
    %v3592 = vsel %vm3582, %v3578, 1326507024
    %v3593 = vsel %vm3581, %v3575, %v3592
    %v3594 = vsel %vm3580, %v3591, %v3593
    %v3595 = vshll.u32 %v3555, 8
    %v3596 = vmul.u32.u64.compose %v3595, %v3594
    %v3597 = vextract.low.u32 %v3596
    %v3598 = vextract.high.u32 %v3596
    %v3599 = vmul.u32.u64.compose %v3595, %v3590
    %v3600 = vextract.low.u32 %v3599
    %v3601 = vextract.high.u32 %v3599
    %v3602 = vmul.u32 %v3595, %v3586
    %v3603 = vadd.s32 %v3598, %v3600
    %vm3604 = vc.u32 %v3598, %v3600
    %v3605 = vadd.s32 %v3601, 1
    %v3606 = vsel %vm3604, %v3605, %v3601
    %v3607 = vadd.s32 %v3602, %v3606
    %v3608 = vadd.s32 %v3607, 536870912
    %v3609 = vshrl.u32 %v3608, 30
    %v3610 = vshll.u32 %v3609, 30
    %v3611 = vsub.s32 %v3607, %v3610
    %vm3612 = vcmp.lt.s32.totalorder %v3611, 0
    %v3613 = vsub.s32 0, %v3611
    %v3614 = vsel %vm3612, %v3613, %v3611
    %v3615 = vclz %v3614
    %v3616 = vsub.s32 %v3615, 2
    %vm3617 = vcmp.gt.s32.totalorder 0, %v3616
    %v3618 = vsel %vm3617, 0, %v3616
    %v3619 = vsub.s32 32, %v3618
    %v3620 = vshll.u32 %v3611, %v3618
    %v3621 = vshrl.u32 %v3603, %v3619
    %v3622 = vor.u32 %v3620, %v3621
    %v3623 = vsub.s32 4294967266, %v3618
    %v3624 = vadd.s32 %v3623, 127
    %v3625 = vshll.u32 %v3624, 23
    %v3626 = vor.u32 4788187, %v3625
    %v3627 = vand.u32 2147483647, %v3626
    %v3629 = vcvt.s32.f32 %v3622
    %v3630 = vmul.f32 %v3629, %v3627
    %v3631 = vxor.u32 %v3630, 2147483648
    %v3632 = vsel %vm3549, %v3631, %v3630
    %v3633 = vsub.s32 4, %v3609
    %v3634 = vsel %vm3549, %v3633, %v3609
    %v3635 = vsel %vm3548, %v320, %v3632
    %v3636 = vsel %vm3548, 0, %v3634
    %v3637 = vcosq.f32.pop %v3635
    %v3638 = vsinq.f32.pop %v3635
    %vm3639 = vweird.f32 %v320
    %v3640 = vadd.s32 %v3636, 3
    %v3641 = vand.u32 %v3640, 3
    %vm3642 = vcmp.lt.s32.totalorder %v3641, 2
    %vm3643 = vcmp.eq.s32.totalorder %v3641, 0
    %v3644 = vxor.u32 %v3638, 2147483648
    %v3645 = vsel %vm3643, %v3637, %v3644
    %vm3646 = vcmp.eq.s32.totalorder %v3641, 2
    %v3647 = vxor.u32 %v3637, 2147483648
    %v3648 = vsel %vm3646, %v3647, %v3638
    %v3649 = vsel %vm3642, %v3645, %v3648
    %v3650 = vsel %vm3639, nan, %v3649
    %3651 = vst [vmem:[#allocation7] sm:$0xff] %v426
    %3652 = vst [vmem:[#allocation7 + $0x8] sm:$0xff] %v530
    %3653 = vst [vmem:[#allocation7 + $0x10] sm:$0xff] %v634
    %3654 = vst [vmem:[#allocation7 + $0x18] sm:$0xff] %v738
    %3655 = vst [vmem:[#allocation7 + $0x20] sm:$0xff] %v842
    %3656 = vst [vmem:[#allocation7 + $0x28] sm:$0xff] %v946
    %3657 = vst [vmem:[#allocation7 + $0x30] sm:$0xff] %v1050
    %3658 = vst [vmem:[#allocation7 + $0x38] sm:$0xff] %v1154
    %3659 = vst [vmem:[#allocation7 + $0x40] sm:$0xff] %v1258
    %3660 = vst [vmem:[#allocation7 + $0x48] sm:$0xff] %v1362
    %3661 = vst [vmem:[#allocation7 + $0x50] sm:$0xff] %v1466
    %3662 = vst [vmem:[#allocation7 + $0x58] sm:$0xff] %v1570
    %3663 = vst [vmem:[#allocation7 + $0x60] sm:$0xff] %v1674
    %3664 = vst [vmem:[#allocation7 + $0x68] sm:$0xff] %v1778
    %3665 = vst [vmem:[#allocation7 + $0x70] sm:$0xff] %v1882
    %3666 = vst [vmem:[#allocation7 + $0x78] sm:$0xff] %v1986
    %3667 = vst [vmem:[#allocation7 + $0x80] sm:$0xff] %v2090
    %3668 = vst [vmem:[#allocation7 + $0x88] sm:$0xff] %v2194
    %3669 = vst [vmem:[#allocation7 + $0x90] sm:$0xff] %v2298
    %3670 = vst [vmem:[#allocation7 + $0x98] sm:$0xff] %v2402
    %3671 = vst [vmem:[#allocation7 + $0xa0] sm:$0xff] %v2506
    %3672 = vst [vmem:[#allocation7 + $0xa8] sm:$0xff] %v2610
    %3673 = vst [vmem:[#allocation7 + $0xb0] sm:$0xff] %v2714
    %3674 = vst [vmem:[#allocation7 + $0xb8] sm:$0xff] %v2818
    %3675 = vst [vmem:[#allocation7 + $0xc0] sm:$0xff] %v2922
    %3676 = vst [vmem:[#allocation7 + $0xc8] sm:$0xff] %v3026
    %3677 = vst [vmem:[#allocation7 + $0xd0] sm:$0xff] %v3130
    %3678 = vst [vmem:[#allocation7 + $0xd8] sm:$0xff] %v3234
    %3679 = vst [vmem:[#allocation7 + $0xe0] sm:$0xff] %v3338
    %3680 = vst [vmem:[#allocation7 + $0xe8] sm:$0xff] %v3442
    %3681 = vst [vmem:[#allocation7 + $0xf0] sm:$0xff] %v3546
    %3682 = vst [vmem:[#allocation7 + $0xf8] sm:$0xff] %v3650
    // Predicated region
    $region22: #{tpu_custom_call.1} parent=1 // pred_check
      _
    $region23: #{tpu_custom_call.1} parent=1 // pred_check_branch
      %3684 = sbr.rel (0) target = $region25
    $region24: #{tpu_custom_call.1} parent=1 // pred_region
      %s3686 = ssub.s32 4096, 4096
      %3687 = vsyncadd [#allocation4], %s3686
      %s3688 = sshll.u32 [#allocation7], 4
      %s3689 = int_to_ptr.vmem [resolvable:$true] %s3688
      %3694 = dma.vmem_to_hbm [thread:$0]  %s3689, 4096, %s3, [#allocation4], 128, 128, 8
    $region25: #{tpu_custom_call.1} parent=1 // pred_fallthru
      _
    // Predicated region
    $region26: #{tpu_custom_call.1} parent=1 // pred_check
      _
    $region27: #{tpu_custom_call.1} parent=1 // pred_check_branch
      %3696 = sbr.rel (0) target = $region29
    $region28: #{tpu_custom_call.1} parent=1 // pred_region
      %3697 = dma.done [#allocation4], 4096
    $region29: #{tpu_custom_call.1} parent=1 // pred_fallthru
      _
    %3698 = vsyncpa [#allocation3], 1
    %3699 = vsyncpa [#allocation6], 1
    %3700 = vsyncpa [#allocation4], 1

</llo_original>
